<compile_context>
chip_gen: v5e
topology: v5e:2x2
jax: 0.10.0
libtpu: 0.0.40
codegen_flags: <defaults>
</compile_context>

<pallas_src>
import functools
import math

import jax
import jax.numpy as jnp
from jax import lax
from jax.experimental import pallas as pl
from jax.experimental.pallas import tpu as pltpu


def _round_up(x, m):
    return (x + m - 1) // m * m


# ------------------------------ fused LSTM kernel ------------------------------
def _fused_lstm_kernel(x_ref, wih0_ref, wihr_ref, whh_ref, b_ref, wfc_ref, bfc_ref,
                       out_ref, proj_sc, cur_sc, h_sc, c_sc,
                       *, num_layers, hidden_pad, seq_len, block_t, need_mask, unroll):
    """One grid step = one (block_t, block_b) tile pushed through ALL LSTM layers.

    Grid = (batch_blocks [parallel], time_blocks [arbitrary, sequential recurrence]).
    h/c for every layer are carried across time blocks in VMEM scratch; the final
    fc(h_last) is written only at the last time block of each batch block.
    """
    H = hidden_pad
    G = 4 * H
    Tc, Bb, D0 = x_ref.shape
    t = pl.program_id(1)                      # time-block index (NOT the batch axis)
    wdt = whh_ref.dtype                       # weight compute dtype (f32 or bf16)

    @pl.when(t == 0)                          # fresh state at the start of each batch block
    def _():
        h_sc[...] = jnp.zeros_like(h_sc)
        c_sc[...] = jnp.zeros_like(c_sc)

    h_last = None
    for l in range(num_layers):
        # ---- hoisted input projection: one MXU GEMM for the whole time block ----
        if l == 0:
            x2 = x_ref[...].reshape(Tc * Bb, D0)
            proj = jnp.dot(x2.astype(wdt), wih0_ref[...],
                           preferred_element_type=jnp.float32)
        else:
            x2 = cur_sc[...].reshape(Tc * Bb, H)
            proj = jnp.dot(x2.astype(wdt), wihr_ref[l - 1],
                           preferred_element_type=jnp.float32)
        proj_sc[...] = (proj + b_ref[l]).reshape(Tc, Bb, G)

        write_cur = (l != num_layers - 1)     # last layer's hidden seq is never materialized

        def step(i, carry, l=l, write_cur=write_cur):
            h, c = carry
            # Single matmul on the sequential critical path; W_hh streamed from its
            # VMEM-resident ref (not hoisted into a value -> no vreg spills at large H).
            gates = proj_sc[i] + jnp.dot(h.astype(wdt), whh_ref[l],
                                         preferred_element_type=jnp.float32)
            i_g = jax.nn.sigmoid(gates[:, 0 * H:1 * H])
            f_g = jax.nn.sigmoid(gates[:, 1 * H:2 * H])
            g_g = jnp.tanh(gates[:, 2 * H:3 * H])
            o_g = jax.nn.sigmoid(gates[:, 3 * H:4 * H])
            c_new = f_g * c + i_g * g_g
            h_new = o_g * jnp.tanh(c_new)
            if write_cur:
                cur_sc[i] = h_new             # single per-step store (v5e vst budget)
            if need_mask:                     # only emitted when T % block_t != 0
                valid = (t * block_t + i) < seq_len
                h_new = jnp.where(valid, h_new, h)
                c_new = jnp.where(valid, c_new, c)
            return h_new, c_new

        # Static trip count + unroll so EUP/VPU gate math overlaps the next step's MXU issue.
        h_fin, c_fin = lax.fori_loop(0, Tc, step, (h_sc[l], c_sc[l]), unroll=unroll)
        h_sc[l] = h_fin
        c_sc[l] = c_fin
        h_last = h_fin

    # Fused final Linear on the last timestep's hidden state of the last layer.
    @pl.when(t == pl.num_programs(1) - 1)
    def _():
        out_ref[...] = (jnp.dot(h_last.astype(wdt), wfc_ref[...],
                                preferred_element_type=jnp.float32)
                        + bfc_ref[...]).astype(out_ref.dtype)


# ------------------------------ parameter init ------------------------------
def init_simple_lstm_params(key, input_size, hidden_size, output_size, num_layers):
    """Deterministic init matching nn.LSTM / nn.Linear shapes (uniform +-1/sqrt(H))."""
    params = {"lstm": [], "fc": None}
    scale = 1.0 / math.sqrt(hidden_size)
    for layer in range(num_layers):
        d_in = input_size if layer == 0 else hidden_size
        key, k1, k2, k3, k4 = jax.random.split(key, 5)
        w_ih = jax.random.uniform(k1, (4 * hidden_size, d_in), jnp.float32, -scale, scale)
        w_hh = jax.random.uniform(k2, (4 * hidden_size, hidden_size), jnp.float32, -scale, scale)
        b_ih = jax.random.uniform(k3, (4 * hidden_size,), jnp.float32, -scale, scale)
        b_hh = jax.random.uniform(k4, (4 * hidden_size,), jnp.float32, -scale, scale)
        params["lstm"].append((w_ih, w_hh, b_ih, b_hh))
    key, k1, k2 = jax.random.split(key, 3)
    w_fc = jax.random.uniform(k1, (output_size, hidden_size), jnp.float32, -scale, scale)
    b_fc = jax.random.uniform(k2, (output_size,), jnp.float32, -scale, scale)
    params["fc"] = (w_fc, b_fc)
    return params


# ------------------------------ forward wrapper ------------------------------
@functools.partial(jax.jit, static_argnames=("block_t", "block_b", "param_dtype"))
def simple_lstm_forward(params_lstm, w_fc, b_fc, x, block_t=32, block_b=None,
                        param_dtype=jnp.float32):
    """x: (B, T, input_size) -> (B, output_size). Matches SimpleLSTM.forward (eval mode)."""
    f32 = jnp.float32
    B, T, D0 = x.shape
    num_layers = len(params_lstm)
    H = params_lstm[0][1].shape[1]                  # w_hh: (4H, H)
    H_pad = _round_up(H, 128)                       # lane-aligned gate slices
    G = 4 * H_pad
    O = w_fc.shape[0]

    # Batch: pad to f32 sublane multiple; optionally split into blocks ("parallel" axis).
    B_pad = _round_up(max(B, 1), 8)
    if block_b is None:
        Bb = B_pad // 2 if (B_pad >= 16 and (B_pad // 2) % 8 == 0) else B_pad
    else:
        Bb = min(block_b, B_pad)
    assert B_pad % Bb == 0 and Bb % 8 == 0, (B_pad, Bb)

    # Time: pad to a multiple of the block so the inner loop has a static trip count.
    Tc = min(block_t, T)
    T_pad = _round_up(T, Tc)

    # ---- repack weights: gate-blocked lane padding (exact zeros -> real lanes unchanged) ----
    def pad_gate_cols(w_t):                          # (d_in, 4H) -> (d_in, 4*H_pad)
        d_in = w_t.shape[0]
        w3 = w_t.reshape(d_in, 4, H)
        w3 = jnp.pad(w3, ((0, 0), (0, 0), (0, H_pad - H)))
        return w3.reshape(d_in, G)

    wih0 = None
    wih_rest_l, whh_l, bias_l = [], [], []
    for layer, (w_ih, w_hh, b_ih, b_hh) in enumerate(params_lstm):
        w_ih_t = pad_gate_cols(jnp.transpose(w_ih).astype(f32))        # (d_in, G)
        if layer == 0:
            wih0 = w_ih_t                                               # (D0, G)
        else:
            wih_rest_l.append(jnp.pad(w_ih_t, ((0, H_pad - H), (0, 0))))  # (H_pad, G)
        whh_t = pad_gate_cols(jnp.transpose(w_hh).astype(f32))         # (H, G)
        whh_l.append(jnp.pad(whh_t, ((0, H_pad - H), (0, 0))))         # (H_pad, G)
        b = (b_ih + b_hh).astype(f32).reshape(4, H)                    # combined bias
        bias_l.append(jnp.pad(b, ((0, 0), (0, H_pad - H))).reshape(1, G))

    wih_rest = jnp.stack(wih_rest_l) if wih_rest_l else jnp.zeros((1, H_pad, G), f32)
    whh_all = jnp.stack(whh_l)                                          # (L, H_pad, G)
    bias_all = jnp.stack(bias_l)                                        # (L, 1, G)
    wfc_t = jnp.pad(jnp.transpose(w_fc).astype(f32), ((0, H_pad - H), (0, 0)))  # (H_pad, O)
    bfc = b_fc.astype(f32).reshape(1, O)

    # Optional bf16 weight cast (f32 accumulation) for v6e/v7x; demo keeps f32.
    wih0 = wih0.astype(param_dtype)
    wih_rest = wih_rest.astype(param_dtype)
    whh_all = whh_all.astype(param_dtype)
    wfc_t = wfc_t.astype(param_dtype)

    # Input: batch_first -> time-major, pad T and B.
    xt = jnp.transpose(x, (1, 0, 2)).astype(f32)                        # (T, B, D0)
    xt = jnp.pad(xt, ((0, T_pad - T), (0, B_pad - B), (0, 0)))

    NB = B_pad // Bb
    NT = T_pad // Tc
    Lr = wih_rest.shape[0]
    L = num_layers

    kernel = functools.partial(
        _fused_lstm_kernel, num_layers=L, hidden_pad=H_pad, seq_len=T,
        block_t=Tc, need_mask=(T_pad != T), unroll=min(8, Tc))

    # Explicit VMEM budget: double-buffered inputs/outputs + scratch, capped for v7x (64 MiB).
    wbytes = jnp.dtype(param_dtype).itemsize
    est = (2 * ((wih0.size + wih_rest.size + whh_all.size + wfc_t.size) * wbytes
                + (bias_all.size + bfc.size) * 4
                + Tc * Bb * D0 * 4 + Bb * O * 4)
           + (Tc * Bb * G + Tc * Bb * H_pad + 2 * L * Bb * H_pad) * 4)
    vmem_limit = int(min(64 << 20, max(32 << 20, 2 * est)))

    out = pl.pallas_call(
        kernel,
        out_shape=jax.ShapeDtypeStruct((B_pad, O), jnp.float32),
        grid_spec=pltpu.PrefetchScalarGridSpec(
            num_scalar_prefetch=0,
            grid=(NB, NT),
            in_specs=[
                pl.BlockSpec((Tc, Bb, D0), lambda b, t: (t, b, 0)),     # x tile
                pl.BlockSpec((D0, G), lambda b, t: (0, 0)),             # layer-0 W_ih^T (resident)
                pl.BlockSpec((Lr, H_pad, G), lambda b, t: (0, 0, 0)),   # layers>=1 W_ih^T
                pl.BlockSpec((L, H_pad, G), lambda b, t: (0, 0, 0)),    # all W_hh^T
                pl.BlockSpec((L, 1, G), lambda b, t: (0, 0, 0)),        # combined biases
                pl.BlockSpec((H_pad, O), lambda b, t: (0, 0)),          # fc W^T
                pl.BlockSpec((1, O), lambda b, t: (0, 0)),              # fc bias
            ],
            out_specs=pl.BlockSpec((Bb, O), lambda b, t: (b, 0)),       # written at last time block
            scratch_shapes=[
                pltpu.VMEM((Tc, Bb, G), jnp.float32),       # block input projection (per layer)
                pltpu.VMEM((Tc, Bb, H_pad), jnp.float32),   # hidden time-block between layers
                pltpu.VMEM((L, Bb, H_pad), jnp.float32),    # h carries (all layers)
                pltpu.VMEM((L, Bb, H_pad), jnp.float32),    # c carries (all layers)
            ],
        ),
        compiler_params=pltpu.CompilerParams(
            dimension_semantics=("parallel", "arbitrary"),  # batch blocks parallel, time sequential
            vmem_limit_bytes=vmem_limit,
        ),
    )(xt, wih0, wih_rest, whh_all, bias_all, wfc_t, bfc)

    return out[:B]                                   # drop padded batch rows


# ------------------------------ pure-JAX reference ------------------------------
def _lstm_reference(params_lstm, w_fc, b_fc, x):
    hp = jax.lax.Precision.HIGHEST
    h_seq = x.astype(jnp.float32)                    # (B, T, D)
    B, T, _ = x.shape
    for (w_ih, w_hh, b_ih, b_hh) in params_lstm:
        H = w_hh.shape[1]
        h = jnp.zeros((B, H), jnp.float32)
        c = jnp.zeros((B, H), jnp.float32)
        outs = []
        for t in range(T):
            gates = (jnp.dot(h_seq[:, t, :], w_ih.T, precision=hp) + b_ih
                     + jnp.dot(h, w_hh.T, precision=hp) + b_hh)
            i_g = jax.nn.sigmoid(gates[:, 0 * H:1 * H])
            f_g = jax.nn.sigmoid(gates[:, 1 * H:2 * H])
            g_g = jnp.tanh(gates[:, 2 * H:3 * H])
            o_g = jax.nn.sigmoid(gates[:, 3 * H:4 * H])
            c = f_g * c + i_g * g_g
            h = o_g * jnp.tanh(c)
            outs.append(h)
        h_seq = jnp.stack(outs, axis=1)
    return jnp.dot(h_seq[:, -1, :], w_fc.T, precision=hp) + b_fc


if __name__ == "__main__":
    B, T = 2, 8
    input_size, hidden_size, output_size, num_layers, dropout = 16, 32, 4, 2, 0.0

    key = jax.random.PRNGKey(0)
    key, xkey = jax.random.split(key)
    x = jax.random.normal(xkey, (B, T, input_size), dtype=jnp.float32)

    params = init_simple_lstm_params(key, input_size, hidden_size, output_size, num_layers)
    w_fc, b_fc = params["fc"]

    # block_t=4 -> 2 time blocks: exercises the cross-block h/c carry in VMEM scratch.
    out = simple_lstm_forward(params["lstm"], w_fc, b_fc, x, block_t=4)
    out = jax.block_until_ready(out)
    assert out.shape == (B, output_size), out.shape
    ref = _lstm_reference(params["lstm"], w_fc, b_fc, x)
    assert jnp.allclose(out, ref, rtol=1e-2, atol=1e-3), (out, ref)

    # Second config: ragged T (static-trip-count loop + tail masking) and 2 batch blocks
    # (exercises the "parallel" batch axis and per-batch-block state re-init at t == 0).
    B2, T2 = 10, 7
    key, xkey2 = jax.random.split(key)
    x2 = jax.random.normal(xkey2, (B2, T2, input_size), dtype=jnp.float32)
    out2 = jax.block_until_ready(
        simple_lstm_forward(params["lstm"], w_fc, b_fc, x2, block_t=4))
    ref2 = _lstm_reference(params["lstm"], w_fc, b_fc, x2)
    assert out2.shape == (B2, output_size), out2.shape
    assert jnp.allclose(out2, ref2, rtol=1e-2, atol=1e-3), (out2, ref2)

    print("KERNEL_OK")
</pallas_src>

<mosaic_0001>
module attributes {stable_mosaic.version = 11 : i64} {
  func.func @_fused_lstm_kernel(%arg0: i32, %arg1: i32, %arg2: memref<4x8x16xf32, #tpu.memory_space<vmem>>, %arg3: memref<16x512xf32, #tpu.memory_space<vmem>>, %arg4: memref<1x128x512xf32, #tpu.memory_space<vmem>>, %arg5: memref<2x128x512xf32, #tpu.memory_space<vmem>>, %arg6: memref<2x1x512xf32, #tpu.memory_space<vmem>>, %arg7: memref<128x4xf32, #tpu.memory_space<vmem>>, %arg8: memref<1x4xf32, #tpu.memory_space<vmem>>, %arg9: memref<8x4xf32, #tpu.memory_space<vmem>>, %arg10: memref<4x8x512xf32, #tpu.memory_space<vmem>>, %arg11: memref<4x8x128xf32, #tpu.memory_space<vmem>>, %arg12: memref<2x8x128xf32, #tpu.memory_space<vmem>>, %arg13: memref<2x8x128xf32, #tpu.memory_space<vmem>>) attributes {dimension_semantics = [#tpu.dimension_semantics<parallel>, #tpu.dimension_semantics<arbitrary>], iteration_bounds = array<i64: 1, 2>, scalar_prefetch = 0 : i64, scratch_operands = 4 : i64, tpu.core_type = #tpu.core_type<tc>, window_params = [{transform_indices = @transform_0, window_bounds = array<i64: 4, 8, 16>}, {pipeline_mode = #tpu.pipeline_mode<synchronous>, transform_indices = @transform_1, window_bounds = array<i64: 16, 512>}, {pipeline_mode = #tpu.pipeline_mode<synchronous>, transform_indices = @transform_2, window_bounds = array<i64: 1, 128, 512>}, {pipeline_mode = #tpu.pipeline_mode<synchronous>, transform_indices = @transform_3, window_bounds = array<i64: 2, 128, 512>}, {pipeline_mode = #tpu.pipeline_mode<synchronous>, transform_indices = @transform_4, window_bounds = array<i64: 2, 1, 512>}, {pipeline_mode = #tpu.pipeline_mode<synchronous>, transform_indices = @transform_5, window_bounds = array<i64: 128, 4>}, {pipeline_mode = #tpu.pipeline_mode<synchronous>, transform_indices = @transform_6, window_bounds = array<i64: 1, 4>}, {transform_indices = @transform_7, window_bounds = array<i64: 8, 4>}]} {
    %c0_i32 = arith.constant 0 : i32
    %0 = arith.cmpi eq, %arg1, %c0_i32 : i32
    %1 = arith.extui %0 : i1 to i32
    %c0_i32_0 = arith.constant 0 : i32
    %2 = arith.cmpi ne, %1, %c0_i32_0 : i32
    scf.if %2 {
      %cst_135 = arith.constant 0.000000e+00 : f32
      %319 = vector.broadcast %cst_135 : f32 to vector<2x8x128xf32>
      %c0_136 = arith.constant 0 : index
      %c0_137 = arith.constant 0 : index
      %c0_138 = arith.constant 0 : index
      %320 = vector.load %arg12[%c0_136, %c0_137, %c0_138] : memref<2x8x128xf32, #tpu.memory_space<vmem>>, vector<2x8x128xf32>
      tpu.vector_store %arg12[%c0_136, %c0_137, %c0_138], %319 {strides = array<i32>} : memref<2x8x128xf32, #tpu.memory_space<vmem>>, vector<2x8x128xf32>,
      %cst_139 = arith.constant 0.000000e+00 : f32
      %321 = vector.broadcast %cst_139 : f32 to vector<2x8x128xf32>
      %c0_140 = arith.constant 0 : index
      %c0_141 = arith.constant 0 : index
      %c0_142 = arith.constant 0 : index
      %322 = vector.load %arg13[%c0_140, %c0_141, %c0_142] : memref<2x8x128xf32, #tpu.memory_space<vmem>>, vector<2x8x128xf32>
      tpu.vector_store %arg13[%c0_140, %c0_141, %c0_142], %321 {strides = array<i32>} : memref<2x8x128xf32, #tpu.memory_space<vmem>>, vector<2x8x128xf32>,
    } else {
    }
    %c0 = arith.constant 0 : index
    %c0_1 = arith.constant 0 : index
    %c0_2 = arith.constant 0 : index
    %3 = vector.load %arg2[%c0, %c0_1, %c0_2] : memref<4x8x16xf32, #tpu.memory_space<vmem>>, vector<4x8x16xf32>
    %4 = vector.shape_cast %3 : vector<4x8x16xf32> to vector<32x16xf32>
    %c0_3 = arith.constant 0 : index
    %c0_4 = arith.constant 0 : index
    %5 = vector.load %arg3[%c0_3, %c0_4] : memref<16x512xf32, #tpu.memory_space<vmem>>, vector<16x512xf32>
    %cst = arith.constant dense<0.000000e+00> : vector<32x512xf32>
    %6 = tpu.matmul %4, %5, %cst {dimension_numbers = #tpu.dot_dimension_numbers<[1], [0], [0], [1], [0, 0, 1, 1], [], []>} : vector<32x16xf32>, vector<16x512xf32>, vector<32x512xf32> -> vector<32x512xf32>
    %c0_5 = arith.constant 0 : index
    %c0_6 = arith.constant 0 : index
    %c0_7 = arith.constant 0 : index
    %7 = vector.load %arg6[%c0_5, %c0_6, %c0_7] : memref<2x1x512xf32, #tpu.memory_space<vmem>>, vector<1x1x512xf32>
    %8 = vector.shape_cast %7 : vector<1x1x512xf32> to vector<1x512xf32>
    %9 = vector.broadcast %8 : vector<1x512xf32> to vector<32x512xf32>
    %10 = arith.addf %6, %9 : vector<32x512xf32>
    %11 = vector.shape_cast %10 : vector<32x512xf32> to vector<4x8x512xf32>
    %c0_8 = arith.constant 0 : index
    %c0_9 = arith.constant 0 : index
    %c0_10 = arith.constant 0 : index
    %12 = vector.load %arg10[%c0_8, %c0_9, %c0_10] : memref<4x8x512xf32, #tpu.memory_space<vmem>>, vector<4x8x512xf32>
    tpu.vector_store %arg10[%c0_8, %c0_9, %c0_10], %11 {strides = array<i32>} : memref<4x8x512xf32, #tpu.memory_space<vmem>>, vector<4x8x512xf32>,
    %c0_11 = arith.constant 0 : index
    %c0_12 = arith.constant 0 : index
    %c0_13 = arith.constant 0 : index
    %13 = vector.load %arg12[%c0_11, %c0_12, %c0_13] : memref<2x8x128xf32, #tpu.memory_space<vmem>>, vector<1x8x128xf32>
    %14 = vector.shape_cast %13 : vector<1x8x128xf32> to vector<8x128xf32>
    %c0_14 = arith.constant 0 : index
    %c0_15 = arith.constant 0 : index
    %c0_16 = arith.constant 0 : index
    %15 = vector.load %arg13[%c0_14, %c0_15, %c0_16] : memref<2x8x128xf32, #tpu.memory_space<vmem>>, vector<1x8x128xf32>
    %16 = vector.shape_cast %15 : vector<1x8x128xf32> to vector<8x128xf32>
    %c0_i32_17 = arith.constant 0 : i32
    %17 = arith.index_cast %c0_i32_17 : i32 to index
    %c0_18 = arith.constant 0 : index
    %c0_19 = arith.constant 0 : index
    %18 = vector.load %arg10[%17, %c0_18, %c0_19] : memref<4x8x512xf32, #tpu.memory_space<vmem>>, vector<1x8x512xf32>
    %19 = vector.shape_cast %18 : vector<1x8x512xf32> to vector<8x512xf32>
    %c0_20 = arith.constant 0 : index
    %c0_21 = arith.constant 0 : index
    %c0_22 = arith.constant 0 : index
    %20 = vector.load %arg5[%c0_20, %c0_21, %c0_22] : memref<2x128x512xf32, #tpu.memory_space<vmem>>, vector<1x128x512xf32>
    %21 = vector.shape_cast %20 : vector<1x128x512xf32> to vector<128x512xf32>
    %cst_23 = arith.constant dense<0.000000e+00> : vector<8x512xf32>
    %22 = tpu.matmul %14, %21, %cst_23 {dimension_numbers = #tpu.dot_dimension_numbers<[1], [0], [0], [1], [0, 0, 1, 1], [], []>} : vector<8x128xf32>, vector<128x512xf32>, vector<8x512xf32> -> vector<8x512xf32>
    %23 = arith.addf %19, %22 : vector<8x512xf32>
    %24 = vector.extract_strided_slice %23 {offsets = [0, 0], sizes = [8, 128], strides = [1, 1]} : vector<8x512xf32> to vector<8x128xf32>
    %25 = arith.negf %24 : vector<8x128xf32>
    %26 = math.exp %25 : vector<8x128xf32>
    %cst_24 = arith.constant 1.000000e+00 : f32
    %27 = vector.broadcast %cst_24 : f32 to vector<8x128xf32>
    %28 = arith.addf %27, %26 : vector<8x128xf32>
    %29 = arith.divf %27, %28 : vector<8x128xf32>
    %30 = vector.extract_strided_slice %23 {offsets = [0, 128], sizes = [8, 128], strides = [1, 1]} : vector<8x512xf32> to vector<8x128xf32>
    %31 = arith.negf %30 : vector<8x128xf32>
    %32 = math.exp %31 : vector<8x128xf32>
    %cst_25 = arith.constant 1.000000e+00 : f32
    %33 = vector.broadcast %cst_25 : f32 to vector<8x128xf32>
    %34 = arith.addf %33, %32 : vector<8x128xf32>
    %35 = arith.divf %33, %34 : vector<8x128xf32>
    %36 = vector.extract_strided_slice %23 {offsets = [0, 256], sizes = [8, 128], strides = [1, 1]} : vector<8x512xf32> to vector<8x128xf32>
    %37 = math.tanh %36 : vector<8x128xf32>
    %38 = vector.extract_strided_slice %23 {offsets = [0, 384], sizes = [8, 128], strides = [1, 1]} : vector<8x512xf32> to vector<8x128xf32>
    %39 = arith.negf %38 : vector<8x128xf32>
    %40 = math.exp %39 : vector<8x128xf32>
    %cst_26 = arith.constant 1.000000e+00 : f32
    %41 = vector.broadcast %cst_26 : f32 to vector<8x128xf32>
    %42 = arith.addf %41, %40 : vector<8x128xf32>
    %43 = arith.divf %41, %42 : vector<8x128xf32>
    %44 = arith.mulf %35, %16 : vector<8x128xf32>
    %45 = arith.mulf %29, %37 : vector<8x128xf32>
    %46 = arith.addf %44, %45 : vector<8x128xf32>
    %47 = math.tanh %46 : vector<8x128xf32>
    %48 = arith.mulf %43, %47 : vector<8x128xf32>
    %49 = arith.index_cast %c0_i32_17 : i32 to index
    %c0_27 = arith.constant 0 : index
    %c0_28 = arith.constant 0 : index
    %50 = vector.load %arg11[%49, %c0_27, %c0_28] : memref<4x8x128xf32, #tpu.memory_space<vmem>>, vector<1x8x128xf32>
    %51 = vector.shape_cast %50 : vector<1x8x128xf32> to vector<8x128xf32>
    %52 = vector.shape_cast %48 : vector<8x128xf32> to vector<1x8x128xf32>
    tpu.vector_store %arg11[%49, %c0_27, %c0_28], %52 {strides = array<i32>} : memref<4x8x128xf32, #tpu.memory_space<vmem>>, vector<1x8x128xf32>,
    %c1_i32 = arith.constant 1 : i32
    %53 = arith.index_cast %c1_i32 : i32 to index
    %c0_29 = arith.constant 0 : index
    %c0_30 = arith.constant 0 : index
    %54 = vector.load %arg10[%53, %c0_29, %c0_30] : memref<4x8x512xf32, #tpu.memory_space<vmem>>, vector<1x8x512xf32>
    %55 = vector.shape_cast %54 : vector<1x8x512xf32> to vector<8x512xf32>
    %c0_31 = arith.constant 0 : index
    %c0_32 = arith.constant 0 : index
    %c0_33 = arith.constant 0 : index
    %56 = vector.load %arg5[%c0_31, %c0_32, %c0_33] : memref<2x128x512xf32, #tpu.memory_space<vmem>>, vector<1x128x512xf32>
    %57 = vector.shape_cast %56 : vector<1x128x512xf32> to vector<128x512xf32>
    %cst_34 = arith.constant dense<0.000000e+00> : vector<8x512xf32>
    %58 = tpu.matmul %48, %57, %cst_34 {dimension_numbers = #tpu.dot_dimension_numbers<[1], [0], [0], [1], [0, 0, 1, 1], [], []>} : vector<8x128xf32>, vector<128x512xf32>, vector<8x512xf32> -> vector<8x512xf32>
    %59 = arith.addf %55, %58 : vector<8x512xf32>
    %60 = vector.extract_strided_slice %59 {offsets = [0, 0], sizes = [8, 128], strides = [1, 1]} : vector<8x512xf32> to vector<8x128xf32>
    %61 = arith.negf %60 : vector<8x128xf32>
    %62 = math.exp %61 : vector<8x128xf32>
    %cst_35 = arith.constant 1.000000e+00 : f32
    %63 = vector.broadcast %cst_35 : f32 to vector<8x128xf32>
    %64 = arith.addf %63, %62 : vector<8x128xf32>
    %65 = arith.divf %63, %64 : vector<8x128xf32>
    %66 = vector.extract_strided_slice %59 {offsets = [0, 128], sizes = [8, 128], strides = [1, 1]} : vector<8x512xf32> to vector<8x128xf32>
    %67 = arith.negf %66 : vector<8x128xf32>
    %68 = math.exp %67 : vector<8x128xf32>
    %cst_36 = arith.constant 1.000000e+00 : f32
    %69 = vector.broadcast %cst_36 : f32 to vector<8x128xf32>
    %70 = arith.addf %69, %68 : vector<8x128xf32>
    %71 = arith.divf %69, %70 : vector<8x128xf32>
    %72 = vector.extract_strided_slice %59 {offsets = [0, 256], sizes = [8, 128], strides = [1, 1]} : vector<8x512xf32> to vector<8x128xf32>
    %73 = math.tanh %72 : vector<8x128xf32>
    %74 = vector.extract_strided_slice %59 {offsets = [0, 384], sizes = [8, 128], strides = [1, 1]} : vector<8x512xf32> to vector<8x128xf32>
    %75 = arith.negf %74 : vector<8x128xf32>
    %76 = math.exp %75 : vector<8x128xf32>
    %cst_37 = arith.constant 1.000000e+00 : f32
    %77 = vector.broadcast %cst_37 : f32 to vector<8x128xf32>
    %78 = arith.addf %77, %76 : vector<8x128xf32>
    %79 = arith.divf %77, %78 : vector<8x128xf32>
    %80 = arith.mulf %71, %46 : vector<8x128xf32>
    %81 = arith.mulf %65, %73 : vector<8x128xf32>
    %82 = arith.addf %80, %81 : vector<8x128xf32>
    %83 = math.tanh %82 : vector<8x128xf32>
    %84 = arith.mulf %79, %83 : vector<8x128xf32>
    %85 = arith.index_cast %c1_i32 : i32 to index
    %c0_38 = arith.constant 0 : index
    %c0_39 = arith.constant 0 : index
    %86 = vector.load %arg11[%85, %c0_38, %c0_39] : memref<4x8x128xf32, #tpu.memory_space<vmem>>, vector<1x8x128xf32>
    %87 = vector.shape_cast %86 : vector<1x8x128xf32> to vector<8x128xf32>
    %88 = vector.shape_cast %84 : vector<8x128xf32> to vector<1x8x128xf32>
    tpu.vector_store %arg11[%85, %c0_38, %c0_39], %88 {strides = array<i32>} : memref<4x8x128xf32, #tpu.memory_space<vmem>>, vector<1x8x128xf32>,
    %c2_i32 = arith.constant 2 : i32
    %89 = arith.index_cast %c2_i32 : i32 to index
    %c0_40 = arith.constant 0 : index
    %c0_41 = arith.constant 0 : index
    %90 = vector.load %arg10[%89, %c0_40, %c0_41] : memref<4x8x512xf32, #tpu.memory_space<vmem>>, vector<1x8x512xf32>
    %91 = vector.shape_cast %90 : vector<1x8x512xf32> to vector<8x512xf32>
    %c0_42 = arith.constant 0 : index
    %c0_43 = arith.constant 0 : index
    %c0_44 = arith.constant 0 : index
    %92 = vector.load %arg5[%c0_42, %c0_43, %c0_44] : memref<2x128x512xf32, #tpu.memory_space<vmem>>, vector<1x128x512xf32>
    %93 = vector.shape_cast %92 : vector<1x128x512xf32> to vector<128x512xf32>
    %cst_45 = arith.constant dense<0.000000e+00> : vector<8x512xf32>
    %94 = tpu.matmul %84, %93, %cst_45 {dimension_numbers = #tpu.dot_dimension_numbers<[1], [0], [0], [1], [0, 0, 1, 1], [], []>} : vector<8x128xf32>, vector<128x512xf32>, vector<8x512xf32> -> vector<8x512xf32>
    %95 = arith.addf %91, %94 : vector<8x512xf32>
    %96 = vector.extract_strided_slice %95 {offsets = [0, 0], sizes = [8, 128], strides = [1, 1]} : vector<8x512xf32> to vector<8x128xf32>
    %97 = arith.negf %96 : vector<8x128xf32>
    %98 = math.exp %97 : vector<8x128xf32>
    %cst_46 = arith.constant 1.000000e+00 : f32
    %99 = vector.broadcast %cst_46 : f32 to vector<8x128xf32>
    %100 = arith.addf %99, %98 : vector<8x128xf32>
    %101 = arith.divf %99, %100 : vector<8x128xf32>
    %102 = vector.extract_strided_slice %95 {offsets = [0, 128], sizes = [8, 128], strides = [1, 1]} : vector<8x512xf32> to vector<8x128xf32>
    %103 = arith.negf %102 : vector<8x128xf32>
    %104 = math.exp %103 : vector<8x128xf32>
    %cst_47 = arith.constant 1.000000e+00 : f32
    %105 = vector.broadcast %cst_47 : f32 to vector<8x128xf32>
    %106 = arith.addf %105, %104 : vector<8x128xf32>
    %107 = arith.divf %105, %106 : vector<8x128xf32>
    %108 = vector.extract_strided_slice %95 {offsets = [0, 256], sizes = [8, 128], strides = [1, 1]} : vector<8x512xf32> to vector<8x128xf32>
    %109 = math.tanh %108 : vector<8x128xf32>
    %110 = vector.extract_strided_slice %95 {offsets = [0, 384], sizes = [8, 128], strides = [1, 1]} : vector<8x512xf32> to vector<8x128xf32>
    %111 = arith.negf %110 : vector<8x128xf32>
    %112 = math.exp %111 : vector<8x128xf32>
    %cst_48 = arith.constant 1.000000e+00 : f32
    %113 = vector.broadcast %cst_48 : f32 to vector<8x128xf32>
    %114 = arith.addf %113, %112 : vector<8x128xf32>
    %115 = arith.divf %113, %114 : vector<8x128xf32>
    %116 = arith.mulf %107, %82 : vector<8x128xf32>
    %117 = arith.mulf %101, %109 : vector<8x128xf32>
    %118 = arith.addf %116, %117 : vector<8x128xf32>
    %119 = math.tanh %118 : vector<8x128xf32>
    %120 = arith.mulf %115, %119 : vector<8x128xf32>
    %121 = arith.index_cast %c2_i32 : i32 to index
    %c0_49 = arith.constant 0 : index
    %c0_50 = arith.constant 0 : index
    %122 = vector.load %arg11[%121, %c0_49, %c0_50] : memref<4x8x128xf32, #tpu.memory_space<vmem>>, vector<1x8x128xf32>
    %123 = vector.shape_cast %122 : vector<1x8x128xf32> to vector<8x128xf32>
    %124 = vector.shape_cast %120 : vector<8x128xf32> to vector<1x8x128xf32>
    tpu.vector_store %arg11[%121, %c0_49, %c0_50], %124 {strides = array<i32>} : memref<4x8x128xf32, #tpu.memory_space<vmem>>, vector<1x8x128xf32>,
    %c3_i32 = arith.constant 3 : i32
    %125 = arith.index_cast %c3_i32 : i32 to index
    %c0_51 = arith.constant 0 : index
    %c0_52 = arith.constant 0 : index
    %126 = vector.load %arg10[%125, %c0_51, %c0_52] : memref<4x8x512xf32, #tpu.memory_space<vmem>>, vector<1x8x512xf32>
    %127 = vector.shape_cast %126 : vector<1x8x512xf32> to vector<8x512xf32>
    %c0_53 = arith.constant 0 : index
    %c0_54 = arith.constant 0 : index
    %c0_55 = arith.constant 0 : index
    %128 = vector.load %arg5[%c0_53, %c0_54, %c0_55] : memref<2x128x512xf32, #tpu.memory_space<vmem>>, vector<1x128x512xf32>
    %129 = vector.shape_cast %128 : vector<1x128x512xf32> to vector<128x512xf32>
    %cst_56 = arith.constant dense<0.000000e+00> : vector<8x512xf32>
    %130 = tpu.matmul %120, %129, %cst_56 {dimension_numbers = #tpu.dot_dimension_numbers<[1], [0], [0], [1], [0, 0, 1, 1], [], []>} : vector<8x128xf32>, vector<128x512xf32>, vector<8x512xf32> -> vector<8x512xf32>
    %131 = arith.addf %127, %130 : vector<8x512xf32>
    %132 = vector.extract_strided_slice %131 {offsets = [0, 0], sizes = [8, 128], strides = [1, 1]} : vector<8x512xf32> to vector<8x128xf32>
    %133 = arith.negf %132 : vector<8x128xf32>
    %134 = math.exp %133 : vector<8x128xf32>
    %cst_57 = arith.constant 1.000000e+00 : f32
    %135 = vector.broadcast %cst_57 : f32 to vector<8x128xf32>
    %136 = arith.addf %135, %134 : vector<8x128xf32>
    %137 = arith.divf %135, %136 : vector<8x128xf32>
    %138 = vector.extract_strided_slice %131 {offsets = [0, 128], sizes = [8, 128], strides = [1, 1]} : vector<8x512xf32> to vector<8x128xf32>
    %139 = arith.negf %138 : vector<8x128xf32>
    %140 = math.exp %139 : vector<8x128xf32>
    %cst_58 = arith.constant 1.000000e+00 : f32
    %141 = vector.broadcast %cst_58 : f32 to vector<8x128xf32>
    %142 = arith.addf %141, %140 : vector<8x128xf32>
    %143 = arith.divf %141, %142 : vector<8x128xf32>
    %144 = vector.extract_strided_slice %131 {offsets = [0, 256], sizes = [8, 128], strides = [1, 1]} : vector<8x512xf32> to vector<8x128xf32>
    %145 = math.tanh %144 : vector<8x128xf32>
    %146 = vector.extract_strided_slice %131 {offsets = [0, 384], sizes = [8, 128], strides = [1, 1]} : vector<8x512xf32> to vector<8x128xf32>
    %147 = arith.negf %146 : vector<8x128xf32>
    %148 = math.exp %147 : vector<8x128xf32>
    %cst_59 = arith.constant 1.000000e+00 : f32
    %149 = vector.broadcast %cst_59 : f32 to vector<8x128xf32>
    %150 = arith.addf %149, %148 : vector<8x128xf32>
    %151 = arith.divf %149, %150 : vector<8x128xf32>
    %152 = arith.mulf %143, %118 : vector<8x128xf32>
    %153 = arith.mulf %137, %145 : vector<8x128xf32>
    %154 = arith.addf %152, %153 : vector<8x128xf32>
    %155 = math.tanh %154 : vector<8x128xf32>
    %156 = arith.mulf %151, %155 : vector<8x128xf32>
    %157 = arith.index_cast %c3_i32 : i32 to index
    %c0_60 = arith.constant 0 : index
    %c0_61 = arith.constant 0 : index
    %158 = vector.load %arg11[%157, %c0_60, %c0_61] : memref<4x8x128xf32, #tpu.memory_space<vmem>>, vector<1x8x128xf32>
    %159 = vector.shape_cast %158 : vector<1x8x128xf32> to vector<8x128xf32>
    %160 = vector.shape_cast %156 : vector<8x128xf32> to vector<1x8x128xf32>
    tpu.vector_store %arg11[%157, %c0_60, %c0_61], %160 {strides = array<i32>} : memref<4x8x128xf32, #tpu.memory_space<vmem>>, vector<1x8x128xf32>,
    %c4_i32 = arith.constant 4 : i32
    %c0_62 = arith.constant 0 : index
    %c0_63 = arith.constant 0 : index
    %c0_64 = arith.constant 0 : index
    %161 = vector.load %arg12[%c0_62, %c0_63, %c0_64] : memref<2x8x128xf32, #tpu.memory_space<vmem>>, vector<1x8x128xf32>
    %162 = vector.shape_cast %161 : vector<1x8x128xf32> to vector<8x128xf32>
    %163 = vector.shape_cast %156 : vector<8x128xf32> to vector<1x8x128xf32>
    tpu.vector_store %arg12[%c0_62, %c0_63, %c0_64], %163 {strides = array<i32>} : memref<2x8x128xf32, #tpu.memory_space<vmem>>, vector<1x8x128xf32>,
    %c0_65 = arith.constant 0 : index
    %c0_66 = arith.constant 0 : index
    %c0_67 = arith.constant 0 : index
    %164 = vector.load %arg13[%c0_65, %c0_66, %c0_67] : memref<2x8x128xf32, #tpu.memory_space<vmem>>, vector<1x8x128xf32>
    %165 = vector.shape_cast %164 : vector<1x8x128xf32> to vector<8x128xf32>
    %166 = vector.shape_cast %154 : vector<8x128xf32> to vector<1x8x128xf32>
    tpu.vector_store %arg13[%c0_65, %c0_66, %c0_67], %166 {strides = array<i32>} : memref<2x8x128xf32, #tpu.memory_space<vmem>>, vector<1x8x128xf32>,
    %c0_68 = arith.constant 0 : index
    %c0_69 = arith.constant 0 : index
    %c0_70 = arith.constant 0 : index
    %167 = vector.load %arg11[%c0_68, %c0_69, %c0_70] : memref<4x8x128xf32, #tpu.memory_space<vmem>>, vector<4x8x128xf32>
    %168 = vector.shape_cast %167 : vector<4x8x128xf32> to vector<32x128xf32>
    %c0_71 = arith.constant 0 : index
    %c0_72 = arith.constant 0 : index
    %c0_73 = arith.constant 0 : index
    %169 = vector.load %arg4[%c0_71, %c0_72, %c0_73] : memref<1x128x512xf32, #tpu.memory_space<vmem>>, vector<1x128x512xf32>
    %170 = vector.shape_cast %169 : vector<1x128x512xf32> to vector<128x512xf32>
    %cst_74 = arith.constant dense<0.000000e+00> : vector<32x512xf32>
    %171 = tpu.matmul %168, %170, %cst_74 {dimension_numbers = #tpu.dot_dimension_numbers<[1], [0], [0], [1], [0, 0, 1, 1], [], []>} : vector<32x128xf32>, vector<128x512xf32>, vector<32x512xf32> -> vector<32x512xf32>
    %c1 = arith.constant 1 : index
    %c0_75 = arith.constant 0 : index
    %c0_76 = arith.constant 0 : index
    %172 = vector.load %arg6[%c1, %c0_75, %c0_76] : memref<2x1x512xf32, #tpu.memory_space<vmem>>, vector<1x1x512xf32>
    %173 = vector.shape_cast %172 : vector<1x1x512xf32> to vector<1x512xf32>
    %174 = vector.broadcast %173 : vector<1x512xf32> to vector<32x512xf32>
    %175 = arith.addf %171, %174 : vector<32x512xf32>
    %176 = vector.shape_cast %175 : vector<32x512xf32> to vector<4x8x512xf32>
    %c0_77 = arith.constant 0 : index
    %c0_78 = arith.constant 0 : index
    %c0_79 = arith.constant 0 : index
    %177 = vector.load %arg10[%c0_77, %c0_78, %c0_79] : memref<4x8x512xf32, #tpu.memory_space<vmem>>, vector<4x8x512xf32>
    tpu.vector_store %arg10[%c0_77, %c0_78, %c0_79], %176 {strides = array<i32>} : memref<4x8x512xf32, #tpu.memory_space<vmem>>, vector<4x8x512xf32>,
    %c1_80 = arith.constant 1 : index
    %c0_81 = arith.constant 0 : index
    %c0_82 = arith.constant 0 : index
    %178 = vector.load %arg12[%c1_80, %c0_81, %c0_82] : memref<2x8x128xf32, #tpu.memory_space<vmem>>, vector<1x8x128xf32>
    %179 = vector.shape_cast %178 : vector<1x8x128xf32> to vector<8x128xf32>
    %c1_83 = arith.constant 1 : index
    %c0_84 = arith.constant 0 : index
    %c0_85 = arith.constant 0 : index
    %180 = vector.load %arg13[%c1_83, %c0_84, %c0_85] : memref<2x8x128xf32, #tpu.memory_space<vmem>>, vector<1x8x128xf32>
    %181 = vector.shape_cast %180 : vector<1x8x128xf32> to vector<8x128xf32>
    %c0_i32_86 = arith.constant 0 : i32
    %182 = arith.index_cast %c0_i32_86 : i32 to index
    %c0_87 = arith.constant 0 : index
    %c0_88 = arith.constant 0 : index
    %183 = vector.load %arg10[%182, %c0_87, %c0_88] : memref<4x8x512xf32, #tpu.memory_space<vmem>>, vector<1x8x512xf32>
    %184 = vector.shape_cast %183 : vector<1x8x512xf32> to vector<8x512xf32>
    %c1_89 = arith.constant 1 : index
    %c0_90 = arith.constant 0 : index
    %c0_91 = arith.constant 0 : index
    %185 = vector.load %arg5[%c1_89, %c0_90, %c0_91] : memref<2x128x512xf32, #tpu.memory_space<vmem>>, vector<1x128x512xf32>
    %186 = vector.shape_cast %185 : vector<1x128x512xf32> to vector<128x512xf32>
    %cst_92 = arith.constant dense<0.000000e+00> : vector<8x512xf32>
    %187 = tpu.matmul %179, %186, %cst_92 {dimension_numbers = #tpu.dot_dimension_numbers<[1], [0], [0], [1], [0, 0, 1, 1], [], []>} : vector<8x128xf32>, vector<128x512xf32>, vector<8x512xf32> -> vector<8x512xf32>
    %188 = arith.addf %184, %187 : vector<8x512xf32>
    %189 = vector.extract_strided_slice %188 {offsets = [0, 0], sizes = [8, 128], strides = [1, 1]} : vector<8x512xf32> to vector<8x128xf32>
    %190 = arith.negf %189 : vector<8x128xf32>
    %191 = math.exp %190 : vector<8x128xf32>
    %cst_93 = arith.constant 1.000000e+00 : f32
    %192 = vector.broadcast %cst_93 : f32 to vector<8x128xf32>
    %193 = arith.addf %192, %191 : vector<8x128xf32>
    %194 = arith.divf %192, %193 : vector<8x128xf32>
    %195 = vector.extract_strided_slice %188 {offsets = [0, 128], sizes = [8, 128], strides = [1, 1]} : vector<8x512xf32> to vector<8x128xf32>
    %196 = arith.negf %195 : vector<8x128xf32>
    %197 = math.exp %196 : vector<8x128xf32>
    %cst_94 = arith.constant 1.000000e+00 : f32
    %198 = vector.broadcast %cst_94 : f32 to vector<8x128xf32>
    %199 = arith.addf %198, %197 : vector<8x128xf32>
    %200 = arith.divf %198, %199 : vector<8x128xf32>
    %201 = vector.extract_strided_slice %188 {offsets = [0, 256], sizes = [8, 128], strides = [1, 1]} : vector<8x512xf32> to vector<8x128xf32>
    %202 = math.tanh %201 : vector<8x128xf32>
    %203 = vector.extract_strided_slice %188 {offsets = [0, 384], sizes = [8, 128], strides = [1, 1]} : vector<8x512xf32> to vector<8x128xf32>
    %204 = arith.negf %203 : vector<8x128xf32>
    %205 = math.exp %204 : vector<8x128xf32>
    %cst_95 = arith.constant 1.000000e+00 : f32
    %206 = vector.broadcast %cst_95 : f32 to vector<8x128xf32>
    %207 = arith.addf %206, %205 : vector<8x128xf32>
    %208 = arith.divf %206, %207 : vector<8x128xf32>
    %209 = arith.mulf %200, %181 : vector<8x128xf32>
    %210 = arith.mulf %194, %202 : vector<8x128xf32>
    %211 = arith.addf %209, %210 : vector<8x128xf32>
    %212 = math.tanh %211 : vector<8x128xf32>
    %213 = arith.mulf %208, %212 : vector<8x128xf32>
    %c1_i32_96 = arith.constant 1 : i32
    %214 = arith.index_cast %c1_i32_96 : i32 to index
    %c0_97 = arith.constant 0 : index
    %c0_98 = arith.constant 0 : index
    %215 = vector.load %arg10[%214, %c0_97, %c0_98] : memref<4x8x512xf32, #tpu.memory_space<vmem>>, vector<1x8x512xf32>
    %216 = vector.shape_cast %215 : vector<1x8x512xf32> to vector<8x512xf32>
    %c1_99 = arith.constant 1 : index
    %c0_100 = arith.constant 0 : index
    %c0_101 = arith.constant 0 : index
    %217 = vector.load %arg5[%c1_99, %c0_100, %c0_101] : memref<2x128x512xf32, #tpu.memory_space<vmem>>, vector<1x128x512xf32>
    %218 = vector.shape_cast %217 : vector<1x128x512xf32> to vector<128x512xf32>
    %cst_102 = arith.constant dense<0.000000e+00> : vector<8x512xf32>
    %219 = tpu.matmul %213, %218, %cst_102 {dimension_numbers = #tpu.dot_dimension_numbers<[1], [0], [0], [1], [0, 0, 1, 1], [], []>} : vector<8x128xf32>, vector<128x512xf32>, vector<8x512xf32> -> vector<8x512xf32>
    %220 = arith.addf %216, %219 : vector<8x512xf32>
    %221 = vector.extract_strided_slice %220 {offsets = [0, 0], sizes = [8, 128], strides = [1, 1]} : vector<8x512xf32> to vector<8x128xf32>
    %222 = arith.negf %221 : vector<8x128xf32>
    %223 = math.exp %222 : vector<8x128xf32>
    %cst_103 = arith.constant 1.000000e+00 : f32
    %224 = vector.broadcast %cst_103 : f32 to vector<8x128xf32>
    %225 = arith.addf %224, %223 : vector<8x128xf32>
    %226 = arith.divf %224, %225 : vector<8x128xf32>
    %227 = vector.extract_strided_slice %220 {offsets = [0, 128], sizes = [8, 128], strides = [1, 1]} : vector<8x512xf32> to vector<8x128xf32>
    %228 = arith.negf %227 : vector<8x128xf32>
    %229 = math.exp %228 : vector<8x128xf32>
    %cst_104 = arith.constant 1.000000e+00 : f32
    %230 = vector.broadcast %cst_104 : f32 to vector<8x128xf32>
    %231 = arith.addf %230, %229 : vector<8x128xf32>
    %232 = arith.divf %230, %231 : vector<8x128xf32>
    %233 = vector.extract_strided_slice %220 {offsets = [0, 256], sizes = [8, 128], strides = [1, 1]} : vector<8x512xf32> to vector<8x128xf32>
    %234 = math.tanh %233 : vector<8x128xf32>
    %235 = vector.extract_strided_slice %220 {offsets = [0, 384], sizes = [8, 128], strides = [1, 1]} : vector<8x512xf32> to vector<8x128xf32>
    %236 = arith.negf %235 : vector<8x128xf32>
    %237 = math.exp %236 : vector<8x128xf32>
    %cst_105 = arith.constant 1.000000e+00 : f32
    %238 = vector.broadcast %cst_105 : f32 to vector<8x128xf32>
    %239 = arith.addf %238, %237 : vector<8x128xf32>
    %240 = arith.divf %238, %239 : vector<8x128xf32>
    %241 = arith.mulf %232, %211 : vector<8x128xf32>
    %242 = arith.mulf %226, %234 : vector<8x128xf32>
    %243 = arith.addf %241, %242 : vector<8x128xf32>
    %244 = math.tanh %243 : vector<8x128xf32>
    %245 = arith.mulf %240, %244 : vector<8x128xf32>
    %c2_i32_106 = arith.constant 2 : i32
    %246 = arith.index_cast %c2_i32_106 : i32 to index
    %c0_107 = arith.constant 0 : index
    %c0_108 = arith.constant 0 : index
    %247 = vector.load %arg10[%246, %c0_107, %c0_108] : memref<4x8x512xf32, #tpu.memory_space<vmem>>, vector<1x8x512xf32>
    %248 = vector.shape_cast %247 : vector<1x8x512xf32> to vector<8x512xf32>
    %c1_109 = arith.constant 1 : index
    %c0_110 = arith.constant 0 : index
    %c0_111 = arith.constant 0 : index
    %249 = vector.load %arg5[%c1_109, %c0_110, %c0_111] : memref<2x128x512xf32, #tpu.memory_space<vmem>>, vector<1x128x512xf32>
    %250 = vector.shape_cast %249 : vector<1x128x512xf32> to vector<128x512xf32>
    %cst_112 = arith.constant dense<0.000000e+00> : vector<8x512xf32>
    %251 = tpu.matmul %245, %250, %cst_112 {dimension_numbers = #tpu.dot_dimension_numbers<[1], [0], [0], [1], [0, 0, 1, 1], [], []>} : vector<8x128xf32>, vector<128x512xf32>, vector<8x512xf32> -> vector<8x512xf32>
    %252 = arith.addf %248, %251 : vector<8x512xf32>
    %253 = vector.extract_strided_slice %252 {offsets = [0, 0], sizes = [8, 128], strides = [1, 1]} : vector<8x512xf32> to vector<8x128xf32>
    %254 = arith.negf %253 : vector<8x128xf32>
    %255 = math.exp %254 : vector<8x128xf32>
    %cst_113 = arith.constant 1.000000e+00 : f32
    %256 = vector.broadcast %cst_113 : f32 to vector<8x128xf32>
    %257 = arith.addf %256, %255 : vector<8x128xf32>
    %258 = arith.divf %256, %257 : vector<8x128xf32>
    %259 = vector.extract_strided_slice %252 {offsets = [0, 128], sizes = [8, 128], strides = [1, 1]} : vector<8x512xf32> to vector<8x128xf32>
    %260 = arith.negf %259 : vector<8x128xf32>
    %261 = math.exp %260 : vector<8x128xf32>
    %cst_114 = arith.constant 1.000000e+00 : f32
    %262 = vector.broadcast %cst_114 : f32 to vector<8x128xf32>
    %263 = arith.addf %262, %261 : vector<8x128xf32>
    %264 = arith.divf %262, %263 : vector<8x128xf32>
    %265 = vector.extract_strided_slice %252 {offsets = [0, 256], sizes = [8, 128], strides = [1, 1]} : vector<8x512xf32> to vector<8x128xf32>
    %266 = math.tanh %265 : vector<8x128xf32>
    %267 = vector.extract_strided_slice %252 {offsets = [0, 384], sizes = [8, 128], strides = [1, 1]} : vector<8x512xf32> to vector<8x128xf32>
    %268 = arith.negf %267 : vector<8x128xf32>
    %269 = math.exp %268 : vector<8x128xf32>
    %cst_115 = arith.constant 1.000000e+00 : f32
    %270 = vector.broadcast %cst_115 : f32 to vector<8x128xf32>
    %271 = arith.addf %270, %269 : vector<8x128xf32>
    %272 = arith.divf %270, %271 : vector<8x128xf32>
    %273 = arith.mulf %264, %243 : vector<8x128xf32>
    %274 = arith.mulf %258, %266 : vector<8x128xf32>
    %275 = arith.addf %273, %274 : vector<8x128xf32>
    %276 = math.tanh %275 : vector<8x128xf32>
    %277 = arith.mulf %272, %276 : vector<8x128xf32>
    %c3_i32_116 = arith.constant 3 : i32
    %278 = arith.index_cast %c3_i32_116 : i32 to index
    %c0_117 = arith.constant 0 : index
    %c0_118 = arith.constant 0 : index
    %279 = vector.load %arg10[%278, %c0_117, %c0_118] : memref<4x8x512xf32, #tpu.memory_space<vmem>>, vector<1x8x512xf32>
    %280 = vector.shape_cast %279 : vector<1x8x512xf32> to vector<8x512xf32>
    %c1_119 = arith.constant 1 : index
    %c0_120 = arith.constant 0 : index
    %c0_121 = arith.constant 0 : index
    %281 = vector.load %arg5[%c1_119, %c0_120, %c0_121] : memref<2x128x512xf32, #tpu.memory_space<vmem>>, vector<1x128x512xf32>
    %282 = vector.shape_cast %281 : vector<1x128x512xf32> to vector<128x512xf32>
    %cst_122 = arith.constant dense<0.000000e+00> : vector<8x512xf32>
    %283 = tpu.matmul %277, %282, %cst_122 {dimension_numbers = #tpu.dot_dimension_numbers<[1], [0], [0], [1], [0, 0, 1, 1], [], []>} : vector<8x128xf32>, vector<128x512xf32>, vector<8x512xf32> -> vector<8x512xf32>
    %284 = arith.addf %280, %283 : vector<8x512xf32>
    %285 = vector.extract_strided_slice %284 {offsets = [0, 0], sizes = [8, 128], strides = [1, 1]} : vector<8x512xf32> to vector<8x128xf32>
    %286 = arith.negf %285 : vector<8x128xf32>
    %287 = math.exp %286 : vector<8x128xf32>
    %cst_123 = arith.constant 1.000000e+00 : f32
    %288 = vector.broadcast %cst_123 : f32 to vector<8x128xf32>
    %289 = arith.addf %288, %287 : vector<8x128xf32>
    %290 = arith.divf %288, %289 : vector<8x128xf32>
    %291 = vector.extract_strided_slice %284 {offsets = [0, 128], sizes = [8, 128], strides = [1, 1]} : vector<8x512xf32> to vector<8x128xf32>
    %292 = arith.negf %291 : vector<8x128xf32>
    %293 = math.exp %292 : vector<8x128xf32>
    %cst_124 = arith.constant 1.000000e+00 : f32
    %294 = vector.broadcast %cst_124 : f32 to vector<8x128xf32>
    %295 = arith.addf %294, %293 : vector<8x128xf32>
    %296 = arith.divf %294, %295 : vector<8x128xf32>
    %297 = vector.extract_strided_slice %284 {offsets = [0, 256], sizes = [8, 128], strides = [1, 1]} : vector<8x512xf32> to vector<8x128xf32>
    %298 = math.tanh %297 : vector<8x128xf32>
    %299 = vector.extract_strided_slice %284 {offsets = [0, 384], sizes = [8, 128], strides = [1, 1]} : vector<8x512xf32> to vector<8x128xf32>
    %300 = arith.negf %299 : vector<8x128xf32>
    %301 = math.exp %300 : vector<8x128xf32>
    %cst_125 = arith.constant 1.000000e+00 : f32
    %302 = vector.broadcast %cst_125 : f32 to vector<8x128xf32>
    %303 = arith.addf %302, %301 : vector<8x128xf32>
    %304 = arith.divf %302, %303 : vector<8x128xf32>
    %305 = arith.mulf %296, %275 : vector<8x128xf32>
    %306 = arith.mulf %290, %298 : vector<8x128xf32>
    %307 = arith.addf %305, %306 : vector<8x128xf32>
    %308 = math.tanh %307 : vector<8x128xf32>
    %309 = arith.mulf %304, %308 : vector<8x128xf32>
    %c4_i32_126 = arith.constant 4 : i32
    %c1_127 = arith.constant 1 : index
    %c0_128 = arith.constant 0 : index
    %c0_129 = arith.constant 0 : index
    %310 = vector.load %arg12[%c1_127, %c0_128, %c0_129] : memref<2x8x128xf32, #tpu.memory_space<vmem>>, vector<1x8x128xf32>
    %311 = vector.shape_cast %310 : vector<1x8x128xf32> to vector<8x128xf32>
    %312 = vector.shape_cast %309 : vector<8x128xf32> to vector<1x8x128xf32>
    tpu.vector_store %arg12[%c1_127, %c0_128, %c0_129], %312 {strides = array<i32>} : memref<2x8x128xf32, #tpu.memory_space<vmem>>, vector<1x8x128xf32>,
    %c1_130 = arith.constant 1 : index
    %c0_131 = arith.constant 0 : index
    %c0_132 = arith.constant 0 : index
    %313 = vector.load %arg13[%c1_130, %c0_131, %c0_132] : memref<2x8x128xf32, #tpu.memory_space<vmem>>, vector<1x8x128xf32>
    %314 = vector.shape_cast %313 : vector<1x8x128xf32> to vector<8x128xf32>
    %315 = vector.shape_cast %307 : vector<8x128xf32> to vector<1x8x128xf32>
    tpu.vector_store %arg13[%c1_130, %c0_131, %c0_132], %315 {strides = array<i32>} : memref<2x8x128xf32, #tpu.memory_space<vmem>>, vector<1x8x128xf32>,
    %c1_i32_133 = arith.constant 1 : i32
    %316 = arith.cmpi eq, %arg1, %c1_i32_133 : i32
    %317 = arith.extui %316 : i1 to i32
    %c0_i32_134 = arith.constant 0 : i32
    %318 = arith.cmpi ne, %317, %c0_i32_134 : i32
    scf.if %318 {
      %c0_135 = arith.constant 0 : index
      %c0_136 = arith.constant 0 : index
      %319 = vector.load %arg7[%c0_135, %c0_136] : memref<128x4xf32, #tpu.memory_space<vmem>>, vector<128x4xf32>
      %cst_137 = arith.constant dense<0.000000e+00> : vector<8x4xf32>
      %320 = tpu.matmul %309, %319, %cst_137 {dimension_numbers = #tpu.dot_dimension_numbers<[1], [0], [0], [1], [0, 0, 1, 1], [], []>} : vector<8x128xf32>, vector<128x4xf32>, vector<8x4xf32> -> vector<8x4xf32>
      %c0_138 = arith.constant 0 : index
      %c0_139 = arith.constant 0 : index
      %321 = vector.load %arg8[%c0_138, %c0_139] : memref<1x4xf32, #tpu.memory_space<vmem>>, vector<1x4xf32>
      %322 = vector.broadcast %321 : vector<1x4xf32> to vector<8x4xf32>
      %323 = arith.addf %320, %322 : vector<8x4xf32>
      %c0_140 = arith.constant 0 : index
      %c0_141 = arith.constant 0 : index
      %324 = vector.load %arg9[%c0_140, %c0_141] : memref<8x4xf32, #tpu.memory_space<vmem>>, vector<8x4xf32>
      tpu.vector_store %arg9[%c0_140, %c0_141], %323 {strides = array<i32>} : memref<8x4xf32, #tpu.memory_space<vmem>>, vector<8x4xf32>,
    } else {
    }
    return
  }
  func.func @transform_0(%arg0: i32, %arg1: i32) -> (i32, i32, i32) {
    %c0_i32 = arith.constant 0 : i32
    %c0_i32_0 = arith.constant 0 : i32
    return %arg1, %arg0, %c0_i32 : i32, i32, i32
  }
  func.func @transform_1(%arg0: i32, %arg1: i32) -> (i32, i32) {
    %c0_i32 = arith.constant 0 : i32
    %c0_i32_0 = arith.constant 0 : i32
    %c0_i32_1 = arith.constant 0 : i32
    return %c0_i32, %c0_i32_0 : i32, i32
  }
  func.func @transform_2(%arg0: i32, %arg1: i32) -> (i32, i32, i32) {
    %c0_i32 = arith.constant 0 : i32
    %c0_i32_0 = arith.constant 0 : i32
    %c0_i32_1 = arith.constant 0 : i32
    %c0_i32_2 = arith.constant 0 : i32
    return %c0_i32, %c0_i32_0, %c0_i32_1 : i32, i32, i32
  }
  func.func @transform_3(%arg0: i32, %arg1: i32) -> (i32, i32, i32) {
    %c0_i32 = arith.constant 0 : i32
    %c0_i32_0 = arith.constant 0 : i32
    %c0_i32_1 = arith.constant 0 : i32
    %c0_i32_2 = arith.constant 0 : i32
    return %c0_i32, %c0_i32_0, %c0_i32_1 : i32, i32, i32
  }
  func.func @transform_4(%arg0: i32, %arg1: i32) -> (i32, i32, i32) {
    %c0_i32 = arith.constant 0 : i32
    %c0_i32_0 = arith.constant 0 : i32
    %c0_i32_1 = arith.constant 0 : i32
    %c0_i32_2 = arith.constant 0 : i32
    return %c0_i32, %c0_i32_0, %c0_i32_1 : i32, i32, i32
  }
  func.func @transform_5(%arg0: i32, %arg1: i32) -> (i32, i32) {
    %c0_i32 = arith.constant 0 : i32
    %c0_i32_0 = arith.constant 0 : i32
    %c0_i32_1 = arith.constant 0 : i32
    return %c0_i32, %c0_i32_0 : i32, i32
  }
  func.func @transform_6(%arg0: i32, %arg1: i32) -> (i32, i32) {
    %c0_i32 = arith.constant 0 : i32
    %c0_i32_0 = arith.constant 0 : i32
    %c0_i32_1 = arith.constant 0 : i32
    return %c0_i32, %c0_i32_0 : i32, i32
  }
  func.func @transform_7(%arg0: i32, %arg1: i32) -> (i32, i32) {
    %c0_i32 = arith.constant 0 : i32
    %c0_i32_0 = arith.constant 0 : i32
    return %arg0, %c0_i32 : i32, i32
  }
}

</mosaic_0001>

<llo_original>
// kernel: simple_lstm_forward.1
$region0: #{simple_lstm_forward.1}
  #allocation0 [shape = 'u32[]', space=smem, size = 0x4, offset = 0x4, fixed_abs, tag = 'smem constant byte address 0x4 - core index']
  #allocation1 [shape = 'u32[72,128]{1,0:T(1,128)}', space=vmem, size = 0x9000, scoped, tag = 'internal scratch']
  #allocation2 [shape = 'f32[4,8,512]{2,1,0:T(8,128)}', space=vmem, size = 0x10000, scoped, tag = 'scratch operand']
  #allocation3 [shape = 'f32[4,8,128]{2,1,0:T(8,128)}', space=vmem, size = 0x4000, scoped, tag = 'scratch operand']
  #allocation4 [shape = 'f32[2,8,128]{2,1,0:T(8,128)}', space=vmem, size = 0x2000, scoped, tag = 'scratch operand']
  #allocation5 [shape = 'f32[2,8,128]{2,1,0:T(8,128)}', space=vmem, size = 0x2000, scoped, tag = 'scratch operand']
  %s0 = inlined_call_operand.vmem [shape: f32[8,8,16], index: 0, kind: input, shape index: {}]
  %s1 = inlined_call_operand.vmem [shape: f32[16,512], index: 1, kind: input, shape index: {}]
  %s2 = inlined_call_operand.vmem [shape: f32[1,128,512], index: 2, kind: input, shape index: {}]
  %s3 = inlined_call_operand.vmem [shape: f32[2,128,512], index: 3, kind: input, shape index: {}]
  %s4 = inlined_call_operand.vmem [shape: f32[2,1,512], index: 4, kind: input, shape index: {}]
  %s5 = inlined_call_operand.vmem [shape: f32[128,4], index: 5, kind: input, shape index: {}]
  %s6 = inlined_call_operand.vmem [shape: f32[1,4], index: 6, kind: input, shape index: {}]
  %s7 = inlined_call_operand.vmem [shape: f32[8,4], index: 7, kind: output, shape index: {}]
  %s8 = sld [smem:[#allocation0]]
  $region69: #{simple_lstm_forward.1} parent=0
    _
  %s10 = ssub.s32 1, %s8
  %s11 = scalar_select 0, %s10, %s8
  loop: start=0, step=1, limit=4
  $region2: #{simple_lstm_forward.1} parent=0 // loop_pre_header
    _
  $region3: #{simple_lstm_forward.1} parent=0 // loop_header
    %s13 = sphi 0, %s17
    %p14 = scmp.ge.s32.totalorder %s13, 4
    %s20 = sphi 0, %s32
    %s21 = sphi 0, %s28
    %s22 = sphi 0, %s20
    %s23 = sphi 0, %s21
    %s24 = sphi 0, %s22
    %s25 = sphi 0, %s23
    %s37 = sphi 0, %s39
    %s40 = sphi 0, %s37
    %s41 = sphi 0, %s40
    %s57 = sphi 0, %s41
    %s61 = sphi 0, %s61
    %s63 = sphi 0, %s61
    %s64 = sphi 0, %s63
    %s78 = sphi 0, %s64
    %s82 = sphi 0, %s82
    %s84 = sphi 0, %s82
    %s85 = sphi 0, %s84
    %s99 = sphi 0, %s85
    %s103 = sphi 0, %s103
    %s105 = sphi 0, %s103
    %s106 = sphi 0, %s105
    %s120 = sphi 0, %s106
    %s124 = sphi 0, %s124
    %s126 = sphi 0, %s124
    %s127 = sphi 0, %s126
    %s141 = sphi 0, %s127
    %s145 = sphi 0, %s145
    %s147 = sphi 0, %s145
    %s148 = sphi 0, %s147
    %s162 = sphi 0, %s148
    %s166 = sphi 0, %s166
    %s168 = sphi 0, %s166
    %s169 = sphi 0, %s168
    %s183 = sphi 0, %s169
    %s189 = sphi 0, %s191
    %s192 = sphi 0, %s189
    %s193 = sphi 0, %s192
    %s209 = sphi 0, %s193
  $region4: #{simple_lstm_forward.1} parent=0 // loop_header_branch
    %16 = sbr.rel (%p14) target = $region8
  $region5: #{simple_lstm_forward.1} parent=0 // loop_body
    %s18 = ssub.s32 %s13, 1
    %s19 = ssub.s32 %s13, 2
    %s26 = sadd.s32 1, %s21
    %p27 = scmp.ge.s32.totalorder %s26, 2
    %s28 = scalar_select %p27, 0, %s26
    %s29 = sadd.s32 1, %s20
    %s30 = scalar_select %p27, %s29, %s20
    %p31 = scmp.ge.s32.totalorder %s30, 1
    %s32 = scalar_select %p31, 0, %s30
    %s33 = ssub.s32 %s21, %s28
    %s34 = ssub.s32 %s20, %s32
    %s35 = sor.u32 %s33, %s34
    %p36 = scmp.eq.s32.totalorder %s35, 0
    %s38 = sadd.s32 %s37, 1
    %s39 = scalar_select %p36, %s37, %s38
    %p42 = pneg %p36
    %p43 = scmp.eq.s32.totalorder %s13, 1
    %p44 = por %p42, %p43
    %p45 = scmp.ne.s32.totalorder %s37, %s40
    %p46 = scmp.eq.s32.totalorder %s13, 0
    %p47 = por %p45, %p46
    %p48 = scmp.ne.s32.totalorder %s37, %s40
    %p49 = scmp.eq.s32.totalorder %s18, 1
    %p50 = por %p48, %p49
    %p51 = scmp.ne.s32.totalorder %s40, %s41
    %p52 = scmp.eq.s32.totalorder %s18, 0
    %p53 = por %p51, %p52
    %p54 = scmp.ne.s32.totalorder %s40, %s41
    %p55 = scmp.eq.s32.totalorder %s19, 1
    %p56 = por %p54, %p55
    %p58 = scmp.ne.s32.totalorder %s41, %s57
    %p59 = scmp.eq.s32.totalorder %s19, 0
    %p60 = por %p58, %p59
    %s62 = sadd.s32 %s61, 1
    %p65 = scmp.eq.s32.totalorder %s13, 1
    %p66 = scmp.ne.s32.totalorder %s61, %s63
    %p67 = scmp.eq.s32.totalorder %s13, 0
    %p68 = por %p66, %p67
    %p69 = scmp.ne.s32.totalorder %s61, %s63
    %p70 = scmp.eq.s32.totalorder %s18, 1
    %p71 = por %p69, %p70
    %p72 = scmp.ne.s32.totalorder %s63, %s64
    %p73 = scmp.eq.s32.totalorder %s18, 0
    %p74 = por %p72, %p73
    %p75 = scmp.ne.s32.totalorder %s63, %s64
    %p76 = scmp.eq.s32.totalorder %s19, 1
    %p77 = por %p75, %p76
    %p79 = scmp.ne.s32.totalorder %s64, %s78
    %p80 = scmp.eq.s32.totalorder %s19, 0
    %p81 = por %p79, %p80
    %s83 = sadd.s32 %s82, 1
    %p86 = scmp.eq.s32.totalorder %s13, 1
    %p87 = scmp.ne.s32.totalorder %s82, %s84
    %p88 = scmp.eq.s32.totalorder %s13, 0
    %p89 = por %p87, %p88
    %p90 = scmp.ne.s32.totalorder %s82, %s84
    %p91 = scmp.eq.s32.totalorder %s18, 1
    %p92 = por %p90, %p91
    %p93 = scmp.ne.s32.totalorder %s84, %s85
    %p94 = scmp.eq.s32.totalorder %s18, 0
    %p95 = por %p93, %p94
    %p96 = scmp.ne.s32.totalorder %s84, %s85
    %p97 = scmp.eq.s32.totalorder %s19, 1
    %p98 = por %p96, %p97
    %p100 = scmp.ne.s32.totalorder %s85, %s99
    %p101 = scmp.eq.s32.totalorder %s19, 0
    %p102 = por %p100, %p101
    %s104 = sadd.s32 %s103, 1
    %p107 = scmp.eq.s32.totalorder %s13, 1
    %p108 = scmp.ne.s32.totalorder %s103, %s105
    %p109 = scmp.eq.s32.totalorder %s13, 0
    %p110 = por %p108, %p109
    %p111 = scmp.ne.s32.totalorder %s103, %s105
    %p112 = scmp.eq.s32.totalorder %s18, 1
    %p113 = por %p111, %p112
    %p114 = scmp.ne.s32.totalorder %s105, %s106
    %p115 = scmp.eq.s32.totalorder %s18, 0
    %p116 = por %p114, %p115
    %p117 = scmp.ne.s32.totalorder %s105, %s106
    %p118 = scmp.eq.s32.totalorder %s19, 1
    %p119 = por %p117, %p118
    %p121 = scmp.ne.s32.totalorder %s106, %s120
    %p122 = scmp.eq.s32.totalorder %s19, 0
    %p123 = por %p121, %p122
    %s125 = sadd.s32 %s124, 1
    %p128 = scmp.eq.s32.totalorder %s13, 1
    %p129 = scmp.ne.s32.totalorder %s124, %s126
    %p130 = scmp.eq.s32.totalorder %s13, 0
    %p131 = por %p129, %p130
    %p132 = scmp.ne.s32.totalorder %s124, %s126
    %p133 = scmp.eq.s32.totalorder %s18, 1
    %p134 = por %p132, %p133
    %p135 = scmp.ne.s32.totalorder %s126, %s127
    %p136 = scmp.eq.s32.totalorder %s18, 0
    %p137 = por %p135, %p136
    %p138 = scmp.ne.s32.totalorder %s126, %s127
    %p139 = scmp.eq.s32.totalorder %s19, 1
    %p140 = por %p138, %p139
    %p142 = scmp.ne.s32.totalorder %s127, %s141
    %p143 = scmp.eq.s32.totalorder %s19, 0
    %p144 = por %p142, %p143
    %s146 = sadd.s32 %s145, 1
    %p149 = scmp.eq.s32.totalorder %s13, 1
    %p150 = scmp.ne.s32.totalorder %s145, %s147
    %p151 = scmp.eq.s32.totalorder %s13, 0
    %p152 = por %p150, %p151
    %p153 = scmp.ne.s32.totalorder %s145, %s147
    %p154 = scmp.eq.s32.totalorder %s18, 1
    %p155 = por %p153, %p154
    %p156 = scmp.ne.s32.totalorder %s147, %s148
    %p157 = scmp.eq.s32.totalorder %s18, 0
    %p158 = por %p156, %p157
    %p159 = scmp.ne.s32.totalorder %s147, %s148
    %p160 = scmp.eq.s32.totalorder %s19, 1
    %p161 = por %p159, %p160
    %p163 = scmp.ne.s32.totalorder %s148, %s162
    %p164 = scmp.eq.s32.totalorder %s19, 0
    %p165 = por %p163, %p164
    %s167 = sadd.s32 %s166, 1
    %p170 = scmp.eq.s32.totalorder %s13, 1
    %p171 = scmp.ne.s32.totalorder %s166, %s168
    %p172 = scmp.eq.s32.totalorder %s13, 0
    %p173 = por %p171, %p172
    %p174 = scmp.ne.s32.totalorder %s166, %s168
    %p175 = scmp.eq.s32.totalorder %s18, 1
    %p176 = por %p174, %p175
    %p177 = scmp.ne.s32.totalorder %s168, %s169
    %p178 = scmp.eq.s32.totalorder %s18, 0
    %p179 = por %p177, %p178
    %p180 = scmp.ne.s32.totalorder %s168, %s169
    %p181 = scmp.eq.s32.totalorder %s19, 1
    %p182 = por %p180, %p181
    %p184 = scmp.ne.s32.totalorder %s169, %s183
    %p185 = scmp.eq.s32.totalorder %s19, 0
    %p186 = por %p184, %p185
    %s187 = ssub.s32 %s20, %s32
    %p188 = scmp.eq.s32.totalorder %s187, 0
    %s190 = sadd.s32 %s189, 1
    %s191 = scalar_select %p188, %s189, %s190
    %p194 = pneg %p188
    %p195 = scmp.eq.s32.totalorder %s13, 1
    %p196 = por %p194, %p195
    %p197 = scmp.ne.s32.totalorder %s189, %s192
    %p198 = scmp.eq.s32.totalorder %s13, 0
    %p199 = por %p197, %p198
    %p200 = scmp.ne.s32.totalorder %s189, %s192
    %p201 = scmp.eq.s32.totalorder %s18, 1
    %p202 = por %p200, %p201
    %p203 = scmp.ne.s32.totalorder %s192, %s193
    %p204 = scmp.eq.s32.totalorder %s18, 0
    %p205 = por %p203, %p204
    %p206 = scmp.ne.s32.totalorder %s192, %s193
    %p207 = scmp.eq.s32.totalorder %s19, 1
    %p208 = por %p206, %p207
    %p210 = scmp.ne.s32.totalorder %s193, %s209
    %p211 = scmp.eq.s32.totalorder %s19, 0
    %p212 = por %p210, %p211
    %p213 = scmp.le.s32.totalorder 1, %s13
    %p214 = scmp.lt.s32.totalorder %s13, 3
    %p215 = pnand %p213, %p214
    %p216 = pneg %p215
    // Predicated region
    $region9: #{simple_lstm_forward.1} parent=5 // pred_check
      _
    $region10: #{simple_lstm_forward.1} parent=5 // pred_check_branch
      %218 = sbr.rel (%p215) target = $region12
    $region11: #{simple_lstm_forward.1} parent=5 // pred_region
      %s219 = ssub.s32 %s13, 1
      // Predicated region
      $region13: #{simple_lstm_forward.1} parent=11 // pred_check
        %p220 = pneg %p74
      $region14: #{simple_lstm_forward.1} parent=11 // pred_check_branch
        %222 = sbr.rel (%p220) target = $region16
      $region15: #{simple_lstm_forward.1} parent=11 // pred_region
        _
      $region16: #{simple_lstm_forward.1} parent=11 // pred_fallthru
        _
      // Predicated region
      $region17: #{simple_lstm_forward.1} parent=11 // pred_check
        %p223 = pneg %p95
      $region18: #{simple_lstm_forward.1} parent=11 // pred_check_branch
        %225 = sbr.rel (%p223) target = $region20
      $region19: #{simple_lstm_forward.1} parent=11 // pred_region
        _
      $region20: #{simple_lstm_forward.1} parent=11 // pred_fallthru
        _
      // Predicated region
      $region21: #{simple_lstm_forward.1} parent=11 // pred_check
        %p226 = pneg %p116
      $region22: #{simple_lstm_forward.1} parent=11 // pred_check_branch
        %228 = sbr.rel (%p226) target = $region24
      $region23: #{simple_lstm_forward.1} parent=11 // pred_region
        _
      $region24: #{simple_lstm_forward.1} parent=11 // pred_fallthru
        _
      // Predicated region
      $region25: #{simple_lstm_forward.1} parent=11 // pred_check
        %p229 = pneg %p137
      $region26: #{simple_lstm_forward.1} parent=11 // pred_check_branch
        %231 = sbr.rel (%p229) target = $region28
      $region27: #{simple_lstm_forward.1} parent=11 // pred_region
        _
      $region28: #{simple_lstm_forward.1} parent=11 // pred_fallthru
        _
      // Predicated region
      $region29: #{simple_lstm_forward.1} parent=11 // pred_check
        %p232 = pneg %p158
      $region30: #{simple_lstm_forward.1} parent=11 // pred_check_branch
        %234 = sbr.rel (%p232) target = $region32
      $region31: #{simple_lstm_forward.1} parent=11 // pred_region
        _
      $region32: #{simple_lstm_forward.1} parent=11 // pred_fallthru
        _
      // Predicated region
      $region33: #{simple_lstm_forward.1} parent=11 // pred_check
        %p235 = pneg %p179
      $region34: #{simple_lstm_forward.1} parent=11 // pred_check_branch
        %237 = sbr.rel (%p235) target = $region36
      $region35: #{simple_lstm_forward.1} parent=11 // pred_region
        _
      $region36: #{simple_lstm_forward.1} parent=11 // pred_fallthru
        _
    $region12: #{simple_lstm_forward.1} parent=5 // pred_fallthru
      _
    %p238 = scmp.lt.s32.totalorder %s13, 2
    // Predicated region
    $region37: #{simple_lstm_forward.1} parent=5 // pred_check
      %p239 = pneg %p238
    $region38: #{simple_lstm_forward.1} parent=5 // pred_check_branch
      %241 = sbr.rel (%p239) target = $region40
    $region39: #{simple_lstm_forward.1} parent=5 // pred_region
      // Predicated region
      $region41: #{simple_lstm_forward.1} parent=39 // pred_check
        %p242 = pneg %p47
      $region42: #{simple_lstm_forward.1} parent=39 // pred_check_branch
        %244 = sbr.rel (%p242) target = $region44
      $region43: #{simple_lstm_forward.1} parent=39 // pred_region
        %s245 = smul.u32 4, %s21
        %p246 = scmp.lt.s32.totalorder %s245, 7
        %s247 = scalar_select %p246, %s245, 7
        %p248 = scmp.lt.s32.totalorder %s20, 0
        %s249 = scalar_select %p248, %s20, 0
        %s250 = sadd.s32 %s249, %s247
        %s251 = smul.addr %s250, 8
        %s252 = scalar_lea.vmem %s0, %s251
        %s253 = smul.u32 4, %s21
      $region44: #{simple_lstm_forward.1} parent=39 // pred_fallthru
        _
    $region40: #{simple_lstm_forward.1} parent=5 // pred_fallthru
      _
    %p254 = scmp.le.s32.totalorder 1, %s13
    %p255 = scmp.lt.s32.totalorder %s13, 3
    %p256 = pnand %p254, %p255
    %p257 = pneg %p256
    // Predicated region
    $region45: #{simple_lstm_forward.1} parent=5 // pred_check
      _
    $region46: #{simple_lstm_forward.1} parent=5 // pred_check_branch
      %259 = sbr.rel (%p256) target = $region48
    $region47: #{simple_lstm_forward.1} parent=5 // pred_region
      %s260 = ssub.s32 %s13, 1
      %s261 = smul.u32 4, %s23
      %p262 = scmp.lt.s32.totalorder %s261, 7
      %s263 = scalar_select %p262, %s261, 7
      %p264 = scmp.lt.s32.totalorder %s22, 0
      %s265 = scalar_select %p264, %s22, 0
      %s266 = sadd.s32 %s265, %s263
      %s267 = smul.addr %s266, 8
      %s268 = scalar_lea.vmem %s0, %s267
      %p269 = pneg %p53
      %p270 = pneg %p50
      %p271 = pneg %p74
      %p272 = pneg %p71
      %p273 = pneg %p95
      %p274 = pneg %p92
      %p275 = pneg %p116
      %p276 = pneg %p113
      %p277 = pneg %p137
      %p278 = pneg %p134
      %p279 = pneg %p158
      %p280 = pneg %p155
      %p281 = pneg %p179
      %p282 = pneg %p176
      %p283 = pneg %p205
      %p284 = pneg %p202
      %p285 = scmp.lt.s32.totalorder %s22, 0
      %s286 = scalar_select %p285, %s22, 0
      %s287 = smul.addr %s286, 8
      %s288 = scalar_lea.vmem %s7, %s287
      %s289 = smul.u32 4, %s23
      %p290 = scmp.lt.s32.totalorder %s289, 7
      %s291 = scalar_select %p290, %s289, 7
      %p292 = scmp.lt.s32.totalorder %s22, 0
      %s293 = scalar_select %p292, %s22, 0
      %s294 = sadd.s32 %s293, %s291
      %s295 = smul.addr %s294, 8
      %s296 = scalar_lea.vmem %s0, %s295
      %s297 = smul.u32 4, %s23
      %p298 = scmp.lt.s32.totalorder %s22, 0
      %s299 = scalar_select %p298, %s22, 0
      %s300 = smul.addr %s299, 8
      %s301 = scalar_lea.vmem %s7, %s300
      %p302 = scmp.eq.s32.totalorder %s23, 0
      // Predicated region
      $region49: #{simple_lstm_forward.1} parent=47 // pred_check
        %p303 = pneg %p302
      $region50: #{simple_lstm_forward.1} parent=47 // pred_check_branch
        %305 = sbr.rel (%p303) target = $region52
      $region51: #{simple_lstm_forward.1} parent=47 // pred_region
        %306 = vst [vmem:[#allocation4] sm:$0xff] 0.0
        %307 = vst [vmem:[#allocation4 + $0x8] sm:$0xff] 0.0
        %308 = vst [vmem:[#allocation5] sm:$0xff] 0.0
        %309 = vst [vmem:[#allocation5 + $0x8] sm:$0xff] 0.0
      $region52: #{simple_lstm_forward.1} parent=47 // pred_fallthru
        _
      %v310 = vld [vmem:[%s296] sm:$0xff]
      %v311 = vld [vmem:[%s296 + $0x8] sm:$0xff]
      %v312 = vld [vmem:[%s296 + $0x10] sm:$0xff]
      %v313 = vld [vmem:[%s296 + $0x18] sm:$0xff]
      %v314 = vld [vmem:[%s1] sm:$0xff]
      %v315 = vld [vmem:[%s1 + $0x8] sm:$0xff]
      %v316 = vld [vmem:[%s1 + $0x10] sm:$0xff]
      %v317 = vld [vmem:[%s1 + $0x18] sm:$0xff]
      %v318 = vld [vmem:[%s1 + $0x20] sm:$0xff]
      %v319 = vld [vmem:[%s1 + $0x28] sm:$0xff]
      %v320 = vld [vmem:[%s1 + $0x30] sm:$0xff]
      %v321 = vld [vmem:[%s1 + $0x38] sm:$0xff]
      %v322 = vld [vmem:[%s4] sm:$0xf]
      %v324 = vperm.slane %v322, 0
      %v325 = vperm.slane %v322, 1
      %v326 = vperm.slane %v322, 2
      %v327 = vperm.slane %v322, 3
      %vm332 = vcmask 130048
      %v334 = vsel %vm332, %v310, 0
      %v337 = vsel %vm332, %v311, 0
      %v340 = vsel %vm332, %v312, 0
      %v343 = vsel %vm332, %v313, 0
      %345 = vmatpush.msra.mxu0 0.0
      %346 = vmatpush.msra.mxu0 0.0
      %347 = vmatpush.msra.mxu0 0.0
      %348 = vmatpush.msra.mxu0 0.0
      %349 = vmatpush.msra.mxu0 0.0
      %350 = vmatpush.msra.mxu0 0.0
      %351 = vmatpush.msra.mxu0 0.0
      %352 = vmatpush.msra.mxu0 0.0
      %353 = vmatpush.msra.mxu0 0.0
      %354 = vmatpush.msra.mxu0 0.0
      %355 = vmatpush.msra.mxu0 0.0
      %356 = vmatpush.msra.mxu0 0.0
      %357 = vmatpush.msra.mxu0 0.0
      %358 = vmatpush.msra.mxu0 0.0
      %359 = vmatpush.msra.mxu0 %v318
      %360 = vmatpush.msra.mxu0 %v314
      %361 = vmatmul.f32.gmra.mxu0 %v334
      %v362 = vpop.f32.mrf.mxu0
      %v363 = vadd.f32 %v324, %v362
      %364 = vmatmul.f32.gmra.mxu0 %v337
      %v365 = vpop.f32.mrf.mxu0
      %v366 = vadd.f32 %v324, %v365
      %367 = vmatmul.f32.gmra.mxu0 %v340
      %v368 = vpop.f32.mrf.mxu0
      %v369 = vadd.f32 %v324, %v368
      %370 = vmatmul.f32.gmra.mxu0 %v343
      %v371 = vpop.f32.mrf.mxu0
      %v372 = vadd.f32 %v324, %v371
      %373 = vdwg.mxu0
      %374 = vmatpush.msra.mxu0 0.0
      %375 = vmatpush.msra.mxu0 0.0
      %376 = vmatpush.msra.mxu0 0.0
      %377 = vmatpush.msra.mxu0 0.0
      %378 = vmatpush.msra.mxu0 0.0
      %379 = vmatpush.msra.mxu0 0.0
      %380 = vmatpush.msra.mxu0 0.0
      %381 = vmatpush.msra.mxu0 0.0
      %382 = vmatpush.msra.mxu0 0.0
      %383 = vmatpush.msra.mxu0 0.0
      %384 = vmatpush.msra.mxu0 0.0
      %385 = vmatpush.msra.mxu0 0.0
      %386 = vmatpush.msra.mxu0 0.0
      %387 = vmatpush.msra.mxu0 0.0
      %388 = vmatpush.msra.mxu0 %v319
      %389 = vmatpush.msra.mxu0 %v315
      %390 = vmatmul.f32.gmra.mxu0 %v334
      %v391 = vpop.f32.mrf.mxu0
      %v392 = vadd.f32 %v325, %v391
      %393 = vmatmul.f32.gmra.mxu0 %v337
      %v394 = vpop.f32.mrf.mxu0
      %v395 = vadd.f32 %v325, %v394
      %396 = vmatmul.f32.gmra.mxu0 %v340
      %v397 = vpop.f32.mrf.mxu0
      %v398 = vadd.f32 %v325, %v397
      %399 = vmatmul.f32.gmra.mxu0 %v343
      %v400 = vpop.f32.mrf.mxu0
      %v401 = vadd.f32 %v325, %v400
      %402 = vdwg.mxu0
      %403 = vmatpush.msra.mxu0 0.0
      %404 = vmatpush.msra.mxu0 0.0
      %405 = vmatpush.msra.mxu0 0.0
      %406 = vmatpush.msra.mxu0 0.0
      %407 = vmatpush.msra.mxu0 0.0
      %408 = vmatpush.msra.mxu0 0.0
      %409 = vmatpush.msra.mxu0 0.0
      %410 = vmatpush.msra.mxu0 0.0
      %411 = vmatpush.msra.mxu0 0.0
      %412 = vmatpush.msra.mxu0 0.0
      %413 = vmatpush.msra.mxu0 0.0
      %414 = vmatpush.msra.mxu0 0.0
      %415 = vmatpush.msra.mxu0 0.0
      %416 = vmatpush.msra.mxu0 0.0
      %417 = vmatpush.msra.mxu0 %v320
      %418 = vmatpush.msra.mxu0 %v316
      %419 = vmatmul.f32.gmra.mxu0 %v334
      %v420 = vpop.f32.mrf.mxu0
      %v421 = vadd.f32 %v326, %v420
      %422 = vmatmul.f32.gmra.mxu0 %v337
      %v423 = vpop.f32.mrf.mxu0
      %v424 = vadd.f32 %v326, %v423
      %425 = vmatmul.f32.gmra.mxu0 %v340
      %v426 = vpop.f32.mrf.mxu0
      %v427 = vadd.f32 %v326, %v426
      %428 = vmatmul.f32.gmra.mxu0 %v343
      %v429 = vpop.f32.mrf.mxu0
      %v430 = vadd.f32 %v326, %v429
      %431 = vdwg.mxu0
      %432 = vmatpush.msra.mxu0 0.0
      %433 = vmatpush.msra.mxu0 0.0
      %434 = vmatpush.msra.mxu0 0.0
      %435 = vmatpush.msra.mxu0 0.0
      %436 = vmatpush.msra.mxu0 0.0
      %437 = vmatpush.msra.mxu0 0.0
      %438 = vmatpush.msra.mxu0 0.0
      %439 = vmatpush.msra.mxu0 0.0
      %440 = vmatpush.msra.mxu0 0.0
      %441 = vmatpush.msra.mxu0 0.0
      %442 = vmatpush.msra.mxu0 0.0
      %443 = vmatpush.msra.mxu0 0.0
      %444 = vmatpush.msra.mxu0 0.0
      %445 = vmatpush.msra.mxu0 0.0
      %446 = vmatpush.msra.mxu0 %v321
      %447 = vmatpush.msra.mxu0 %v317
      %448 = vmatmul.f32.gmra.mxu0 %v334
      %v449 = vpop.f32.mrf.mxu0
      %v450 = vadd.f32 %v327, %v449
      %451 = vmatmul.f32.gmra.mxu0 %v337
      %v452 = vpop.f32.mrf.mxu0
      %v453 = vadd.f32 %v327, %v452
      %454 = vmatmul.f32.gmra.mxu0 %v340
      %v455 = vpop.f32.mrf.mxu0
      %v456 = vadd.f32 %v327, %v455
      %457 = vmatmul.f32.gmra.mxu0 %v343
      %v458 = vpop.f32.mrf.mxu0
      %v459 = vadd.f32 %v327, %v458
      %460 = vdwg.mxu0
      %461 = vst [vmem:[#allocation2] sm:$0xff] %v363
      %462 = vst [vmem:[#allocation2 + $0x8] sm:$0xff] %v392
      %463 = vst [vmem:[#allocation2 + $0x10] sm:$0xff] %v421
      %464 = vst [vmem:[#allocation2 + $0x18] sm:$0xff] %v450
      %465 = vst [vmem:[#allocation2 + $0x20] sm:$0xff] %v366
      %466 = vst [vmem:[#allocation2 + $0x28] sm:$0xff] %v395
      %467 = vst [vmem:[#allocation2 + $0x30] sm:$0xff] %v424
      %468 = vst [vmem:[#allocation2 + $0x38] sm:$0xff] %v453
      %469 = vst [vmem:[#allocation2 + $0x40] sm:$0xff] %v369
      %470 = vst [vmem:[#allocation2 + $0x48] sm:$0xff] %v398
      %471 = vst [vmem:[#allocation2 + $0x50] sm:$0xff] %v427
      %472 = vst [vmem:[#allocation2 + $0x58] sm:$0xff] %v456
      %473 = vst [vmem:[#allocation2 + $0x60] sm:$0xff] %v372
      %474 = vst [vmem:[#allocation2 + $0x68] sm:$0xff] %v401
      %475 = vst [vmem:[#allocation2 + $0x70] sm:$0xff] %v430
      %476 = vst [vmem:[#allocation2 + $0x78] sm:$0xff] %v459
      %v477 = vld [vmem:[#allocation4] sm:$0xff]
      %v478 = vld [vmem:[#allocation5] sm:$0xff]
      %v479 = vld [vmem:[#allocation2] sm:$0xff]
      %v480 = vld [vmem:[#allocation2 + $0x8] sm:$0xff]
      %v481 = vld [vmem:[#allocation2 + $0x10] sm:$0xff]
      %v482 = vld [vmem:[#allocation2 + $0x18] sm:$0xff]
      %v483 = vld [vmem:[%s3] sm:$0xff]
      %v484 = vld [vmem:[%s3 + $0x8] sm:$0xff]
      %v485 = vld [vmem:[%s3 + $0x10] sm:$0xff]
      %v486 = vld [vmem:[%s3 + $0x18] sm:$0xff]
      %v487 = vld [vmem:[%s3 + $0x20] sm:$0xff]
      %v488 = vld [vmem:[%s3 + $0x28] sm:$0xff]
      %v489 = vld [vmem:[%s3 + $0x30] sm:$0xff]
      %v490 = vld [vmem:[%s3 + $0x38] sm:$0xff]
      %v491 = vld [vmem:[%s3 + $0x40] sm:$0xff]
      %v492 = vld [vmem:[%s3 + $0x48] sm:$0xff]
      %v493 = vld [vmem:[%s3 + $0x50] sm:$0xff]
      %v494 = vld [vmem:[%s3 + $0x58] sm:$0xff]
      %v495 = vld [vmem:[%s3 + $0x60] sm:$0xff]
      %v496 = vld [vmem:[%s3 + $0x68] sm:$0xff]
      %v497 = vld [vmem:[%s3 + $0x70] sm:$0xff]
      %v498 = vld [vmem:[%s3 + $0x78] sm:$0xff]
      %v499 = vld [vmem:[%s3 + $0x80] sm:$0xff]
      %v500 = vld [vmem:[%s3 + $0x88] sm:$0xff]
      %v501 = vld [vmem:[%s3 + $0x90] sm:$0xff]
      %v502 = vld [vmem:[%s3 + $0x98] sm:$0xff]
      %v503 = vld [vmem:[%s3 + $0xa0] sm:$0xff]
      %v504 = vld [vmem:[%s3 + $0xa8] sm:$0xff]
      %v505 = vld [vmem:[%s3 + $0xb0] sm:$0xff]
      %v506 = vld [vmem:[%s3 + $0xb8] sm:$0xff]
      %v507 = vld [vmem:[%s3 + $0xc0] sm:$0xff]
      %v508 = vld [vmem:[%s3 + $0xc8] sm:$0xff]
      %v509 = vld [vmem:[%s3 + $0xd0] sm:$0xff]
      %v510 = vld [vmem:[%s3 + $0xd8] sm:$0xff]
      %v511 = vld [vmem:[%s3 + $0xe0] sm:$0xff]
      %v512 = vld [vmem:[%s3 + $0xe8] sm:$0xff]
      %v513 = vld [vmem:[%s3 + $0xf0] sm:$0xff]
      %v514 = vld [vmem:[%s3 + $0xf8] sm:$0xff]
      %v515 = vld [vmem:[%s3 + $0x100] sm:$0xff]
      %v516 = vld [vmem:[%s3 + $0x108] sm:$0xff]
      %v517 = vld [vmem:[%s3 + $0x110] sm:$0xff]
      %v518 = vld [vmem:[%s3 + $0x118] sm:$0xff]
      %v519 = vld [vmem:[%s3 + $0x120] sm:$0xff]
      %v520 = vld [vmem:[%s3 + $0x128] sm:$0xff]
      %v521 = vld [vmem:[%s3 + $0x130] sm:$0xff]
      %v522 = vld [vmem:[%s3 + $0x138] sm:$0xff]
      %v523 = vld [vmem:[%s3 + $0x140] sm:$0xff]
      %v524 = vld [vmem:[%s3 + $0x148] sm:$0xff]
      %v525 = vld [vmem:[%s3 + $0x150] sm:$0xff]
      %v526 = vld [vmem:[%s3 + $0x158] sm:$0xff]
      %v527 = vld [vmem:[%s3 + $0x160] sm:$0xff]
      %v528 = vld [vmem:[%s3 + $0x168] sm:$0xff]
      %v529 = vld [vmem:[%s3 + $0x170] sm:$0xff]
      %v530 = vld [vmem:[%s3 + $0x178] sm:$0xff]
      %v531 = vld [vmem:[%s3 + $0x180] sm:$0xff]
      %v532 = vld [vmem:[%s3 + $0x188] sm:$0xff]
      %v533 = vld [vmem:[%s3 + $0x190] sm:$0xff]
      %v534 = vld [vmem:[%s3 + $0x198] sm:$0xff]
      %v535 = vld [vmem:[%s3 + $0x1a0] sm:$0xff]
      %v536 = vld [vmem:[%s3 + $0x1a8] sm:$0xff]
      %v537 = vld [vmem:[%s3 + $0x1b0] sm:$0xff]
      %v538 = vld [vmem:[%s3 + $0x1b8] sm:$0xff]
      %v539 = vld [vmem:[%s3 + $0x1c0] sm:$0xff]
      %v540 = vld [vmem:[%s3 + $0x1c8] sm:$0xff]
      %v541 = vld [vmem:[%s3 + $0x1d0] sm:$0xff]
      %v542 = vld [vmem:[%s3 + $0x1d8] sm:$0xff]
      %v543 = vld [vmem:[%s3 + $0x1e0] sm:$0xff]
      %v544 = vld [vmem:[%s3 + $0x1e8] sm:$0xff]
      %v545 = vld [vmem:[%s3 + $0x1f0] sm:$0xff]
      %v546 = vld [vmem:[%s3 + $0x1f8] sm:$0xff]
      %547 = vmatpush.msra.mxu0 %v543
      %548 = vmatpush.msra.mxu0 %v539
      %549 = vmatpush.msra.mxu0 %v535
      %550 = vmatpush.msra.mxu0 %v531
      %551 = vmatpush.msra.mxu0 %v527
      %552 = vmatpush.msra.mxu0 %v523
      %553 = vmatpush.msra.mxu0 %v519
      %554 = vmatpush.msra.mxu0 %v515
      %555 = vmatpush.msra.mxu0 %v511
      %556 = vmatpush.msra.mxu0 %v507
      %557 = vmatpush.msra.mxu0 %v503
      %558 = vmatpush.msra.mxu0 %v499
      %559 = vmatpush.msra.mxu0 %v495
      %560 = vmatpush.msra.mxu0 %v491
      %561 = vmatpush.msra.mxu0 %v487
      %562 = vmatpush.msra.mxu0 %v483
      %563 = vmatmul.f32.gmra.mxu0 %v477
      %v564 = vpop.f32.mrf.mxu0
      %v565 = vadd.f32 0.0, %v564
      %566 = vdwg.mxu0
      %567 = vmatpush.msra.mxu0 %v544
      %568 = vmatpush.msra.mxu0 %v540
      %569 = vmatpush.msra.mxu0 %v536
      %570 = vmatpush.msra.mxu0 %v532
      %571 = vmatpush.msra.mxu0 %v528
      %572 = vmatpush.msra.mxu0 %v524
      %573 = vmatpush.msra.mxu0 %v520
      %574 = vmatpush.msra.mxu0 %v516
      %575 = vmatpush.msra.mxu0 %v512
      %576 = vmatpush.msra.mxu0 %v508
      %577 = vmatpush.msra.mxu0 %v504
      %578 = vmatpush.msra.mxu0 %v500
      %579 = vmatpush.msra.mxu0 %v496
      %580 = vmatpush.msra.mxu0 %v492
      %581 = vmatpush.msra.mxu0 %v488
      %582 = vmatpush.msra.mxu0 %v484
      %583 = vmatmul.f32.gmra.mxu0 %v477
      %v584 = vpop.f32.mrf.mxu0
      %v585 = vadd.f32 0.0, %v584
      %586 = vdwg.mxu0
      %587 = vmatpush.msra.mxu0 %v545
      %588 = vmatpush.msra.mxu0 %v541
      %589 = vmatpush.msra.mxu0 %v537
      %590 = vmatpush.msra.mxu0 %v533
      %591 = vmatpush.msra.mxu0 %v529
      %592 = vmatpush.msra.mxu0 %v525
      %593 = vmatpush.msra.mxu0 %v521
      %594 = vmatpush.msra.mxu0 %v517
      %595 = vmatpush.msra.mxu0 %v513
      %596 = vmatpush.msra.mxu0 %v509
      %597 = vmatpush.msra.mxu0 %v505
      %598 = vmatpush.msra.mxu0 %v501
      %599 = vmatpush.msra.mxu0 %v497
      %600 = vmatpush.msra.mxu0 %v493
      %601 = vmatpush.msra.mxu0 %v489
      %602 = vmatpush.msra.mxu0 %v485
      %603 = vmatmul.f32.gmra.mxu0 %v477
      %v604 = vpop.f32.mrf.mxu0
      %v605 = vadd.f32 0.0, %v604
      %606 = vdwg.mxu0
      %607 = vmatpush.msra.mxu0 %v546
      %608 = vmatpush.msra.mxu0 %v542
      %609 = vmatpush.msra.mxu0 %v538
      %610 = vmatpush.msra.mxu0 %v534
      %611 = vmatpush.msra.mxu0 %v530
      %612 = vmatpush.msra.mxu0 %v526
      %613 = vmatpush.msra.mxu0 %v522
      %614 = vmatpush.msra.mxu0 %v518
      %615 = vmatpush.msra.mxu0 %v514
      %616 = vmatpush.msra.mxu0 %v510
      %617 = vmatpush.msra.mxu0 %v506
      %618 = vmatpush.msra.mxu0 %v502
      %619 = vmatpush.msra.mxu0 %v498
      %620 = vmatpush.msra.mxu0 %v494
      %621 = vmatpush.msra.mxu0 %v490
      %622 = vmatpush.msra.mxu0 %v486
      %623 = vmatmul.f32.gmra.mxu0 %v477
      %v624 = vpop.f32.mrf.mxu0
      %v625 = vadd.f32 0.0, %v624
      %626 = vdwg.mxu0
      %v627 = vadd.f32 %v479, %v565
      %v628 = vadd.f32 %v480, %v585
      %v629 = vadd.f32 %v481, %v605
      %v630 = vadd.f32 %v482, %v625
      %v631 = vxor.u32 %v627, 2147483648
      %v632 = vmul.f32 %v631, 1.442695
      %v633 = vpow.pop %v632
      %v634 = vadd.f32 %v633, 1.0
      %v635 = vrcp.pop %v634
      %v636 = vmul.f32 %v634, %v635
      %v637 = vsub.f32 1.0, %v636
      %v638 = vmul.f32 %v635, %v637
      %v639 = vadd.f32 %v635, %v638
      %vm640 = vweird.f32 %v634
      %vm641 = vweird.f32 %v635
      %vm642 = vmor %vm640, %vm641
      %v643 = vsel %vm642, %v635, %v639
      %v644 = vand.u32 2147483647, %v634
      %vm645 = vcmp.eq.f32.partialorder %v644, 8.507059e+37
      %v646 = vand.u32 %v634, 2147483648
      %v647 = vor.u32 1.1754944e-38, %v646
      %v648 = vsel %vm645, %v647, %v643
      %v649 = vmul.f32 1.0, %v648
      %v650 = vxor.u32 %v628, 2147483648
      %v651 = vmul.f32 %v650, 1.442695
      %v652 = vpow.pop %v651
      %v653 = vadd.f32 %v652, 1.0
      %v654 = vrcp.pop %v653
      %v655 = vmul.f32 %v653, %v654
      %v656 = vsub.f32 1.0, %v655
      %v657 = vmul.f32 %v654, %v656
      %v658 = vadd.f32 %v654, %v657
      %vm659 = vweird.f32 %v653
      %vm660 = vweird.f32 %v654
      %vm661 = vmor %vm659, %vm660
      %v662 = vsel %vm661, %v654, %v658
      %v663 = vand.u32 2147483647, %v653
      %vm664 = vcmp.eq.f32.partialorder %v663, 8.507059e+37
      %v665 = vand.u32 %v653, 2147483648
      %v666 = vor.u32 1.1754944e-38, %v665
      %v667 = vsel %vm664, %v666, %v662
      %v668 = vmul.f32 1.0, %v667
      %v669 = vtanh.pop %v629
      %v670 = vxor.u32 %v630, 2147483648
      %v671 = vmul.f32 %v670, 1.442695
      %v672 = vpow.pop %v671
      %v673 = vadd.f32 %v672, 1.0
      %v674 = vrcp.pop %v673
      %v675 = vmul.f32 %v673, %v674
      %v676 = vsub.f32 1.0, %v675
      %v677 = vmul.f32 %v674, %v676
      %v678 = vadd.f32 %v674, %v677
      %vm679 = vweird.f32 %v673
      %vm680 = vweird.f32 %v674
      %vm681 = vmor %vm679, %vm680
      %v682 = vsel %vm681, %v674, %v678
      %v683 = vand.u32 2147483647, %v673
      %vm684 = vcmp.eq.f32.partialorder %v683, 8.507059e+37
      %v685 = vand.u32 %v673, 2147483648
      %v686 = vor.u32 1.1754944e-38, %v685
      %v687 = vsel %vm684, %v686, %v682
      %v688 = vmul.f32 1.0, %v687
      %v689 = vmul.f32 %v668, %v478
      %v690 = vmul.f32 %v649, %v669
      %v691 = vadd.f32 %v689, %v690
      %v692 = vtanh.pop %v691
      %v693 = vmul.f32 %v688, %v692
      %694 = vst [vmem:[#allocation3] sm:$0xff] %v693
      %s695 = scalar_lea.vmem [#allocation2], 32
      %v696 = vld [vmem:[%s695] sm:$0xff]
      %v697 = vld [vmem:[%s695 + $0x8] sm:$0xff]
      %v698 = vld [vmem:[%s695 + $0x10] sm:$0xff]
      %v699 = vld [vmem:[%s695 + $0x18] sm:$0xff]
      %v700 = vld [vmem:[%s3] sm:$0xff]
      %v701 = vld [vmem:[%s3 + $0x8] sm:$0xff]
      %v702 = vld [vmem:[%s3 + $0x10] sm:$0xff]
      %v703 = vld [vmem:[%s3 + $0x18] sm:$0xff]
      %v704 = vld [vmem:[%s3 + $0x20] sm:$0xff]
      %v705 = vld [vmem:[%s3 + $0x28] sm:$0xff]
      %v706 = vld [vmem:[%s3 + $0x30] sm:$0xff]
      %v707 = vld [vmem:[%s3 + $0x38] sm:$0xff]
      %v708 = vld [vmem:[%s3 + $0x40] sm:$0xff]
      %v709 = vld [vmem:[%s3 + $0x48] sm:$0xff]
      %v710 = vld [vmem:[%s3 + $0x50] sm:$0xff]
      %v711 = vld [vmem:[%s3 + $0x58] sm:$0xff]
      %v712 = vld [vmem:[%s3 + $0x60] sm:$0xff]
      %v713 = vld [vmem:[%s3 + $0x68] sm:$0xff]
      %v714 = vld [vmem:[%s3 + $0x70] sm:$0xff]
      %v715 = vld [vmem:[%s3 + $0x78] sm:$0xff]
      %v716 = vld [vmem:[%s3 + $0x80] sm:$0xff]
      %v717 = vld [vmem:[%s3 + $0x88] sm:$0xff]
      %v718 = vld [vmem:[%s3 + $0x90] sm:$0xff]
      %v719 = vld [vmem:[%s3 + $0x98] sm:$0xff]
      %v720 = vld [vmem:[%s3 + $0xa0] sm:$0xff]
      %v721 = vld [vmem:[%s3 + $0xa8] sm:$0xff]
      %v722 = vld [vmem:[%s3 + $0xb0] sm:$0xff]
      %v723 = vld [vmem:[%s3 + $0xb8] sm:$0xff]
      %v724 = vld [vmem:[%s3 + $0xc0] sm:$0xff]
      %v725 = vld [vmem:[%s3 + $0xc8] sm:$0xff]
      %v726 = vld [vmem:[%s3 + $0xd0] sm:$0xff]
      %v727 = vld [vmem:[%s3 + $0xd8] sm:$0xff]
      %v728 = vld [vmem:[%s3 + $0xe0] sm:$0xff]
      %v729 = vld [vmem:[%s3 + $0xe8] sm:$0xff]
      %v730 = vld [vmem:[%s3 + $0xf0] sm:$0xff]
      %v731 = vld [vmem:[%s3 + $0xf8] sm:$0xff]
      %v732 = vld [vmem:[%s3 + $0x100] sm:$0xff]
      %v733 = vld [vmem:[%s3 + $0x108] sm:$0xff]
      %v734 = vld [vmem:[%s3 + $0x110] sm:$0xff]
      %v735 = vld [vmem:[%s3 + $0x118] sm:$0xff]
      %v736 = vld [vmem:[%s3 + $0x120] sm:$0xff]
      %v737 = vld [vmem:[%s3 + $0x128] sm:$0xff]
      %v738 = vld [vmem:[%s3 + $0x130] sm:$0xff]
      %v739 = vld [vmem:[%s3 + $0x138] sm:$0xff]
      %v740 = vld [vmem:[%s3 + $0x140] sm:$0xff]
      %v741 = vld [vmem:[%s3 + $0x148] sm:$0xff]
      %v742 = vld [vmem:[%s3 + $0x150] sm:$0xff]
      %v743 = vld [vmem:[%s3 + $0x158] sm:$0xff]
      %v744 = vld [vmem:[%s3 + $0x160] sm:$0xff]
      %v745 = vld [vmem:[%s3 + $0x168] sm:$0xff]
      %v746 = vld [vmem:[%s3 + $0x170] sm:$0xff]
      %v747 = vld [vmem:[%s3 + $0x178] sm:$0xff]
      %v748 = vld [vmem:[%s3 + $0x180] sm:$0xff]
      %v749 = vld [vmem:[%s3 + $0x188] sm:$0xff]
      %v750 = vld [vmem:[%s3 + $0x190] sm:$0xff]
      %v751 = vld [vmem:[%s3 + $0x198] sm:$0xff]
      %v752 = vld [vmem:[%s3 + $0x1a0] sm:$0xff]
      %v753 = vld [vmem:[%s3 + $0x1a8] sm:$0xff]
      %v754 = vld [vmem:[%s3 + $0x1b0] sm:$0xff]
      %v755 = vld [vmem:[%s3 + $0x1b8] sm:$0xff]
      %v756 = vld [vmem:[%s3 + $0x1c0] sm:$0xff]
      %v757 = vld [vmem:[%s3 + $0x1c8] sm:$0xff]
      %v758 = vld [vmem:[%s3 + $0x1d0] sm:$0xff]
      %v759 = vld [vmem:[%s3 + $0x1d8] sm:$0xff]
      %v760 = vld [vmem:[%s3 + $0x1e0] sm:$0xff]
      %v761 = vld [vmem:[%s3 + $0x1e8] sm:$0xff]
      %v762 = vld [vmem:[%s3 + $0x1f0] sm:$0xff]
      %v763 = vld [vmem:[%s3 + $0x1f8] sm:$0xff]
      %764 = vmatpush.msra.mxu0 %v760
      %765 = vmatpush.msra.mxu0 %v756
      %766 = vmatpush.msra.mxu0 %v752
      %767 = vmatpush.msra.mxu0 %v748
      %768 = vmatpush.msra.mxu0 %v744
      %769 = vmatpush.msra.mxu0 %v740
      %770 = vmatpush.msra.mxu0 %v736
      %771 = vmatpush.msra.mxu0 %v732
      %772 = vmatpush.msra.mxu0 %v728
      %773 = vmatpush.msra.mxu0 %v724
      %774 = vmatpush.msra.mxu0 %v720
      %775 = vmatpush.msra.mxu0 %v716
      %776 = vmatpush.msra.mxu0 %v712
      %777 = vmatpush.msra.mxu0 %v708
      %778 = vmatpush.msra.mxu0 %v704
      %779 = vmatpush.msra.mxu0 %v700
      %780 = vmatmul.f32.gmra.mxu0 %v693
      %v781 = vpop.f32.mrf.mxu0
      %v782 = vadd.f32 0.0, %v781
      %783 = vdwg.mxu0
      %784 = vmatpush.msra.mxu0 %v761
      %785 = vmatpush.msra.mxu0 %v757
      %786 = vmatpush.msra.mxu0 %v753
      %787 = vmatpush.msra.mxu0 %v749
      %788 = vmatpush.msra.mxu0 %v745
      %789 = vmatpush.msra.mxu0 %v741
      %790 = vmatpush.msra.mxu0 %v737
      %791 = vmatpush.msra.mxu0 %v733
      %792 = vmatpush.msra.mxu0 %v729
      %793 = vmatpush.msra.mxu0 %v725
      %794 = vmatpush.msra.mxu0 %v721
      %795 = vmatpush.msra.mxu0 %v717
      %796 = vmatpush.msra.mxu0 %v713
      %797 = vmatpush.msra.mxu0 %v709
      %798 = vmatpush.msra.mxu0 %v705
      %799 = vmatpush.msra.mxu0 %v701
      %800 = vmatmul.f32.gmra.mxu0 %v693
      %v801 = vpop.f32.mrf.mxu0
      %v802 = vadd.f32 0.0, %v801
      %803 = vdwg.mxu0
      %804 = vmatpush.msra.mxu0 %v762
      %805 = vmatpush.msra.mxu0 %v758
      %806 = vmatpush.msra.mxu0 %v754
      %807 = vmatpush.msra.mxu0 %v750
      %808 = vmatpush.msra.mxu0 %v746
      %809 = vmatpush.msra.mxu0 %v742
      %810 = vmatpush.msra.mxu0 %v738
      %811 = vmatpush.msra.mxu0 %v734
      %812 = vmatpush.msra.mxu0 %v730
      %813 = vmatpush.msra.mxu0 %v726
      %814 = vmatpush.msra.mxu0 %v722
      %815 = vmatpush.msra.mxu0 %v718
      %816 = vmatpush.msra.mxu0 %v714
      %817 = vmatpush.msra.mxu0 %v710
      %818 = vmatpush.msra.mxu0 %v706
      %819 = vmatpush.msra.mxu0 %v702
      %820 = vmatmul.f32.gmra.mxu0 %v693
      %v821 = vpop.f32.mrf.mxu0
      %v822 = vadd.f32 0.0, %v821
      %823 = vdwg.mxu0
      %824 = vmatpush.msra.mxu0 %v763
      %825 = vmatpush.msra.mxu0 %v759
      %826 = vmatpush.msra.mxu0 %v755
      %827 = vmatpush.msra.mxu0 %v751
      %828 = vmatpush.msra.mxu0 %v747
      %829 = vmatpush.msra.mxu0 %v743
      %830 = vmatpush.msra.mxu0 %v739
      %831 = vmatpush.msra.mxu0 %v735
      %832 = vmatpush.msra.mxu0 %v731
      %833 = vmatpush.msra.mxu0 %v727
      %834 = vmatpush.msra.mxu0 %v723
      %835 = vmatpush.msra.mxu0 %v719
      %836 = vmatpush.msra.mxu0 %v715
      %837 = vmatpush.msra.mxu0 %v711
      %838 = vmatpush.msra.mxu0 %v707
      %839 = vmatpush.msra.mxu0 %v703
      %840 = vmatmul.f32.gmra.mxu0 %v693
      %v841 = vpop.f32.mrf.mxu0
      %v842 = vadd.f32 0.0, %v841
      %843 = vdwg.mxu0
      %v844 = vadd.f32 %v696, %v782
      %v845 = vadd.f32 %v697, %v802
      %v846 = vadd.f32 %v698, %v822
      %v847 = vadd.f32 %v699, %v842
      %v848 = vxor.u32 %v844, 2147483648
      %v849 = vmul.f32 %v848, 1.442695
      %v850 = vpow.pop %v849
      %v851 = vadd.f32 %v850, 1.0
      %v852 = vrcp.pop %v851
      %v853 = vmul.f32 %v851, %v852
      %v854 = vsub.f32 1.0, %v853
      %v855 = vmul.f32 %v852, %v854
      %v856 = vadd.f32 %v852, %v855
      %vm857 = vweird.f32 %v851
      %vm858 = vweird.f32 %v852
      %vm859 = vmor %vm857, %vm858
      %v860 = vsel %vm859, %v852, %v856
      %v861 = vand.u32 2147483647, %v851
      %vm862 = vcmp.eq.f32.partialorder %v861, 8.507059e+37
      %v863 = vand.u32 %v851, 2147483648
      %v864 = vor.u32 1.1754944e-38, %v863
      %v865 = vsel %vm862, %v864, %v860
      %v866 = vmul.f32 1.0, %v865
      %v867 = vxor.u32 %v845, 2147483648
      %v868 = vmul.f32 %v867, 1.442695
      %v869 = vpow.pop %v868
      %v870 = vadd.f32 %v869, 1.0
      %v871 = vrcp.pop %v870
      %v872 = vmul.f32 %v870, %v871
      %v873 = vsub.f32 1.0, %v872
      %v874 = vmul.f32 %v871, %v873
      %v875 = vadd.f32 %v871, %v874
      %vm876 = vweird.f32 %v870
      %vm877 = vweird.f32 %v871
      %vm878 = vmor %vm876, %vm877
      %v879 = vsel %vm878, %v871, %v875
      %v880 = vand.u32 2147483647, %v870
      %vm881 = vcmp.eq.f32.partialorder %v880, 8.507059e+37
      %v882 = vand.u32 %v870, 2147483648
      %v883 = vor.u32 1.1754944e-38, %v882
      %v884 = vsel %vm881, %v883, %v879
      %v885 = vmul.f32 1.0, %v884
      %v886 = vtanh.pop %v846
      %v887 = vxor.u32 %v847, 2147483648
      %v888 = vmul.f32 %v887, 1.442695
      %v889 = vpow.pop %v888
      %v890 = vadd.f32 %v889, 1.0
      %v891 = vrcp.pop %v890
      %v892 = vmul.f32 %v890, %v891
      %v893 = vsub.f32 1.0, %v892
      %v894 = vmul.f32 %v891, %v893
      %v895 = vadd.f32 %v891, %v894
      %vm896 = vweird.f32 %v890
      %vm897 = vweird.f32 %v891
      %vm898 = vmor %vm896, %vm897
      %v899 = vsel %vm898, %v891, %v895
      %v900 = vand.u32 2147483647, %v890
      %vm901 = vcmp.eq.f32.partialorder %v900, 8.507059e+37
      %v902 = vand.u32 %v890, 2147483648
      %v903 = vor.u32 1.1754944e-38, %v902
      %v904 = vsel %vm901, %v903, %v899
      %v905 = vmul.f32 1.0, %v904
      %v906 = vmul.f32 %v885, %v691
      %v907 = vmul.f32 %v866, %v886
      %v908 = vadd.f32 %v906, %v907
      %v909 = vtanh.pop %v908
      %v910 = vmul.f32 %v905, %v909
      %s911 = scalar_lea.vmem [#allocation3], 8
      %912 = vst [vmem:[%s911] sm:$0xff] %v910
      %s913 = scalar_lea.vmem [#allocation2], 64
      %v914 = vld [vmem:[%s913] sm:$0xff]
      %v915 = vld [vmem:[%s913 + $0x8] sm:$0xff]
      %v916 = vld [vmem:[%s913 + $0x10] sm:$0xff]
      %v917 = vld [vmem:[%s913 + $0x18] sm:$0xff]
      %v918 = vld [vmem:[%s3] sm:$0xff]
      %v919 = vld [vmem:[%s3 + $0x8] sm:$0xff]
      %v920 = vld [vmem:[%s3 + $0x10] sm:$0xff]
      %v921 = vld [vmem:[%s3 + $0x18] sm:$0xff]
      %v922 = vld [vmem:[%s3 + $0x20] sm:$0xff]
      %v923 = vld [vmem:[%s3 + $0x28] sm:$0xff]
      %v924 = vld [vmem:[%s3 + $0x30] sm:$0xff]
      %v925 = vld [vmem:[%s3 + $0x38] sm:$0xff]
      %v926 = vld [vmem:[%s3 + $0x40] sm:$0xff]
      %v927 = vld [vmem:[%s3 + $0x48] sm:$0xff]
      %v928 = vld [vmem:[%s3 + $0x50] sm:$0xff]
      %v929 = vld [vmem:[%s3 + $0x58] sm:$0xff]
      %v930 = vld [vmem:[%s3 + $0x60] sm:$0xff]
      %v931 = vld [vmem:[%s3 + $0x68] sm:$0xff]
      %v932 = vld [vmem:[%s3 + $0x70] sm:$0xff]
      %v933 = vld [vmem:[%s3 + $0x78] sm:$0xff]
      %v934 = vld [vmem:[%s3 + $0x80] sm:$0xff]
      %v935 = vld [vmem:[%s3 + $0x88] sm:$0xff]
      %v936 = vld [vmem:[%s3 + $0x90] sm:$0xff]
      %v937 = vld [vmem:[%s3 + $0x98] sm:$0xff]
      %v938 = vld [vmem:[%s3 + $0xa0] sm:$0xff]
      %v939 = vld [vmem:[%s3 + $0xa8] sm:$0xff]
      %v940 = vld [vmem:[%s3 + $0xb0] sm:$0xff]
      %v941 = vld [vmem:[%s3 + $0xb8] sm:$0xff]
      %v942 = vld [vmem:[%s3 + $0xc0] sm:$0xff]
      %v943 = vld [vmem:[%s3 + $0xc8] sm:$0xff]
      %v944 = vld [vmem:[%s3 + $0xd0] sm:$0xff]
      %v945 = vld [vmem:[%s3 + $0xd8] sm:$0xff]
      %v946 = vld [vmem:[%s3 + $0xe0] sm:$0xff]
      %v947 = vld [vmem:[%s3 + $0xe8] sm:$0xff]
      %v948 = vld [vmem:[%s3 + $0xf0] sm:$0xff]
      %v949 = vld [vmem:[%s3 + $0xf8] sm:$0xff]
      %v950 = vld [vmem:[%s3 + $0x100] sm:$0xff]
      %v951 = vld [vmem:[%s3 + $0x108] sm:$0xff]
      %v952 = vld [vmem:[%s3 + $0x110] sm:$0xff]
      %v953 = vld [vmem:[%s3 + $0x118] sm:$0xff]
      %v954 = vld [vmem:[%s3 + $0x120] sm:$0xff]
      %v955 = vld [vmem:[%s3 + $0x128] sm:$0xff]
      %v956 = vld [vmem:[%s3 + $0x130] sm:$0xff]
      %v957 = vld [vmem:[%s3 + $0x138] sm:$0xff]
      %v958 = vld [vmem:[%s3 + $0x140] sm:$0xff]
      %v959 = vld [vmem:[%s3 + $0x148] sm:$0xff]
      %v960 = vld [vmem:[%s3 + $0x150] sm:$0xff]
      %v961 = vld [vmem:[%s3 + $0x158] sm:$0xff]
      %v962 = vld [vmem:[%s3 + $0x160] sm:$0xff]
      %v963 = vld [vmem:[%s3 + $0x168] sm:$0xff]
      %v964 = vld [vmem:[%s3 + $0x170] sm:$0xff]
      %v965 = vld [vmem:[%s3 + $0x178] sm:$0xff]
      %v966 = vld [vmem:[%s3 + $0x180] sm:$0xff]
      %v967 = vld [vmem:[%s3 + $0x188] sm:$0xff]
      %v968 = vld [vmem:[%s3 + $0x190] sm:$0xff]
      %v969 = vld [vmem:[%s3 + $0x198] sm:$0xff]
      %v970 = vld [vmem:[%s3 + $0x1a0] sm:$0xff]
      %v971 = vld [vmem:[%s3 + $0x1a8] sm:$0xff]
      %v972 = vld [vmem:[%s3 + $0x1b0] sm:$0xff]
      %v973 = vld [vmem:[%s3 + $0x1b8] sm:$0xff]
      %v974 = vld [vmem:[%s3 + $0x1c0] sm:$0xff]
      %v975 = vld [vmem:[%s3 + $0x1c8] sm:$0xff]
      %v976 = vld [vmem:[%s3 + $0x1d0] sm:$0xff]
      %v977 = vld [vmem:[%s3 + $0x1d8] sm:$0xff]
      %v978 = vld [vmem:[%s3 + $0x1e0] sm:$0xff]
      %v979 = vld [vmem:[%s3 + $0x1e8] sm:$0xff]
      %v980 = vld [vmem:[%s3 + $0x1f0] sm:$0xff]
      %v981 = vld [vmem:[%s3 + $0x1f8] sm:$0xff]
      %982 = vmatpush.msra.mxu0 %v978
      %983 = vmatpush.msra.mxu0 %v974
      %984 = vmatpush.msra.mxu0 %v970
      %985 = vmatpush.msra.mxu0 %v966
      %986 = vmatpush.msra.mxu0 %v962
      %987 = vmatpush.msra.mxu0 %v958
      %988 = vmatpush.msra.mxu0 %v954
      %989 = vmatpush.msra.mxu0 %v950
      %990 = vmatpush.msra.mxu0 %v946
      %991 = vmatpush.msra.mxu0 %v942
      %992 = vmatpush.msra.mxu0 %v938
      %993 = vmatpush.msra.mxu0 %v934
      %994 = vmatpush.msra.mxu0 %v930
      %995 = vmatpush.msra.mxu0 %v926
      %996 = vmatpush.msra.mxu0 %v922
      %997 = vmatpush.msra.mxu0 %v918
      %998 = vmatmul.f32.gmra.mxu0 %v910
      %v999 = vpop.f32.mrf.mxu0
      %v1000 = vadd.f32 0.0, %v999
      %1001 = vdwg.mxu0
      %1002 = vmatpush.msra.mxu0 %v979
      %1003 = vmatpush.msra.mxu0 %v975
      %1004 = vmatpush.msra.mxu0 %v971
      %1005 = vmatpush.msra.mxu0 %v967
      %1006 = vmatpush.msra.mxu0 %v963
      %1007 = vmatpush.msra.mxu0 %v959
      %1008 = vmatpush.msra.mxu0 %v955
      %1009 = vmatpush.msra.mxu0 %v951
      %1010 = vmatpush.msra.mxu0 %v947
      %1011 = vmatpush.msra.mxu0 %v943
      %1012 = vmatpush.msra.mxu0 %v939
      %1013 = vmatpush.msra.mxu0 %v935
      %1014 = vmatpush.msra.mxu0 %v931
      %1015 = vmatpush.msra.mxu0 %v927
      %1016 = vmatpush.msra.mxu0 %v923
      %1017 = vmatpush.msra.mxu0 %v919
      %1018 = vmatmul.f32.gmra.mxu0 %v910
      %v1019 = vpop.f32.mrf.mxu0
      %v1020 = vadd.f32 0.0, %v1019
      %1021 = vdwg.mxu0
      %1022 = vmatpush.msra.mxu0 %v980
      %1023 = vmatpush.msra.mxu0 %v976
      %1024 = vmatpush.msra.mxu0 %v972
      %1025 = vmatpush.msra.mxu0 %v968
      %1026 = vmatpush.msra.mxu0 %v964
      %1027 = vmatpush.msra.mxu0 %v960
      %1028 = vmatpush.msra.mxu0 %v956
      %1029 = vmatpush.msra.mxu0 %v952
      %1030 = vmatpush.msra.mxu0 %v948
      %1031 = vmatpush.msra.mxu0 %v944
      %1032 = vmatpush.msra.mxu0 %v940
      %1033 = vmatpush.msra.mxu0 %v936
      %1034 = vmatpush.msra.mxu0 %v932
      %1035 = vmatpush.msra.mxu0 %v928
      %1036 = vmatpush.msra.mxu0 %v924
      %1037 = vmatpush.msra.mxu0 %v920
      %1038 = vmatmul.f32.gmra.mxu0 %v910
      %v1039 = vpop.f32.mrf.mxu0
      %v1040 = vadd.f32 0.0, %v1039
      %1041 = vdwg.mxu0
      %1042 = vmatpush.msra.mxu0 %v981
      %1043 = vmatpush.msra.mxu0 %v977
      %1044 = vmatpush.msra.mxu0 %v973
      %1045 = vmatpush.msra.mxu0 %v969
      %1046 = vmatpush.msra.mxu0 %v965
      %1047 = vmatpush.msra.mxu0 %v961
      %1048 = vmatpush.msra.mxu0 %v957
      %1049 = vmatpush.msra.mxu0 %v953
      %1050 = vmatpush.msra.mxu0 %v949
      %1051 = vmatpush.msra.mxu0 %v945
      %1052 = vmatpush.msra.mxu0 %v941
      %1053 = vmatpush.msra.mxu0 %v937
      %1054 = vmatpush.msra.mxu0 %v933
      %1055 = vmatpush.msra.mxu0 %v929
      %1056 = vmatpush.msra.mxu0 %v925
      %1057 = vmatpush.msra.mxu0 %v921
      %1058 = vmatmul.f32.gmra.mxu0 %v910
      %v1059 = vpop.f32.mrf.mxu0
      %v1060 = vadd.f32 0.0, %v1059
      %1061 = vdwg.mxu0
      %v1062 = vadd.f32 %v914, %v1000
      %v1063 = vadd.f32 %v915, %v1020
      %v1064 = vadd.f32 %v916, %v1040
      %v1065 = vadd.f32 %v917, %v1060
      %v1066 = vxor.u32 %v1062, 2147483648
      %v1067 = vmul.f32 %v1066, 1.442695
      %v1068 = vpow.pop %v1067
      %v1069 = vadd.f32 %v1068, 1.0
      %v1070 = vrcp.pop %v1069
      %v1071 = vmul.f32 %v1069, %v1070
      %v1072 = vsub.f32 1.0, %v1071
      %v1073 = vmul.f32 %v1070, %v1072
      %v1074 = vadd.f32 %v1070, %v1073
      %vm1075 = vweird.f32 %v1069
      %vm1076 = vweird.f32 %v1070
      %vm1077 = vmor %vm1075, %vm1076
      %v1078 = vsel %vm1077, %v1070, %v1074
      %v1079 = vand.u32 2147483647, %v1069
      %vm1080 = vcmp.eq.f32.partialorder %v1079, 8.507059e+37
      %v1081 = vand.u32 %v1069, 2147483648
      %v1082 = vor.u32 1.1754944e-38, %v1081
      %v1083 = vsel %vm1080, %v1082, %v1078
      %v1084 = vmul.f32 1.0, %v1083
      %v1085 = vxor.u32 %v1063, 2147483648
      %v1086 = vmul.f32 %v1085, 1.442695
      %v1087 = vpow.pop %v1086
      %v1088 = vadd.f32 %v1087, 1.0
      %v1089 = vrcp.pop %v1088
      %v1090 = vmul.f32 %v1088, %v1089
      %v1091 = vsub.f32 1.0, %v1090
      %v1092 = vmul.f32 %v1089, %v1091
      %v1093 = vadd.f32 %v1089, %v1092
      %vm1094 = vweird.f32 %v1088
      %vm1095 = vweird.f32 %v1089
      %vm1096 = vmor %vm1094, %vm1095
      %v1097 = vsel %vm1096, %v1089, %v1093
      %v1098 = vand.u32 2147483647, %v1088
      %vm1099 = vcmp.eq.f32.partialorder %v1098, 8.507059e+37
      %v1100 = vand.u32 %v1088, 2147483648
      %v1101 = vor.u32 1.1754944e-38, %v1100
      %v1102 = vsel %vm1099, %v1101, %v1097
      %v1103 = vmul.f32 1.0, %v1102
      %v1104 = vtanh.pop %v1064
      %v1105 = vxor.u32 %v1065, 2147483648
      %v1106 = vmul.f32 %v1105, 1.442695
      %v1107 = vpow.pop %v1106
      %v1108 = vadd.f32 %v1107, 1.0
      %v1109 = vrcp.pop %v1108
      %v1110 = vmul.f32 %v1108, %v1109
      %v1111 = vsub.f32 1.0, %v1110
      %v1112 = vmul.f32 %v1109, %v1111
      %v1113 = vadd.f32 %v1109, %v1112
      %vm1114 = vweird.f32 %v1108
      %vm1115 = vweird.f32 %v1109
      %vm1116 = vmor %vm1114, %vm1115
      %v1117 = vsel %vm1116, %v1109, %v1113
      %v1118 = vand.u32 2147483647, %v1108
      %vm1119 = vcmp.eq.f32.partialorder %v1118, 8.507059e+37
      %v1120 = vand.u32 %v1108, 2147483648
      %v1121 = vor.u32 1.1754944e-38, %v1120
      %v1122 = vsel %vm1119, %v1121, %v1117
      %v1123 = vmul.f32 1.0, %v1122
      %v1124 = vmul.f32 %v1103, %v908
      %v1125 = vmul.f32 %v1084, %v1104
      %v1126 = vadd.f32 %v1124, %v1125
      %v1127 = vtanh.pop %v1126
      %v1128 = vmul.f32 %v1123, %v1127
      %s1129 = scalar_lea.vmem [#allocation3], 16
      %1130 = vst [vmem:[%s1129] sm:$0xff] %v1128
      %s1131 = scalar_lea.vmem [#allocation2], 96
      %v1132 = vld [vmem:[%s1131] sm:$0xff]
      %v1133 = vld [vmem:[%s1131 + $0x8] sm:$0xff]
      %v1134 = vld [vmem:[%s1131 + $0x10] sm:$0xff]
      %v1135 = vld [vmem:[%s1131 + $0x18] sm:$0xff]
      %v1136 = vld [vmem:[%s3] sm:$0xff]
      %v1137 = vld [vmem:[%s3 + $0x8] sm:$0xff]
      %v1138 = vld [vmem:[%s3 + $0x10] sm:$0xff]
      %v1139 = vld [vmem:[%s3 + $0x18] sm:$0xff]
      %v1140 = vld [vmem:[%s3 + $0x20] sm:$0xff]
      %v1141 = vld [vmem:[%s3 + $0x28] sm:$0xff]
      %v1142 = vld [vmem:[%s3 + $0x30] sm:$0xff]
      %v1143 = vld [vmem:[%s3 + $0x38] sm:$0xff]
      %v1144 = vld [vmem:[%s3 + $0x40] sm:$0xff]
      %v1145 = vld [vmem:[%s3 + $0x48] sm:$0xff]
      %v1146 = vld [vmem:[%s3 + $0x50] sm:$0xff]
      %v1147 = vld [vmem:[%s3 + $0x58] sm:$0xff]
      %v1148 = vld [vmem:[%s3 + $0x60] sm:$0xff]
      %v1149 = vld [vmem:[%s3 + $0x68] sm:$0xff]
      %v1150 = vld [vmem:[%s3 + $0x70] sm:$0xff]
      %v1151 = vld [vmem:[%s3 + $0x78] sm:$0xff]
      %v1152 = vld [vmem:[%s3 + $0x80] sm:$0xff]
      %v1153 = vld [vmem:[%s3 + $0x88] sm:$0xff]
      %v1154 = vld [vmem:[%s3 + $0x90] sm:$0xff]
      %v1155 = vld [vmem:[%s3 + $0x98] sm:$0xff]
      %v1156 = vld [vmem:[%s3 + $0xa0] sm:$0xff]
      %v1157 = vld [vmem:[%s3 + $0xa8] sm:$0xff]
      %v1158 = vld [vmem:[%s3 + $0xb0] sm:$0xff]
      %v1159 = vld [vmem:[%s3 + $0xb8] sm:$0xff]
      %v1160 = vld [vmem:[%s3 + $0xc0] sm:$0xff]
      %v1161 = vld [vmem:[%s3 + $0xc8] sm:$0xff]
      %v1162 = vld [vmem:[%s3 + $0xd0] sm:$0xff]
      %v1163 = vld [vmem:[%s3 + $0xd8] sm:$0xff]
      %v1164 = vld [vmem:[%s3 + $0xe0] sm:$0xff]
      %v1165 = vld [vmem:[%s3 + $0xe8] sm:$0xff]
      %v1166 = vld [vmem:[%s3 + $0xf0] sm:$0xff]
      %v1167 = vld [vmem:[%s3 + $0xf8] sm:$0xff]
      %v1168 = vld [vmem:[%s3 + $0x100] sm:$0xff]
      %v1169 = vld [vmem:[%s3 + $0x108] sm:$0xff]
      %v1170 = vld [vmem:[%s3 + $0x110] sm:$0xff]
      %v1171 = vld [vmem:[%s3 + $0x118] sm:$0xff]
      %v1172 = vld [vmem:[%s3 + $0x120] sm:$0xff]
      %v1173 = vld [vmem:[%s3 + $0x128] sm:$0xff]
      %v1174 = vld [vmem:[%s3 + $0x130] sm:$0xff]
      %v1175 = vld [vmem:[%s3 + $0x138] sm:$0xff]
      %v1176 = vld [vmem:[%s3 + $0x140] sm:$0xff]
      %v1177 = vld [vmem:[%s3 + $0x148] sm:$0xff]
      %v1178 = vld [vmem:[%s3 + $0x150] sm:$0xff]
      %v1179 = vld [vmem:[%s3 + $0x158] sm:$0xff]
      %v1180 = vld [vmem:[%s3 + $0x160] sm:$0xff]
      %v1181 = vld [vmem:[%s3 + $0x168] sm:$0xff]
      %v1182 = vld [vmem:[%s3 + $0x170] sm:$0xff]
      %v1183 = vld [vmem:[%s3 + $0x178] sm:$0xff]
      %v1184 = vld [vmem:[%s3 + $0x180] sm:$0xff]
      %v1185 = vld [vmem:[%s3 + $0x188] sm:$0xff]
      %v1186 = vld [vmem:[%s3 + $0x190] sm:$0xff]
      %v1187 = vld [vmem:[%s3 + $0x198] sm:$0xff]
      %v1188 = vld [vmem:[%s3 + $0x1a0] sm:$0xff]
      %v1189 = vld [vmem:[%s3 + $0x1a8] sm:$0xff]
      %v1190 = vld [vmem:[%s3 + $0x1b0] sm:$0xff]
      %v1191 = vld [vmem:[%s3 + $0x1b8] sm:$0xff]
      %v1192 = vld [vmem:[%s3 + $0x1c0] sm:$0xff]
      %v1193 = vld [vmem:[%s3 + $0x1c8] sm:$0xff]
      %v1194 = vld [vmem:[%s3 + $0x1d0] sm:$0xff]
      %v1195 = vld [vmem:[%s3 + $0x1d8] sm:$0xff]
      %v1196 = vld [vmem:[%s3 + $0x1e0] sm:$0xff]
      %v1197 = vld [vmem:[%s3 + $0x1e8] sm:$0xff]
      %v1198 = vld [vmem:[%s3 + $0x1f0] sm:$0xff]
      %v1199 = vld [vmem:[%s3 + $0x1f8] sm:$0xff]
      %1200 = vmatpush.msra.mxu0 %v1196
      %1201 = vmatpush.msra.mxu0 %v1192
      %1202 = vmatpush.msra.mxu0 %v1188
      %1203 = vmatpush.msra.mxu0 %v1184
      %1204 = vmatpush.msra.mxu0 %v1180
      %1205 = vmatpush.msra.mxu0 %v1176
      %1206 = vmatpush.msra.mxu0 %v1172
      %1207 = vmatpush.msra.mxu0 %v1168
      %1208 = vmatpush.msra.mxu0 %v1164
      %1209 = vmatpush.msra.mxu0 %v1160
      %1210 = vmatpush.msra.mxu0 %v1156
      %1211 = vmatpush.msra.mxu0 %v1152
      %1212 = vmatpush.msra.mxu0 %v1148
      %1213 = vmatpush.msra.mxu0 %v1144
      %1214 = vmatpush.msra.mxu0 %v1140
      %1215 = vmatpush.msra.mxu0 %v1136
      %1216 = vmatmul.f32.gmra.mxu0 %v1128
      %v1217 = vpop.f32.mrf.mxu0
      %v1218 = vadd.f32 0.0, %v1217
      %1219 = vdwg.mxu0
      %1220 = vmatpush.msra.mxu0 %v1197
      %1221 = vmatpush.msra.mxu0 %v1193
      %1222 = vmatpush.msra.mxu0 %v1189
      %1223 = vmatpush.msra.mxu0 %v1185
      %1224 = vmatpush.msra.mxu0 %v1181
      %1225 = vmatpush.msra.mxu0 %v1177
      %1226 = vmatpush.msra.mxu0 %v1173
      %1227 = vmatpush.msra.mxu0 %v1169
      %1228 = vmatpush.msra.mxu0 %v1165
      %1229 = vmatpush.msra.mxu0 %v1161
      %1230 = vmatpush.msra.mxu0 %v1157
      %1231 = vmatpush.msra.mxu0 %v1153
      %1232 = vmatpush.msra.mxu0 %v1149
      %1233 = vmatpush.msra.mxu0 %v1145
      %1234 = vmatpush.msra.mxu0 %v1141
      %1235 = vmatpush.msra.mxu0 %v1137
      %1236 = vmatmul.f32.gmra.mxu0 %v1128
      %v1237 = vpop.f32.mrf.mxu0
      %v1238 = vadd.f32 0.0, %v1237
      %1239 = vdwg.mxu0
      %1240 = vmatpush.msra.mxu0 %v1198
      %1241 = vmatpush.msra.mxu0 %v1194
      %1242 = vmatpush.msra.mxu0 %v1190
      %1243 = vmatpush.msra.mxu0 %v1186
      %1244 = vmatpush.msra.mxu0 %v1182
      %1245 = vmatpush.msra.mxu0 %v1178
      %1246 = vmatpush.msra.mxu0 %v1174
      %1247 = vmatpush.msra.mxu0 %v1170
      %1248 = vmatpush.msra.mxu0 %v1166
      %1249 = vmatpush.msra.mxu0 %v1162
      %1250 = vmatpush.msra.mxu0 %v1158
      %1251 = vmatpush.msra.mxu0 %v1154
      %1252 = vmatpush.msra.mxu0 %v1150
      %1253 = vmatpush.msra.mxu0 %v1146
      %1254 = vmatpush.msra.mxu0 %v1142
      %1255 = vmatpush.msra.mxu0 %v1138
      %1256 = vmatmul.f32.gmra.mxu0 %v1128
      %v1257 = vpop.f32.mrf.mxu0
      %v1258 = vadd.f32 0.0, %v1257
      %1259 = vdwg.mxu0
      %1260 = vmatpush.msra.mxu0 %v1199
      %1261 = vmatpush.msra.mxu0 %v1195
      %1262 = vmatpush.msra.mxu0 %v1191
      %1263 = vmatpush.msra.mxu0 %v1187
      %1264 = vmatpush.msra.mxu0 %v1183
      %1265 = vmatpush.msra.mxu0 %v1179
      %1266 = vmatpush.msra.mxu0 %v1175
      %1267 = vmatpush.msra.mxu0 %v1171
      %1268 = vmatpush.msra.mxu0 %v1167
      %1269 = vmatpush.msra.mxu0 %v1163
      %1270 = vmatpush.msra.mxu0 %v1159
      %1271 = vmatpush.msra.mxu0 %v1155
      %1272 = vmatpush.msra.mxu0 %v1151
      %1273 = vmatpush.msra.mxu0 %v1147
      %1274 = vmatpush.msra.mxu0 %v1143
      %1275 = vmatpush.msra.mxu0 %v1139
      %1276 = vmatmul.f32.gmra.mxu0 %v1128
      %v1277 = vpop.f32.mrf.mxu0
      %v1278 = vadd.f32 0.0, %v1277
      %1279 = vdwg.mxu0
      %v1280 = vadd.f32 %v1132, %v1218
      %v1281 = vadd.f32 %v1133, %v1238
      %v1282 = vadd.f32 %v1134, %v1258
      %v1283 = vadd.f32 %v1135, %v1278
      %v1284 = vxor.u32 %v1280, 2147483648
      %v1285 = vmul.f32 %v1284, 1.442695
      %v1286 = vpow.pop %v1285
      %v1287 = vadd.f32 %v1286, 1.0
      %v1288 = vrcp.pop %v1287
      %v1289 = vmul.f32 %v1287, %v1288
      %v1290 = vsub.f32 1.0, %v1289
      %v1291 = vmul.f32 %v1288, %v1290
      %v1292 = vadd.f32 %v1288, %v1291
      %vm1293 = vweird.f32 %v1287
      %vm1294 = vweird.f32 %v1288
      %vm1295 = vmor %vm1293, %vm1294
      %v1296 = vsel %vm1295, %v1288, %v1292
      %v1297 = vand.u32 2147483647, %v1287
      %vm1298 = vcmp.eq.f32.partialorder %v1297, 8.507059e+37
      %v1299 = vand.u32 %v1287, 2147483648
      %v1300 = vor.u32 1.1754944e-38, %v1299
      %v1301 = vsel %vm1298, %v1300, %v1296
      %v1302 = vmul.f32 1.0, %v1301
      %v1303 = vxor.u32 %v1281, 2147483648
      %v1304 = vmul.f32 %v1303, 1.442695
      %v1305 = vpow.pop %v1304
      %v1306 = vadd.f32 %v1305, 1.0
      %v1307 = vrcp.pop %v1306
      %v1308 = vmul.f32 %v1306, %v1307
      %v1309 = vsub.f32 1.0, %v1308
      %v1310 = vmul.f32 %v1307, %v1309
      %v1311 = vadd.f32 %v1307, %v1310
      %vm1312 = vweird.f32 %v1306
      %vm1313 = vweird.f32 %v1307
      %vm1314 = vmor %vm1312, %vm1313
      %v1315 = vsel %vm1314, %v1307, %v1311
      %v1316 = vand.u32 2147483647, %v1306
      %vm1317 = vcmp.eq.f32.partialorder %v1316, 8.507059e+37
      %v1318 = vand.u32 %v1306, 2147483648
      %v1319 = vor.u32 1.1754944e-38, %v1318
      %v1320 = vsel %vm1317, %v1319, %v1315
      %v1321 = vmul.f32 1.0, %v1320
      %v1322 = vtanh.pop %v1282
      %v1323 = vxor.u32 %v1283, 2147483648
      %v1324 = vmul.f32 %v1323, 1.442695
      %v1325 = vpow.pop %v1324
      %v1326 = vadd.f32 %v1325, 1.0
      %v1327 = vrcp.pop %v1326
      %v1328 = vmul.f32 %v1326, %v1327
      %v1329 = vsub.f32 1.0, %v1328
      %v1330 = vmul.f32 %v1327, %v1329
      %v1331 = vadd.f32 %v1327, %v1330
      %vm1332 = vweird.f32 %v1326
      %vm1333 = vweird.f32 %v1327
      %vm1334 = vmor %vm1332, %vm1333
      %v1335 = vsel %vm1334, %v1327, %v1331
      %v1336 = vand.u32 2147483647, %v1326
      %vm1337 = vcmp.eq.f32.partialorder %v1336, 8.507059e+37
      %v1338 = vand.u32 %v1326, 2147483648
      %v1339 = vor.u32 1.1754944e-38, %v1338
      %v1340 = vsel %vm1337, %v1339, %v1335
      %v1341 = vmul.f32 1.0, %v1340
      %v1342 = vmul.f32 %v1321, %v1126
      %v1343 = vmul.f32 %v1302, %v1322
      %v1344 = vadd.f32 %v1342, %v1343
      %v1345 = vtanh.pop %v1344
      %v1346 = vmul.f32 %v1341, %v1345
      %s1347 = scalar_lea.vmem [#allocation3], 24
      %1348 = vst [vmem:[%s1347] sm:$0xff] %v1346
      %1349 = vst [vmem:[#allocation4] sm:$0xff] %v1346
      %1350 = vst [vmem:[#allocation5] sm:$0xff] %v1344
      %v1351 = vld [vmem:[#allocation3] sm:$0xff]
      %v1352 = vld [vmem:[#allocation3 + $0x8] sm:$0xff]
      %v1353 = vld [vmem:[#allocation3 + $0x10] sm:$0xff]
      %v1354 = vld [vmem:[#allocation3 + $0x18] sm:$0xff]
      %v1355 = vld [vmem:[%s2] sm:$0xff]
      %v1356 = vld [vmem:[%s2 + $0x8] sm:$0xff]
      %v1357 = vld [vmem:[%s2 + $0x10] sm:$0xff]
      %v1358 = vld [vmem:[%s2 + $0x18] sm:$0xff]
      %v1359 = vld [vmem:[%s2 + $0x20] sm:$0xff]
      %v1360 = vld [vmem:[%s2 + $0x28] sm:$0xff]
      %v1361 = vld [vmem:[%s2 + $0x30] sm:$0xff]
      %v1362 = vld [vmem:[%s2 + $0x38] sm:$0xff]
      %v1363 = vld [vmem:[%s2 + $0x40] sm:$0xff]
      %v1364 = vld [vmem:[%s2 + $0x48] sm:$0xff]
      %v1365 = vld [vmem:[%s2 + $0x50] sm:$0xff]
      %v1366 = vld [vmem:[%s2 + $0x58] sm:$0xff]
      %v1367 = vld [vmem:[%s2 + $0x60] sm:$0xff]
      %v1368 = vld [vmem:[%s2 + $0x68] sm:$0xff]
      %v1369 = vld [vmem:[%s2 + $0x70] sm:$0xff]
      %v1370 = vld [vmem:[%s2 + $0x78] sm:$0xff]
      %v1371 = vld [vmem:[%s2 + $0x80] sm:$0xff]
      %v1372 = vld [vmem:[%s2 + $0x88] sm:$0xff]
      %v1373 = vld [vmem:[%s2 + $0x90] sm:$0xff]
      %v1374 = vld [vmem:[%s2 + $0x98] sm:$0xff]
      %v1375 = vld [vmem:[%s2 + $0xa0] sm:$0xff]
      %v1376 = vld [vmem:[%s2 + $0xa8] sm:$0xff]
      %v1377 = vld [vmem:[%s2 + $0xb0] sm:$0xff]
      %v1378 = vld [vmem:[%s2 + $0xb8] sm:$0xff]
      %v1379 = vld [vmem:[%s2 + $0xc0] sm:$0xff]
      %v1380 = vld [vmem:[%s2 + $0xc8] sm:$0xff]
      %v1381 = vld [vmem:[%s2 + $0xd0] sm:$0xff]
      %v1382 = vld [vmem:[%s2 + $0xd8] sm:$0xff]
      %v1383 = vld [vmem:[%s2 + $0xe0] sm:$0xff]
      %v1384 = vld [vmem:[%s2 + $0xe8] sm:$0xff]
      %v1385 = vld [vmem:[%s2 + $0xf0] sm:$0xff]
      %v1386 = vld [vmem:[%s2 + $0xf8] sm:$0xff]
      %v1387 = vld [vmem:[%s2 + $0x100] sm:$0xff]
      %v1388 = vld [vmem:[%s2 + $0x108] sm:$0xff]
      %v1389 = vld [vmem:[%s2 + $0x110] sm:$0xff]
      %v1390 = vld [vmem:[%s2 + $0x118] sm:$0xff]
      %v1391 = vld [vmem:[%s2 + $0x120] sm:$0xff]
      %v1392 = vld [vmem:[%s2 + $0x128] sm:$0xff]
      %v1393 = vld [vmem:[%s2 + $0x130] sm:$0xff]
      %v1394 = vld [vmem:[%s2 + $0x138] sm:$0xff]
      %v1395 = vld [vmem:[%s2 + $0x140] sm:$0xff]
      %v1396 = vld [vmem:[%s2 + $0x148] sm:$0xff]
      %v1397 = vld [vmem:[%s2 + $0x150] sm:$0xff]
      %v1398 = vld [vmem:[%s2 + $0x158] sm:$0xff]
      %v1399 = vld [vmem:[%s2 + $0x160] sm:$0xff]
      %v1400 = vld [vmem:[%s2 + $0x168] sm:$0xff]
      %v1401 = vld [vmem:[%s2 + $0x170] sm:$0xff]
      %v1402 = vld [vmem:[%s2 + $0x178] sm:$0xff]
      %v1403 = vld [vmem:[%s2 + $0x180] sm:$0xff]
      %v1404 = vld [vmem:[%s2 + $0x188] sm:$0xff]
      %v1405 = vld [vmem:[%s2 + $0x190] sm:$0xff]
      %v1406 = vld [vmem:[%s2 + $0x198] sm:$0xff]
      %v1407 = vld [vmem:[%s2 + $0x1a0] sm:$0xff]
      %v1408 = vld [vmem:[%s2 + $0x1a8] sm:$0xff]
      %v1409 = vld [vmem:[%s2 + $0x1b0] sm:$0xff]
      %v1410 = vld [vmem:[%s2 + $0x1b8] sm:$0xff]
      %v1411 = vld [vmem:[%s2 + $0x1c0] sm:$0xff]
      %v1412 = vld [vmem:[%s2 + $0x1c8] sm:$0xff]
      %v1413 = vld [vmem:[%s2 + $0x1d0] sm:$0xff]
      %v1414 = vld [vmem:[%s2 + $0x1d8] sm:$0xff]
      %v1415 = vld [vmem:[%s2 + $0x1e0] sm:$0xff]
      %v1416 = vld [vmem:[%s2 + $0x1e8] sm:$0xff]
      %v1417 = vld [vmem:[%s2 + $0x1f0] sm:$0xff]
      %v1418 = vld [vmem:[%s2 + $0x1f8] sm:$0xff]
      %s1419 = scalar_lea.vmem %s4, 4
      %v1420 = vld [vmem:[%s1419] sm:$0xf]
      %v1422 = vperm.slane %v1420, 0
      %v1423 = vperm.slane %v1420, 1
      %v1424 = vperm.slane %v1420, 2
      %v1425 = vperm.slane %v1420, 3
      %1430 = vmatpush.msra.mxu0 %v1415
      %1431 = vmatpush.msra.mxu0 %v1411
      %1432 = vmatpush.msra.mxu0 %v1407
      %1433 = vmatpush.msra.mxu0 %v1403
      %1434 = vmatpush.msra.mxu0 %v1399
      %1435 = vmatpush.msra.mxu0 %v1395
      %1436 = vmatpush.msra.mxu0 %v1391
      %1437 = vmatpush.msra.mxu0 %v1387
      %1438 = vmatpush.msra.mxu0 %v1383
      %1439 = vmatpush.msra.mxu0 %v1379
      %1440 = vmatpush.msra.mxu0 %v1375
      %1441 = vmatpush.msra.mxu0 %v1371
      %1442 = vmatpush.msra.mxu0 %v1367
      %1443 = vmatpush.msra.mxu0 %v1363
      %1444 = vmatpush.msra.mxu0 %v1359
      %1445 = vmatpush.msra.mxu0 %v1355
      %1446 = vmatmul.f32.gmra.mxu0 %v1351
      %v1447 = vpop.f32.mrf.mxu0
      %v1448 = vadd.f32 %v1422, %v1447
      %1449 = vmatmul.f32.gmra.mxu0 %v1352
      %v1450 = vpop.f32.mrf.mxu0
      %v1451 = vadd.f32 %v1422, %v1450
      %1452 = vmatmul.f32.gmra.mxu0 %v1353
      %v1453 = vpop.f32.mrf.mxu0
      %v1454 = vadd.f32 %v1422, %v1453
      %1455 = vmatmul.f32.gmra.mxu0 %v1354
      %v1456 = vpop.f32.mrf.mxu0
      %v1457 = vadd.f32 %v1422, %v1456
      %1458 = vdwg.mxu0
      %1459 = vmatpush.msra.mxu0 %v1416
      %1460 = vmatpush.msra.mxu0 %v1412
      %1461 = vmatpush.msra.mxu0 %v1408
      %1462 = vmatpush.msra.mxu0 %v1404
      %1463 = vmatpush.msra.mxu0 %v1400
      %1464 = vmatpush.msra.mxu0 %v1396
      %1465 = vmatpush.msra.mxu0 %v1392
      %1466 = vmatpush.msra.mxu0 %v1388
      %1467 = vmatpush.msra.mxu0 %v1384
      %1468 = vmatpush.msra.mxu0 %v1380
      %1469 = vmatpush.msra.mxu0 %v1376
      %1470 = vmatpush.msra.mxu0 %v1372
      %1471 = vmatpush.msra.mxu0 %v1368
      %1472 = vmatpush.msra.mxu0 %v1364
      %1473 = vmatpush.msra.mxu0 %v1360
      %1474 = vmatpush.msra.mxu0 %v1356
      %1475 = vmatmul.f32.gmra.mxu0 %v1351
      %v1476 = vpop.f32.mrf.mxu0
      %v1477 = vadd.f32 %v1423, %v1476
      %1478 = vmatmul.f32.gmra.mxu0 %v1352
      %v1479 = vpop.f32.mrf.mxu0
      %v1480 = vadd.f32 %v1423, %v1479
      %1481 = vmatmul.f32.gmra.mxu0 %v1353
      %v1482 = vpop.f32.mrf.mxu0
      %v1483 = vadd.f32 %v1423, %v1482
      %1484 = vmatmul.f32.gmra.mxu0 %v1354
      %v1485 = vpop.f32.mrf.mxu0
      %v1486 = vadd.f32 %v1423, %v1485
      %1487 = vdwg.mxu0
      %1488 = vmatpush.msra.mxu0 %v1417
      %1489 = vmatpush.msra.mxu0 %v1413
      %1490 = vmatpush.msra.mxu0 %v1409
      %1491 = vmatpush.msra.mxu0 %v1405
      %1492 = vmatpush.msra.mxu0 %v1401
      %1493 = vmatpush.msra.mxu0 %v1397
      %1494 = vmatpush.msra.mxu0 %v1393
      %1495 = vmatpush.msra.mxu0 %v1389
      %1496 = vmatpush.msra.mxu0 %v1385
      %1497 = vmatpush.msra.mxu0 %v1381
      %1498 = vmatpush.msra.mxu0 %v1377
      %1499 = vmatpush.msra.mxu0 %v1373
      %1500 = vmatpush.msra.mxu0 %v1369
      %1501 = vmatpush.msra.mxu0 %v1365
      %1502 = vmatpush.msra.mxu0 %v1361
      %1503 = vmatpush.msra.mxu0 %v1357
      %1504 = vmatmul.f32.gmra.mxu0 %v1351
      %v1505 = vpop.f32.mrf.mxu0
      %v1506 = vadd.f32 %v1424, %v1505
      %1507 = vmatmul.f32.gmra.mxu0 %v1352
      %v1508 = vpop.f32.mrf.mxu0
      %v1509 = vadd.f32 %v1424, %v1508
      %1510 = vmatmul.f32.gmra.mxu0 %v1353
      %v1511 = vpop.f32.mrf.mxu0
      %v1512 = vadd.f32 %v1424, %v1511
      %1513 = vmatmul.f32.gmra.mxu0 %v1354
      %v1514 = vpop.f32.mrf.mxu0
      %v1515 = vadd.f32 %v1424, %v1514
      %1516 = vdwg.mxu0
      %1517 = vmatpush.msra.mxu0 %v1418
      %1518 = vmatpush.msra.mxu0 %v1414
      %1519 = vmatpush.msra.mxu0 %v1410
      %1520 = vmatpush.msra.mxu0 %v1406
      %1521 = vmatpush.msra.mxu0 %v1402
      %1522 = vmatpush.msra.mxu0 %v1398
      %1523 = vmatpush.msra.mxu0 %v1394
      %1524 = vmatpush.msra.mxu0 %v1390
      %1525 = vmatpush.msra.mxu0 %v1386
      %1526 = vmatpush.msra.mxu0 %v1382
      %1527 = vmatpush.msra.mxu0 %v1378
      %1528 = vmatpush.msra.mxu0 %v1374
      %1529 = vmatpush.msra.mxu0 %v1370
      %1530 = vmatpush.msra.mxu0 %v1366
      %1531 = vmatpush.msra.mxu0 %v1362
      %1532 = vmatpush.msra.mxu0 %v1358
      %1533 = vmatmul.f32.gmra.mxu0 %v1351
      %v1534 = vpop.f32.mrf.mxu0
      %v1535 = vadd.f32 %v1425, %v1534
      %1536 = vmatmul.f32.gmra.mxu0 %v1352
      %v1537 = vpop.f32.mrf.mxu0
      %v1538 = vadd.f32 %v1425, %v1537
      %1539 = vmatmul.f32.gmra.mxu0 %v1353
      %v1540 = vpop.f32.mrf.mxu0
      %v1541 = vadd.f32 %v1425, %v1540
      %1542 = vmatmul.f32.gmra.mxu0 %v1354
      %v1543 = vpop.f32.mrf.mxu0
      %v1544 = vadd.f32 %v1425, %v1543
      %1545 = vdwg.mxu0
      %1546 = vst [vmem:[#allocation2] sm:$0xff] %v1448
      %1547 = vst [vmem:[#allocation2 + $0x8] sm:$0xff] %v1477
      %1548 = vst [vmem:[#allocation2 + $0x10] sm:$0xff] %v1506
      %1549 = vst [vmem:[#allocation2 + $0x18] sm:$0xff] %v1535
      %1550 = vst [vmem:[#allocation2 + $0x20] sm:$0xff] %v1451
      %1551 = vst [vmem:[#allocation2 + $0x28] sm:$0xff] %v1480
      %1552 = vst [vmem:[#allocation2 + $0x30] sm:$0xff] %v1509
      %1553 = vst [vmem:[#allocation2 + $0x38] sm:$0xff] %v1538
      %1554 = vst [vmem:[#allocation2 + $0x40] sm:$0xff] %v1454
      %1555 = vst [vmem:[#allocation2 + $0x48] sm:$0xff] %v1483
      %1556 = vst [vmem:[#allocation2 + $0x50] sm:$0xff] %v1512
      %1557 = vst [vmem:[#allocation2 + $0x58] sm:$0xff] %v1541
      %1558 = vst [vmem:[#allocation2 + $0x60] sm:$0xff] %v1457
      %1559 = vst [vmem:[#allocation2 + $0x68] sm:$0xff] %v1486
      %1560 = vst [vmem:[#allocation2 + $0x70] sm:$0xff] %v1515
      %1561 = vst [vmem:[#allocation2 + $0x78] sm:$0xff] %v1544
      %s1562 = scalar_lea.vmem [#allocation4], 8
      %v1563 = vld [vmem:[%s1562] sm:$0xff]
      %s1564 = scalar_lea.vmem [#allocation5], 8
      %v1565 = vld [vmem:[%s1564] sm:$0xff]
      %v1566 = vld [vmem:[#allocation2] sm:$0xff]
      %v1567 = vld [vmem:[#allocation2 + $0x8] sm:$0xff]
      %v1568 = vld [vmem:[#allocation2 + $0x10] sm:$0xff]
      %v1569 = vld [vmem:[#allocation2 + $0x18] sm:$0xff]
      %s1570 = scalar_lea.vmem %s3, 512
      %v1571 = vld [vmem:[%s1570] sm:$0xff]
      %v1572 = vld [vmem:[%s1570 + $0x8] sm:$0xff]
      %v1573 = vld [vmem:[%s1570 + $0x10] sm:$0xff]
      %v1574 = vld [vmem:[%s1570 + $0x18] sm:$0xff]
      %v1575 = vld [vmem:[%s1570 + $0x20] sm:$0xff]
      %v1576 = vld [vmem:[%s1570 + $0x28] sm:$0xff]
      %v1577 = vld [vmem:[%s1570 + $0x30] sm:$0xff]
      %v1578 = vld [vmem:[%s1570 + $0x38] sm:$0xff]
      %v1579 = vld [vmem:[%s1570 + $0x40] sm:$0xff]
      %v1580 = vld [vmem:[%s1570 + $0x48] sm:$0xff]
      %v1581 = vld [vmem:[%s1570 + $0x50] sm:$0xff]
      %v1582 = vld [vmem:[%s1570 + $0x58] sm:$0xff]
      %v1583 = vld [vmem:[%s1570 + $0x60] sm:$0xff]
      %v1584 = vld [vmem:[%s1570 + $0x68] sm:$0xff]
      %v1585 = vld [vmem:[%s1570 + $0x70] sm:$0xff]
      %v1586 = vld [vmem:[%s1570 + $0x78] sm:$0xff]
      %v1587 = vld [vmem:[%s1570 + $0x80] sm:$0xff]
      %v1588 = vld [vmem:[%s1570 + $0x88] sm:$0xff]
      %v1589 = vld [vmem:[%s1570 + $0x90] sm:$0xff]
      %v1590 = vld [vmem:[%s1570 + $0x98] sm:$0xff]
      %v1591 = vld [vmem:[%s1570 + $0xa0] sm:$0xff]
      %v1592 = vld [vmem:[%s1570 + $0xa8] sm:$0xff]
      %v1593 = vld [vmem:[%s1570 + $0xb0] sm:$0xff]
      %v1594 = vld [vmem:[%s1570 + $0xb8] sm:$0xff]
      %v1595 = vld [vmem:[%s1570 + $0xc0] sm:$0xff]
      %v1596 = vld [vmem:[%s1570 + $0xc8] sm:$0xff]
      %v1597 = vld [vmem:[%s1570 + $0xd0] sm:$0xff]
      %v1598 = vld [vmem:[%s1570 + $0xd8] sm:$0xff]
      %v1599 = vld [vmem:[%s1570 + $0xe0] sm:$0xff]
      %v1600 = vld [vmem:[%s1570 + $0xe8] sm:$0xff]
      %v1601 = vld [vmem:[%s1570 + $0xf0] sm:$0xff]
      %v1602 = vld [vmem:[%s1570 + $0xf8] sm:$0xff]
      %v1603 = vld [vmem:[%s1570 + $0x100] sm:$0xff]
      %v1604 = vld [vmem:[%s1570 + $0x108] sm:$0xff]
      %v1605 = vld [vmem:[%s1570 + $0x110] sm:$0xff]
      %v1606 = vld [vmem:[%s1570 + $0x118] sm:$0xff]
      %v1607 = vld [vmem:[%s1570 + $0x120] sm:$0xff]
      %v1608 = vld [vmem:[%s1570 + $0x128] sm:$0xff]
      %v1609 = vld [vmem:[%s1570 + $0x130] sm:$0xff]
      %v1610 = vld [vmem:[%s1570 + $0x138] sm:$0xff]
      %v1611 = vld [vmem:[%s1570 + $0x140] sm:$0xff]
      %v1612 = vld [vmem:[%s1570 + $0x148] sm:$0xff]
      %v1613 = vld [vmem:[%s1570 + $0x150] sm:$0xff]
      %v1614 = vld [vmem:[%s1570 + $0x158] sm:$0xff]
      %v1615 = vld [vmem:[%s1570 + $0x160] sm:$0xff]
      %v1616 = vld [vmem:[%s1570 + $0x168] sm:$0xff]
      %v1617 = vld [vmem:[%s1570 + $0x170] sm:$0xff]
      %v1618 = vld [vmem:[%s1570 + $0x178] sm:$0xff]
      %v1619 = vld [vmem:[%s1570 + $0x180] sm:$0xff]
      %v1620 = vld [vmem:[%s1570 + $0x188] sm:$0xff]
      %v1621 = vld [vmem:[%s1570 + $0x190] sm:$0xff]
      %v1622 = vld [vmem:[%s1570 + $0x198] sm:$0xff]
      %v1623 = vld [vmem:[%s1570 + $0x1a0] sm:$0xff]
      %v1624 = vld [vmem:[%s1570 + $0x1a8] sm:$0xff]
      %v1625 = vld [vmem:[%s1570 + $0x1b0] sm:$0xff]
      %v1626 = vld [vmem:[%s1570 + $0x1b8] sm:$0xff]
      %v1627 = vld [vmem:[%s1570 + $0x1c0] sm:$0xff]
      %v1628 = vld [vmem:[%s1570 + $0x1c8] sm:$0xff]
      %v1629 = vld [vmem:[%s1570 + $0x1d0] sm:$0xff]
      %v1630 = vld [vmem:[%s1570 + $0x1d8] sm:$0xff]
      %v1631 = vld [vmem:[%s1570 + $0x1e0] sm:$0xff]
      %v1632 = vld [vmem:[%s1570 + $0x1e8] sm:$0xff]
      %v1633 = vld [vmem:[%s1570 + $0x1f0] sm:$0xff]
      %v1634 = vld [vmem:[%s1570 + $0x1f8] sm:$0xff]
      %1635 = vmatpush.msra.mxu0 %v1631
      %1636 = vmatpush.msra.mxu0 %v1627
      %1637 = vmatpush.msra.mxu0 %v1623
      %1638 = vmatpush.msra.mxu0 %v1619
      %1639 = vmatpush.msra.mxu0 %v1615
      %1640 = vmatpush.msra.mxu0 %v1611
      %1641 = vmatpush.msra.mxu0 %v1607
      %1642 = vmatpush.msra.mxu0 %v1603
      %1643 = vmatpush.msra.mxu0 %v1599
      %1644 = vmatpush.msra.mxu0 %v1595
      %1645 = vmatpush.msra.mxu0 %v1591
      %1646 = vmatpush.msra.mxu0 %v1587
      %1647 = vmatpush.msra.mxu0 %v1583
      %1648 = vmatpush.msra.mxu0 %v1579
      %1649 = vmatpush.msra.mxu0 %v1575
      %1650 = vmatpush.msra.mxu0 %v1571
      %1651 = vmatmul.f32.gmra.mxu0 %v1563
      %v1652 = vpop.f32.mrf.mxu0
      %v1653 = vadd.f32 0.0, %v1652
      %1654 = vdwg.mxu0
      %1655 = vmatpush.msra.mxu0 %v1632
      %1656 = vmatpush.msra.mxu0 %v1628
      %1657 = vmatpush.msra.mxu0 %v1624
      %1658 = vmatpush.msra.mxu0 %v1620
      %1659 = vmatpush.msra.mxu0 %v1616
      %1660 = vmatpush.msra.mxu0 %v1612
      %1661 = vmatpush.msra.mxu0 %v1608
      %1662 = vmatpush.msra.mxu0 %v1604
      %1663 = vmatpush.msra.mxu0 %v1600
      %1664 = vmatpush.msra.mxu0 %v1596
      %1665 = vmatpush.msra.mxu0 %v1592
      %1666 = vmatpush.msra.mxu0 %v1588
      %1667 = vmatpush.msra.mxu0 %v1584
      %1668 = vmatpush.msra.mxu0 %v1580
      %1669 = vmatpush.msra.mxu0 %v1576
      %1670 = vmatpush.msra.mxu0 %v1572
      %1671 = vmatmul.f32.gmra.mxu0 %v1563
      %v1672 = vpop.f32.mrf.mxu0
      %v1673 = vadd.f32 0.0, %v1672
      %1674 = vdwg.mxu0
      %1675 = vmatpush.msra.mxu0 %v1633
      %1676 = vmatpush.msra.mxu0 %v1629
      %1677 = vmatpush.msra.mxu0 %v1625
      %1678 = vmatpush.msra.mxu0 %v1621
      %1679 = vmatpush.msra.mxu0 %v1617
      %1680 = vmatpush.msra.mxu0 %v1613
      %1681 = vmatpush.msra.mxu0 %v1609
      %1682 = vmatpush.msra.mxu0 %v1605
      %1683 = vmatpush.msra.mxu0 %v1601
      %1684 = vmatpush.msra.mxu0 %v1597
      %1685 = vmatpush.msra.mxu0 %v1593
      %1686 = vmatpush.msra.mxu0 %v1589
      %1687 = vmatpush.msra.mxu0 %v1585
      %1688 = vmatpush.msra.mxu0 %v1581
      %1689 = vmatpush.msra.mxu0 %v1577
      %1690 = vmatpush.msra.mxu0 %v1573
      %1691 = vmatmul.f32.gmra.mxu0 %v1563
      %v1692 = vpop.f32.mrf.mxu0
      %v1693 = vadd.f32 0.0, %v1692
      %1694 = vdwg.mxu0
      %1695 = vmatpush.msra.mxu0 %v1634
      %1696 = vmatpush.msra.mxu0 %v1630
      %1697 = vmatpush.msra.mxu0 %v1626
      %1698 = vmatpush.msra.mxu0 %v1622
      %1699 = vmatpush.msra.mxu0 %v1618
      %1700 = vmatpush.msra.mxu0 %v1614
      %1701 = vmatpush.msra.mxu0 %v1610
      %1702 = vmatpush.msra.mxu0 %v1606
      %1703 = vmatpush.msra.mxu0 %v1602
      %1704 = vmatpush.msra.mxu0 %v1598
      %1705 = vmatpush.msra.mxu0 %v1594
      %1706 = vmatpush.msra.mxu0 %v1590
      %1707 = vmatpush.msra.mxu0 %v1586
      %1708 = vmatpush.msra.mxu0 %v1582
      %1709 = vmatpush.msra.mxu0 %v1578
      %1710 = vmatpush.msra.mxu0 %v1574
      %1711 = vmatmul.f32.gmra.mxu0 %v1563
      %v1712 = vpop.f32.mrf.mxu0
      %v1713 = vadd.f32 0.0, %v1712
      %1714 = vdwg.mxu0
      %v1715 = vadd.f32 %v1566, %v1653
      %v1716 = vadd.f32 %v1567, %v1673
      %v1717 = vadd.f32 %v1568, %v1693
      %v1718 = vadd.f32 %v1569, %v1713
      %v1719 = vxor.u32 %v1715, 2147483648
      %v1720 = vmul.f32 %v1719, 1.442695
      %v1721 = vpow.pop %v1720
      %v1722 = vadd.f32 %v1721, 1.0
      %v1723 = vrcp.pop %v1722
      %v1724 = vmul.f32 %v1722, %v1723
      %v1725 = vsub.f32 1.0, %v1724
      %v1726 = vmul.f32 %v1723, %v1725
      %v1727 = vadd.f32 %v1723, %v1726
      %vm1728 = vweird.f32 %v1722
      %vm1729 = vweird.f32 %v1723
      %vm1730 = vmor %vm1728, %vm1729
      %v1731 = vsel %vm1730, %v1723, %v1727
      %v1732 = vand.u32 2147483647, %v1722
      %vm1733 = vcmp.eq.f32.partialorder %v1732, 8.507059e+37
      %v1734 = vand.u32 %v1722, 2147483648
      %v1735 = vor.u32 1.1754944e-38, %v1734
      %v1736 = vsel %vm1733, %v1735, %v1731
      %v1737 = vmul.f32 1.0, %v1736
      %v1738 = vxor.u32 %v1716, 2147483648
      %v1739 = vmul.f32 %v1738, 1.442695
      %v1740 = vpow.pop %v1739
      %v1741 = vadd.f32 %v1740, 1.0
      %v1742 = vrcp.pop %v1741
      %v1743 = vmul.f32 %v1741, %v1742
      %v1744 = vsub.f32 1.0, %v1743
      %v1745 = vmul.f32 %v1742, %v1744
      %v1746 = vadd.f32 %v1742, %v1745
      %vm1747 = vweird.f32 %v1741
      %vm1748 = vweird.f32 %v1742
      %vm1749 = vmor %vm1747, %vm1748
      %v1750 = vsel %vm1749, %v1742, %v1746
      %v1751 = vand.u32 2147483647, %v1741
      %vm1752 = vcmp.eq.f32.partialorder %v1751, 8.507059e+37
      %v1753 = vand.u32 %v1741, 2147483648
      %v1754 = vor.u32 1.1754944e-38, %v1753
      %v1755 = vsel %vm1752, %v1754, %v1750
      %v1756 = vmul.f32 1.0, %v1755
      %v1757 = vtanh.pop %v1717
      %v1758 = vxor.u32 %v1718, 2147483648
      %v1759 = vmul.f32 %v1758, 1.442695
      %v1760 = vpow.pop %v1759
      %v1761 = vadd.f32 %v1760, 1.0
      %v1762 = vrcp.pop %v1761
      %v1763 = vmul.f32 %v1761, %v1762
      %v1764 = vsub.f32 1.0, %v1763
      %v1765 = vmul.f32 %v1762, %v1764
      %v1766 = vadd.f32 %v1762, %v1765
      %vm1767 = vweird.f32 %v1761
      %vm1768 = vweird.f32 %v1762
      %vm1769 = vmor %vm1767, %vm1768
      %v1770 = vsel %vm1769, %v1762, %v1766
      %v1771 = vand.u32 2147483647, %v1761
      %vm1772 = vcmp.eq.f32.partialorder %v1771, 8.507059e+37
      %v1773 = vand.u32 %v1761, 2147483648
      %v1774 = vor.u32 1.1754944e-38, %v1773
      %v1775 = vsel %vm1772, %v1774, %v1770
      %v1776 = vmul.f32 1.0, %v1775
      %v1777 = vmul.f32 %v1756, %v1565
      %v1778 = vmul.f32 %v1737, %v1757
      %v1779 = vadd.f32 %v1777, %v1778
      %v1780 = vtanh.pop %v1779
      %v1781 = vmul.f32 %v1776, %v1780
      %v1782 = vld [vmem:[%s695] sm:$0xff]
      %v1783 = vld [vmem:[%s695 + $0x8] sm:$0xff]
      %v1784 = vld [vmem:[%s695 + $0x10] sm:$0xff]
      %v1785 = vld [vmem:[%s695 + $0x18] sm:$0xff]
      %1786 = vmatpush.msra.mxu0 %v1631
      %1787 = vmatpush.msra.mxu0 %v1627
      %1788 = vmatpush.msra.mxu0 %v1623
      %1789 = vmatpush.msra.mxu0 %v1619
      %1790 = vmatpush.msra.mxu0 %v1615
      %1791 = vmatpush.msra.mxu0 %v1611
      %1792 = vmatpush.msra.mxu0 %v1607
      %1793 = vmatpush.msra.mxu0 %v1603
      %1794 = vmatpush.msra.mxu0 %v1599
      %1795 = vmatpush.msra.mxu0 %v1595
      %1796 = vmatpush.msra.mxu0 %v1591
      %1797 = vmatpush.msra.mxu0 %v1587
      %1798 = vmatpush.msra.mxu0 %v1583
      %1799 = vmatpush.msra.mxu0 %v1579
      %1800 = vmatpush.msra.mxu0 %v1575
      %1801 = vmatpush.msra.mxu0 %v1571
      %1802 = vmatmul.f32.gmra.mxu0 %v1781
      %v1803 = vpop.f32.mrf.mxu0
      %v1804 = vadd.f32 0.0, %v1803
      %1805 = vdwg.mxu0
      %1806 = vmatpush.msra.mxu0 %v1632
      %1807 = vmatpush.msra.mxu0 %v1628
      %1808 = vmatpush.msra.mxu0 %v1624
      %1809 = vmatpush.msra.mxu0 %v1620
      %1810 = vmatpush.msra.mxu0 %v1616
      %1811 = vmatpush.msra.mxu0 %v1612
      %1812 = vmatpush.msra.mxu0 %v1608
      %1813 = vmatpush.msra.mxu0 %v1604
      %1814 = vmatpush.msra.mxu0 %v1600
      %1815 = vmatpush.msra.mxu0 %v1596
      %1816 = vmatpush.msra.mxu0 %v1592
      %1817 = vmatpush.msra.mxu0 %v1588
      %1818 = vmatpush.msra.mxu0 %v1584
      %1819 = vmatpush.msra.mxu0 %v1580
      %1820 = vmatpush.msra.mxu0 %v1576
      %1821 = vmatpush.msra.mxu0 %v1572
      %1822 = vmatmul.f32.gmra.mxu0 %v1781
      %v1823 = vpop.f32.mrf.mxu0
      %v1824 = vadd.f32 0.0, %v1823
      %1825 = vdwg.mxu0
      %1826 = vmatpush.msra.mxu0 %v1633
      %1827 = vmatpush.msra.mxu0 %v1629
      %1828 = vmatpush.msra.mxu0 %v1625
      %1829 = vmatpush.msra.mxu0 %v1621
      %1830 = vmatpush.msra.mxu0 %v1617
      %1831 = vmatpush.msra.mxu0 %v1613
      %1832 = vmatpush.msra.mxu0 %v1609
      %1833 = vmatpush.msra.mxu0 %v1605
      %1834 = vmatpush.msra.mxu0 %v1601
      %1835 = vmatpush.msra.mxu0 %v1597
      %1836 = vmatpush.msra.mxu0 %v1593
      %1837 = vmatpush.msra.mxu0 %v1589
      %1838 = vmatpush.msra.mxu0 %v1585
      %1839 = vmatpush.msra.mxu0 %v1581
      %1840 = vmatpush.msra.mxu0 %v1577
      %1841 = vmatpush.msra.mxu0 %v1573
      %1842 = vmatmul.f32.gmra.mxu0 %v1781
      %v1843 = vpop.f32.mrf.mxu0
      %v1844 = vadd.f32 0.0, %v1843
      %1845 = vdwg.mxu0
      %1846 = vmatpush.msra.mxu0 %v1634
      %1847 = vmatpush.msra.mxu0 %v1630
      %1848 = vmatpush.msra.mxu0 %v1626
      %1849 = vmatpush.msra.mxu0 %v1622
      %1850 = vmatpush.msra.mxu0 %v1618
      %1851 = vmatpush.msra.mxu0 %v1614
      %1852 = vmatpush.msra.mxu0 %v1610
      %1853 = vmatpush.msra.mxu0 %v1606
      %1854 = vmatpush.msra.mxu0 %v1602
      %1855 = vmatpush.msra.mxu0 %v1598
      %1856 = vmatpush.msra.mxu0 %v1594
      %1857 = vmatpush.msra.mxu0 %v1590
      %1858 = vmatpush.msra.mxu0 %v1586
      %1859 = vmatpush.msra.mxu0 %v1582
      %1860 = vmatpush.msra.mxu0 %v1578
      %1861 = vmatpush.msra.mxu0 %v1574
      %1862 = vmatmul.f32.gmra.mxu0 %v1781
      %v1863 = vpop.f32.mrf.mxu0
      %v1864 = vadd.f32 0.0, %v1863
      %1865 = vdwg.mxu0
      %v1866 = vadd.f32 %v1782, %v1804
      %v1867 = vadd.f32 %v1783, %v1824
      %v1868 = vadd.f32 %v1784, %v1844
      %v1869 = vadd.f32 %v1785, %v1864
      %v1870 = vxor.u32 %v1866, 2147483648
      %v1871 = vmul.f32 %v1870, 1.442695
      %v1872 = vpow.pop %v1871
      %v1873 = vadd.f32 %v1872, 1.0
      %v1874 = vrcp.pop %v1873
      %v1875 = vmul.f32 %v1873, %v1874
      %v1876 = vsub.f32 1.0, %v1875
      %v1877 = vmul.f32 %v1874, %v1876
      %v1878 = vadd.f32 %v1874, %v1877
      %vm1879 = vweird.f32 %v1873
      %vm1880 = vweird.f32 %v1874
      %vm1881 = vmor %vm1879, %vm1880
      %v1882 = vsel %vm1881, %v1874, %v1878
      %v1883 = vand.u32 2147483647, %v1873
      %vm1884 = vcmp.eq.f32.partialorder %v1883, 8.507059e+37
      %v1885 = vand.u32 %v1873, 2147483648
      %v1886 = vor.u32 1.1754944e-38, %v1885
      %v1887 = vsel %vm1884, %v1886, %v1882
      %v1888 = vmul.f32 1.0, %v1887
      %v1889 = vxor.u32 %v1867, 2147483648
      %v1890 = vmul.f32 %v1889, 1.442695
      %v1891 = vpow.pop %v1890
      %v1892 = vadd.f32 %v1891, 1.0
      %v1893 = vrcp.pop %v1892
      %v1894 = vmul.f32 %v1892, %v1893
      %v1895 = vsub.f32 1.0, %v1894
      %v1896 = vmul.f32 %v1893, %v1895
      %v1897 = vadd.f32 %v1893, %v1896
      %vm1898 = vweird.f32 %v1892
      %vm1899 = vweird.f32 %v1893
      %vm1900 = vmor %vm1898, %vm1899
      %v1901 = vsel %vm1900, %v1893, %v1897
      %v1902 = vand.u32 2147483647, %v1892
      %vm1903 = vcmp.eq.f32.partialorder %v1902, 8.507059e+37
      %v1904 = vand.u32 %v1892, 2147483648
      %v1905 = vor.u32 1.1754944e-38, %v1904
      %v1906 = vsel %vm1903, %v1905, %v1901
      %v1907 = vmul.f32 1.0, %v1906
      %v1908 = vtanh.pop %v1868
      %v1909 = vxor.u32 %v1869, 2147483648
      %v1910 = vmul.f32 %v1909, 1.442695
      %v1911 = vpow.pop %v1910
      %v1912 = vadd.f32 %v1911, 1.0
      %v1913 = vrcp.pop %v1912
      %v1914 = vmul.f32 %v1912, %v1913
      %v1915 = vsub.f32 1.0, %v1914
      %v1916 = vmul.f32 %v1913, %v1915
      %v1917 = vadd.f32 %v1913, %v1916
      %vm1918 = vweird.f32 %v1912
      %vm1919 = vweird.f32 %v1913
      %vm1920 = vmor %vm1918, %vm1919
      %v1921 = vsel %vm1920, %v1913, %v1917
      %v1922 = vand.u32 2147483647, %v1912
      %vm1923 = vcmp.eq.f32.partialorder %v1922, 8.507059e+37
      %v1924 = vand.u32 %v1912, 2147483648
      %v1925 = vor.u32 1.1754944e-38, %v1924
      %v1926 = vsel %vm1923, %v1925, %v1921
      %v1927 = vmul.f32 1.0, %v1926
      %v1928 = vmul.f32 %v1907, %v1779
      %v1929 = vmul.f32 %v1888, %v1908
      %v1930 = vadd.f32 %v1928, %v1929
      %v1931 = vtanh.pop %v1930
      %v1932 = vmul.f32 %v1927, %v1931
      %v1933 = vld [vmem:[%s913] sm:$0xff]
      %v1934 = vld [vmem:[%s913 + $0x8] sm:$0xff]
      %v1935 = vld [vmem:[%s913 + $0x10] sm:$0xff]
      %v1936 = vld [vmem:[%s913 + $0x18] sm:$0xff]
      %1937 = vmatpush.msra.mxu0 %v1631
      %1938 = vmatpush.msra.mxu0 %v1627
      %1939 = vmatpush.msra.mxu0 %v1623
      %1940 = vmatpush.msra.mxu0 %v1619
      %1941 = vmatpush.msra.mxu0 %v1615
      %1942 = vmatpush.msra.mxu0 %v1611
      %1943 = vmatpush.msra.mxu0 %v1607
      %1944 = vmatpush.msra.mxu0 %v1603
      %1945 = vmatpush.msra.mxu0 %v1599
      %1946 = vmatpush.msra.mxu0 %v1595
      %1947 = vmatpush.msra.mxu0 %v1591
      %1948 = vmatpush.msra.mxu0 %v1587
      %1949 = vmatpush.msra.mxu0 %v1583
      %1950 = vmatpush.msra.mxu0 %v1579
      %1951 = vmatpush.msra.mxu0 %v1575
      %1952 = vmatpush.msra.mxu0 %v1571
      %1953 = vmatmul.f32.gmra.mxu0 %v1932
      %v1954 = vpop.f32.mrf.mxu0
      %v1955 = vadd.f32 0.0, %v1954
      %1956 = vdwg.mxu0
      %1957 = vmatpush.msra.mxu0 %v1632
      %1958 = vmatpush.msra.mxu0 %v1628
      %1959 = vmatpush.msra.mxu0 %v1624
      %1960 = vmatpush.msra.mxu0 %v1620
      %1961 = vmatpush.msra.mxu0 %v1616
      %1962 = vmatpush.msra.mxu0 %v1612
      %1963 = vmatpush.msra.mxu0 %v1608
      %1964 = vmatpush.msra.mxu0 %v1604
      %1965 = vmatpush.msra.mxu0 %v1600
      %1966 = vmatpush.msra.mxu0 %v1596
      %1967 = vmatpush.msra.mxu0 %v1592
      %1968 = vmatpush.msra.mxu0 %v1588
      %1969 = vmatpush.msra.mxu0 %v1584
      %1970 = vmatpush.msra.mxu0 %v1580
      %1971 = vmatpush.msra.mxu0 %v1576
      %1972 = vmatpush.msra.mxu0 %v1572
      %1973 = vmatmul.f32.gmra.mxu0 %v1932
      %v1974 = vpop.f32.mrf.mxu0
      %v1975 = vadd.f32 0.0, %v1974
      %1976 = vdwg.mxu0
      %1977 = vmatpush.msra.mxu0 %v1633
      %1978 = vmatpush.msra.mxu0 %v1629
      %1979 = vmatpush.msra.mxu0 %v1625
      %1980 = vmatpush.msra.mxu0 %v1621
      %1981 = vmatpush.msra.mxu0 %v1617
      %1982 = vmatpush.msra.mxu0 %v1613
      %1983 = vmatpush.msra.mxu0 %v1609
      %1984 = vmatpush.msra.mxu0 %v1605
      %1985 = vmatpush.msra.mxu0 %v1601
      %1986 = vmatpush.msra.mxu0 %v1597
      %1987 = vmatpush.msra.mxu0 %v1593
      %1988 = vmatpush.msra.mxu0 %v1589
      %1989 = vmatpush.msra.mxu0 %v1585
      %1990 = vmatpush.msra.mxu0 %v1581
      %1991 = vmatpush.msra.mxu0 %v1577
      %1992 = vmatpush.msra.mxu0 %v1573
      %1993 = vmatmul.f32.gmra.mxu0 %v1932
      %v1994 = vpop.f32.mrf.mxu0
      %v1995 = vadd.f32 0.0, %v1994
      %1996 = vdwg.mxu0
      %1997 = vmatpush.msra.mxu0 %v1634
      %1998 = vmatpush.msra.mxu0 %v1630
      %1999 = vmatpush.msra.mxu0 %v1626
      %2000 = vmatpush.msra.mxu0 %v1622
      %2001 = vmatpush.msra.mxu0 %v1618
      %2002 = vmatpush.msra.mxu0 %v1614
      %2003 = vmatpush.msra.mxu0 %v1610
      %2004 = vmatpush.msra.mxu0 %v1606
      %2005 = vmatpush.msra.mxu0 %v1602
      %2006 = vmatpush.msra.mxu0 %v1598
      %2007 = vmatpush.msra.mxu0 %v1594
      %2008 = vmatpush.msra.mxu0 %v1590
      %2009 = vmatpush.msra.mxu0 %v1586
      %2010 = vmatpush.msra.mxu0 %v1582
      %2011 = vmatpush.msra.mxu0 %v1578
      %2012 = vmatpush.msra.mxu0 %v1574
      %2013 = vmatmul.f32.gmra.mxu0 %v1932
      %v2014 = vpop.f32.mrf.mxu0
      %v2015 = vadd.f32 0.0, %v2014
      %2016 = vdwg.mxu0
      %v2017 = vadd.f32 %v1933, %v1955
      %v2018 = vadd.f32 %v1934, %v1975
      %v2019 = vadd.f32 %v1935, %v1995
      %v2020 = vadd.f32 %v1936, %v2015
      %v2021 = vxor.u32 %v2017, 2147483648
      %v2022 = vmul.f32 %v2021, 1.442695
      %v2023 = vpow.pop %v2022
      %v2024 = vadd.f32 %v2023, 1.0
      %v2025 = vrcp.pop %v2024
      %v2026 = vmul.f32 %v2024, %v2025
      %v2027 = vsub.f32 1.0, %v2026
      %v2028 = vmul.f32 %v2025, %v2027
      %v2029 = vadd.f32 %v2025, %v2028
      %vm2030 = vweird.f32 %v2024
      %vm2031 = vweird.f32 %v2025
      %vm2032 = vmor %vm2030, %vm2031
      %v2033 = vsel %vm2032, %v2025, %v2029
      %v2034 = vand.u32 2147483647, %v2024
      %vm2035 = vcmp.eq.f32.partialorder %v2034, 8.507059e+37
      %v2036 = vand.u32 %v2024, 2147483648
      %v2037 = vor.u32 1.1754944e-38, %v2036
      %v2038 = vsel %vm2035, %v2037, %v2033
      %v2039 = vmul.f32 1.0, %v2038
      %v2040 = vxor.u32 %v2018, 2147483648
      %v2041 = vmul.f32 %v2040, 1.442695
      %v2042 = vpow.pop %v2041
      %v2043 = vadd.f32 %v2042, 1.0
      %v2044 = vrcp.pop %v2043
      %v2045 = vmul.f32 %v2043, %v2044
      %v2046 = vsub.f32 1.0, %v2045
      %v2047 = vmul.f32 %v2044, %v2046
      %v2048 = vadd.f32 %v2044, %v2047
      %vm2049 = vweird.f32 %v2043
      %vm2050 = vweird.f32 %v2044
      %vm2051 = vmor %vm2049, %vm2050
      %v2052 = vsel %vm2051, %v2044, %v2048
      %v2053 = vand.u32 2147483647, %v2043
      %vm2054 = vcmp.eq.f32.partialorder %v2053, 8.507059e+37
      %v2055 = vand.u32 %v2043, 2147483648
      %v2056 = vor.u32 1.1754944e-38, %v2055
      %v2057 = vsel %vm2054, %v2056, %v2052
      %v2058 = vmul.f32 1.0, %v2057
      %v2059 = vtanh.pop %v2019
      %v2060 = vxor.u32 %v2020, 2147483648
      %v2061 = vmul.f32 %v2060, 1.442695
      %v2062 = vpow.pop %v2061
      %v2063 = vadd.f32 %v2062, 1.0
      %v2064 = vrcp.pop %v2063
      %v2065 = vmul.f32 %v2063, %v2064
      %v2066 = vsub.f32 1.0, %v2065
      %v2067 = vmul.f32 %v2064, %v2066
      %v2068 = vadd.f32 %v2064, %v2067
      %vm2069 = vweird.f32 %v2063
      %vm2070 = vweird.f32 %v2064
      %vm2071 = vmor %vm2069, %vm2070
      %v2072 = vsel %vm2071, %v2064, %v2068
      %v2073 = vand.u32 2147483647, %v2063
      %vm2074 = vcmp.eq.f32.partialorder %v2073, 8.507059e+37
      %v2075 = vand.u32 %v2063, 2147483648
      %v2076 = vor.u32 1.1754944e-38, %v2075
      %v2077 = vsel %vm2074, %v2076, %v2072
      %v2078 = vmul.f32 1.0, %v2077
      %v2079 = vmul.f32 %v2058, %v1930
      %v2080 = vmul.f32 %v2039, %v2059
      %v2081 = vadd.f32 %v2079, %v2080
      %v2082 = vtanh.pop %v2081
      %v2083 = vmul.f32 %v2078, %v2082
      %v2084 = vld [vmem:[%s1131] sm:$0xff]
      %v2085 = vld [vmem:[%s1131 + $0x8] sm:$0xff]
      %v2086 = vld [vmem:[%s1131 + $0x10] sm:$0xff]
      %v2087 = vld [vmem:[%s1131 + $0x18] sm:$0xff]
      %2088 = vmatpush.msra.mxu0 %v1631
      %2089 = vmatpush.msra.mxu0 %v1627
      %2090 = vmatpush.msra.mxu0 %v1623
      %2091 = vmatpush.msra.mxu0 %v1619
      %2092 = vmatpush.msra.mxu0 %v1615
      %2093 = vmatpush.msra.mxu0 %v1611
      %2094 = vmatpush.msra.mxu0 %v1607
      %2095 = vmatpush.msra.mxu0 %v1603
      %2096 = vmatpush.msra.mxu0 %v1599
      %2097 = vmatpush.msra.mxu0 %v1595
      %2098 = vmatpush.msra.mxu0 %v1591
      %2099 = vmatpush.msra.mxu0 %v1587
      %2100 = vmatpush.msra.mxu0 %v1583
      %2101 = vmatpush.msra.mxu0 %v1579
      %2102 = vmatpush.msra.mxu0 %v1575
      %2103 = vmatpush.msra.mxu0 %v1571
      %2104 = vmatmul.f32.gmra.mxu0 %v2083
      %v2105 = vpop.f32.mrf.mxu0
      %v2106 = vadd.f32 0.0, %v2105
      %2107 = vdwg.mxu0
      %2108 = vmatpush.msra.mxu0 %v1632
      %2109 = vmatpush.msra.mxu0 %v1628
      %2110 = vmatpush.msra.mxu0 %v1624
      %2111 = vmatpush.msra.mxu0 %v1620
      %2112 = vmatpush.msra.mxu0 %v1616
      %2113 = vmatpush.msra.mxu0 %v1612
      %2114 = vmatpush.msra.mxu0 %v1608
      %2115 = vmatpush.msra.mxu0 %v1604
      %2116 = vmatpush.msra.mxu0 %v1600
      %2117 = vmatpush.msra.mxu0 %v1596
      %2118 = vmatpush.msra.mxu0 %v1592
      %2119 = vmatpush.msra.mxu0 %v1588
      %2120 = vmatpush.msra.mxu0 %v1584
      %2121 = vmatpush.msra.mxu0 %v1580
      %2122 = vmatpush.msra.mxu0 %v1576
      %2123 = vmatpush.msra.mxu0 %v1572
      %2124 = vmatmul.f32.gmra.mxu0 %v2083
      %v2125 = vpop.f32.mrf.mxu0
      %v2126 = vadd.f32 0.0, %v2125
      %2127 = vdwg.mxu0
      %2128 = vmatpush.msra.mxu0 %v1633
      %2129 = vmatpush.msra.mxu0 %v1629
      %2130 = vmatpush.msra.mxu0 %v1625
      %2131 = vmatpush.msra.mxu0 %v1621
      %2132 = vmatpush.msra.mxu0 %v1617
      %2133 = vmatpush.msra.mxu0 %v1613
      %2134 = vmatpush.msra.mxu0 %v1609
      %2135 = vmatpush.msra.mxu0 %v1605
      %2136 = vmatpush.msra.mxu0 %v1601
      %2137 = vmatpush.msra.mxu0 %v1597
      %2138 = vmatpush.msra.mxu0 %v1593
      %2139 = vmatpush.msra.mxu0 %v1589
      %2140 = vmatpush.msra.mxu0 %v1585
      %2141 = vmatpush.msra.mxu0 %v1581
      %2142 = vmatpush.msra.mxu0 %v1577
      %2143 = vmatpush.msra.mxu0 %v1573
      %2144 = vmatmul.f32.gmra.mxu0 %v2083
      %v2145 = vpop.f32.mrf.mxu0
      %v2146 = vadd.f32 0.0, %v2145
      %2147 = vdwg.mxu0
      %2148 = vmatpush.msra.mxu0 %v1634
      %2149 = vmatpush.msra.mxu0 %v1630
      %2150 = vmatpush.msra.mxu0 %v1626
      %2151 = vmatpush.msra.mxu0 %v1622
      %2152 = vmatpush.msra.mxu0 %v1618
      %2153 = vmatpush.msra.mxu0 %v1614
      %2154 = vmatpush.msra.mxu0 %v1610
      %2155 = vmatpush.msra.mxu0 %v1606
      %2156 = vmatpush.msra.mxu0 %v1602
      %2157 = vmatpush.msra.mxu0 %v1598
      %2158 = vmatpush.msra.mxu0 %v1594
      %2159 = vmatpush.msra.mxu0 %v1590
      %2160 = vmatpush.msra.mxu0 %v1586
      %2161 = vmatpush.msra.mxu0 %v1582
      %2162 = vmatpush.msra.mxu0 %v1578
      %2163 = vmatpush.msra.mxu0 %v1574
      %2164 = vmatmul.f32.gmra.mxu0 %v2083
      %v2165 = vpop.f32.mrf.mxu0
      %v2166 = vadd.f32 0.0, %v2165
      %2167 = vdwg.mxu0
      %v2168 = vadd.f32 %v2084, %v2106
      %v2169 = vadd.f32 %v2085, %v2126
      %v2170 = vadd.f32 %v2086, %v2146
      %v2171 = vadd.f32 %v2087, %v2166
      %v2172 = vxor.u32 %v2168, 2147483648
      %v2173 = vmul.f32 %v2172, 1.442695
      %v2174 = vpow.pop %v2173
      %v2175 = vadd.f32 %v2174, 1.0
      %v2176 = vrcp.pop %v2175
      %v2177 = vmul.f32 %v2175, %v2176
      %v2178 = vsub.f32 1.0, %v2177
      %v2179 = vmul.f32 %v2176, %v2178
      %v2180 = vadd.f32 %v2176, %v2179
      %vm2181 = vweird.f32 %v2175
      %vm2182 = vweird.f32 %v2176
      %vm2183 = vmor %vm2181, %vm2182
      %v2184 = vsel %vm2183, %v2176, %v2180
      %v2185 = vand.u32 2147483647, %v2175
      %vm2186 = vcmp.eq.f32.partialorder %v2185, 8.507059e+37
      %v2187 = vand.u32 %v2175, 2147483648
      %v2188 = vor.u32 1.1754944e-38, %v2187
      %v2189 = vsel %vm2186, %v2188, %v2184
      %v2190 = vmul.f32 1.0, %v2189
      %v2191 = vxor.u32 %v2169, 2147483648
      %v2192 = vmul.f32 %v2191, 1.442695
      %v2193 = vpow.pop %v2192
      %v2194 = vadd.f32 %v2193, 1.0
      %v2195 = vrcp.pop %v2194
      %v2196 = vmul.f32 %v2194, %v2195
      %v2197 = vsub.f32 1.0, %v2196
      %v2198 = vmul.f32 %v2195, %v2197
      %v2199 = vadd.f32 %v2195, %v2198
      %vm2200 = vweird.f32 %v2194
      %vm2201 = vweird.f32 %v2195
      %vm2202 = vmor %vm2200, %vm2201
      %v2203 = vsel %vm2202, %v2195, %v2199
      %v2204 = vand.u32 2147483647, %v2194
      %vm2205 = vcmp.eq.f32.partialorder %v2204, 8.507059e+37
      %v2206 = vand.u32 %v2194, 2147483648
      %v2207 = vor.u32 1.1754944e-38, %v2206
      %v2208 = vsel %vm2205, %v2207, %v2203
      %v2209 = vmul.f32 1.0, %v2208
      %v2210 = vtanh.pop %v2170
      %v2211 = vxor.u32 %v2171, 2147483648
      %v2212 = vmul.f32 %v2211, 1.442695
      %v2213 = vpow.pop %v2212
      %v2214 = vadd.f32 %v2213, 1.0
      %v2215 = vrcp.pop %v2214
      %v2216 = vmul.f32 %v2214, %v2215
      %v2217 = vsub.f32 1.0, %v2216
      %v2218 = vmul.f32 %v2215, %v2217
      %v2219 = vadd.f32 %v2215, %v2218
      %vm2220 = vweird.f32 %v2214
      %vm2221 = vweird.f32 %v2215
      %vm2222 = vmor %vm2220, %vm2221
      %v2223 = vsel %vm2222, %v2215, %v2219
      %v2224 = vand.u32 2147483647, %v2214
      %vm2225 = vcmp.eq.f32.partialorder %v2224, 8.507059e+37
      %v2226 = vand.u32 %v2214, 2147483648
      %v2227 = vor.u32 1.1754944e-38, %v2226
      %v2228 = vsel %vm2225, %v2227, %v2223
      %v2229 = vmul.f32 1.0, %v2228
      %v2230 = vmul.f32 %v2209, %v2081
      %v2231 = vmul.f32 %v2190, %v2210
      %v2232 = vadd.f32 %v2230, %v2231
      %v2233 = vtanh.pop %v2232
      %v2234 = vmul.f32 %v2229, %v2233
      %2235 = vst [vmem:[%s1562] sm:$0xff] %v2234
      %2236 = vst [vmem:[%s1564] sm:$0xff] %v2232
      %p2237 = scmp.eq.s32.totalorder %s23, 1
      // Predicated region
      $region53: #{simple_lstm_forward.1} parent=47 // pred_check
        %p2238 = pneg %p2237
      $region54: #{simple_lstm_forward.1} parent=47 // pred_check_branch
        %2240 = sbr.rel (%p2238) target = $region56
      $region55: #{simple_lstm_forward.1} parent=47 // pred_region
        %v2241 = vld [vmem:[%s5] sm:$0xff]
        %v2242 = vld [vmem:[%s5 + $0x8] sm:$0xff]
        %v2243 = vld [vmem:[%s5 + $0x10] sm:$0xff]
        %v2244 = vld [vmem:[%s5 + $0x18] sm:$0xff]
        %v2245 = vld [vmem:[%s5 + $0x20] sm:$0xff]
        %v2246 = vld [vmem:[%s5 + $0x28] sm:$0xff]
        %v2247 = vld [vmem:[%s5 + $0x30] sm:$0xff]
        %v2248 = vld [vmem:[%s5 + $0x38] sm:$0xff]
        %v2249 = vld [vmem:[%s5 + $0x40] sm:$0xff]
        %v2250 = vld [vmem:[%s5 + $0x48] sm:$0xff]
        %v2251 = vld [vmem:[%s5 + $0x50] sm:$0xff]
        %v2252 = vld [vmem:[%s5 + $0x58] sm:$0xff]
        %v2253 = vld [vmem:[%s5 + $0x60] sm:$0xff]
        %v2254 = vld [vmem:[%s5 + $0x68] sm:$0xff]
        %v2255 = vld [vmem:[%s5 + $0x70] sm:$0xff]
        %v2256 = vld [vmem:[%s5 + $0x78] sm:$0xff]
        %v2257 = vld [vmem:[%s6] sm:$0x1]
        %v2259 = vperm.slane %v2257, 0
        %2261 = vmatpush.msra.mxu0 %v2256
        %2262 = vmatpush.msra.mxu0 %v2255
        %2263 = vmatpush.msra.mxu0 %v2254
        %2264 = vmatpush.msra.mxu0 %v2253
        %2265 = vmatpush.msra.mxu0 %v2252
        %2266 = vmatpush.msra.mxu0 %v2251
        %2267 = vmatpush.msra.mxu0 %v2250
        %2268 = vmatpush.msra.mxu0 %v2249
        %2269 = vmatpush.msra.mxu0 %v2248
        %2270 = vmatpush.msra.mxu0 %v2247
        %2271 = vmatpush.msra.mxu0 %v2246
        %2272 = vmatpush.msra.mxu0 %v2245
        %2273 = vmatpush.msra.mxu0 %v2244
        %2274 = vmatpush.msra.mxu0 %v2243
        %2275 = vmatpush.msra.mxu0 %v2242
        %2276 = vmatpush.msra.mxu0 %v2241
        %2277 = vmatmul.f32.gmra.mxu0 %v2234
        %v2278 = vpop.f32.mrf.mxu0
        %v2279 = vadd.f32 %v2259, %v2278
        %2280 = vdwg.mxu0
        %vm2281 = vcmask 31744
        %2282 = vst.msk [vmem:[%s301] sm:$0xff] %vm2281, %v2279
      $region56: #{simple_lstm_forward.1} parent=47 // pred_fallthru
        _
      %p2283 = scmp.lt.s32.totalorder %s22, 0
      %s2284 = scalar_select %p2283, %s22, 0
      %s2285 = smul.addr %s2284, 8
      %s2286 = scalar_lea.vmem %s7, %s2285
      // Predicated region
      $region57: #{simple_lstm_forward.1} parent=47 // pred_check
        %p2287 = pneg %p202
      $region58: #{simple_lstm_forward.1} parent=47 // pred_check_branch
        %2289 = sbr.rel (%p2287) target = $region60
      $region59: #{simple_lstm_forward.1} parent=47 // pred_region
        _
      $region60: #{simple_lstm_forward.1} parent=47 // pred_fallthru
        _
      // Predicated region
      $region61: #{simple_lstm_forward.1} parent=47 // pred_check
        %p2290 = pneg %p202
      $region62: #{simple_lstm_forward.1} parent=47 // pred_check_branch
        %2292 = sbr.rel (%p2290) target = $region64
      $region63: #{simple_lstm_forward.1} parent=47 // pred_region
        %p2293 = scmp.lt.s32.totalorder %s22, 0
        %s2294 = scalar_select %p2293, %s22, 0
        %s2295 = smul.addr %s2294, 8
        %s2296 = scalar_lea.vmem %s7, %s2295
      $region64: #{simple_lstm_forward.1} parent=47 // pred_fallthru
        _
    $region48: #{simple_lstm_forward.1} parent=5 // pred_fallthru
      _
    %p2297 = scmp.le.s32.totalorder 2, %s13
    // Predicated region
    $region65: #{simple_lstm_forward.1} parent=5 // pred_check
      %p2298 = pneg %p2297
    $region66: #{simple_lstm_forward.1} parent=5 // pred_check_branch
      %2300 = sbr.rel (%p2298) target = $region68
    $region67: #{simple_lstm_forward.1} parent=5 // pred_region
      %s2301 = ssub.s32 %s13, 2
    $region68: #{simple_lstm_forward.1} parent=5 // pred_fallthru
      _
  $region6: #{simple_lstm_forward.1} parent=0 // loop_footer
    %s17 = sadd.s32 1, %s13
  $region7: #{simple_lstm_forward.1} parent=0 // loop_footer_branch
    %12 = sbr.rel target = $region3
  $region8: #{simple_lstm_forward.1} parent=0 // loop_exit
    _

</llo_original>
